<compile_context>
chip_gen: v7x
topology: tpu7x:2x2x1
jax: 0.10.0
libtpu: 0.0.40
codegen_flags: <defaults>
</compile_context>

<pallas_src>
import numpy as np
import jax
import jax.numpy as jnp
from jax.experimental import pallas as pl
from jax.experimental.pallas import tpu as pltpu

# ----------------------------- hyper-parameters -------------------------------
VOCAB = 50
EMB_DIM = 16                         # embedding dim E
CONV_HIDDEN = 8                      # conv_hidden (per kernel size)
KERNEL_SIZES = (3, 4, 5)
SENT_FEAT = CONV_HIDDEN * len(KERNEL_SIZES)   # ConvSentEncoder output dim = 24
LSTM_HIDDEN = 16
LSTM_LAYERS = 1
NUM_DIRS = 2                         # bidirectional=True
LSTM_OUT = LSTM_HIDDEN * NUM_DIRS    # 32
SEQ_LEN = 12                         # words per sentence
SENT_NUMS = [5, 3]                   # sentences per article (python ints, as in torch)
BATCH = len(SENT_NUMS)

_VMEM = pl.BlockSpec(memory_space=pltpu.MemorySpace.VMEM)


# ------------------------- single fused forward kernel -------------------------
def _make_fused_kernel(sent_nums):
    """Builds a fused conv + bi-LSTM + head kernel with sent_nums baked in
    statically (sent_nums are Python ints in the torch code as well)."""
    B = len(sent_nums)
    T = max(sent_nums)
    H = LSTM_HIDDEN
    Hc = CONV_HIDDEN
    offs = [0]
    for n in sent_nums:
        offs.append(offs[-1] + n)
    # lane offset of each kernel-size block inside the packed conv weight W_all
    bases, acc = [], 0
    for k in KERNEL_SIZES:
        bases.append(acc)
        acc += k * Hc

    def kernel(embf_ref, wall_ref, ball_ref,
               wih_ref, blstm_ref, whh_ref, h0_ref, c0_ref,
               mask_ref, invlen_ref,
               wart_ref, bart_ref, wsent_ref, bsent_ref,
               out_ref, x_buf, y_buf):
        # ---------------- stage 1: ConvSentEncoder (one matmul for ALL sentences)
        # P[r, base_k + j*Hc + h] = sum_e emb_flat[r, e] * w_k[j, e, h]
        P = jnp.dot(embf_ref[...], wall_ref[...],
                    preferred_element_type=jnp.float32)          # [N*L, 96]
        b_all = ball_ref[...]                                     # [1, 3*Hc]

        x_buf[...] = jnp.zeros((B, T, SENT_FEAT), jnp.float32)    # zero padded rows
        for b in range(B):
            for t_pos in range(sent_nums[b]):
                s = offs[b] + t_pos
                Ps = P[s * SEQ_LEN:(s + 1) * SEQ_LEN, :]          # [L, 96]
                feats = []
                for kidx, k in enumerate(KERNEL_SIZES):
                    l_out = SEQ_LEN - k + 1
                    base = bases[kidx]
                    acc_k = Ps[0:l_out, base:base + Hc]
                    for j in range(1, k):                          # shifted-tap adds
                        acc_k = acc_k + Ps[j:j + l_out,
                                           base + j * Hc:base + (j + 1) * Hc]
                    acc_k = acc_k + b_all[:, kidx * Hc:(kidx + 1) * Hc]
                    feats.append(jnp.max(jnp.maximum(acc_k, 0.0),
                                         axis=0, keepdims=True))   # [1, Hc]
                feat = jnp.concatenate(feats, axis=-1)             # [1, 24] built once
                x_buf[b:b + 1, t_pos:t_pos + 1, :] = feat[:, None, :]

        # ---------------- stage 2: bidirectional LSTM (packed-sequence semantics)
        x = x_buf[...]                                             # [B, T, 24]
        mask = mask_ref[...]                                       # [B, T] {0,1}
        wih = wih_ref[...]                                         # [24, 8H] (both dirs)
        b_lstm = blstm_ref[...]                                    # [1, 8H]
        # input projection hoisted OUT of the recurrence: lane-dense 128-wide matmuls
        gx = [jnp.dot(x[:, t, :], wih, preferred_element_type=jnp.float32) + b_lstm
              for t in range(T)]                                   # each [B, 8H]

        for d in range(NUM_DIRS):
            whh = whh_ref[d]                                       # [H, 4H]
            h = jnp.broadcast_to(h0_ref[d], (B, H))                # broadcast in kernel
            c = jnp.broadcast_to(c0_ref[d], (B, H))
            order = range(T) if d == 0 else range(T - 1, -1, -1)
            for t in order:
                gates = gx[t][:, d * 4 * H:(d + 1) * 4 * H] + jnp.dot(
                    h, whh, preferred_element_type=jnp.float32)    # [B, 4H]
                sig_if = jax.nn.sigmoid(gates[:, :2 * H])          # i & f fused (one EUP pass)
                i_g = sig_if[:, :H]
                f_g = sig_if[:, H:]
                g_g = jnp.tanh(gates[:, 2 * H:3 * H])
                o_g = jax.nn.sigmoid(gates[:, 3 * H:])
                c_new = f_g * c + i_g * g_g
                h_new = o_g * jnp.tanh(c_new)
                m = mask[:, t:t + 1]                               # [B, 1]
                h = m * h_new + (1.0 - m) * h                      # freeze state at pads
                c = m * c_new + (1.0 - m) * c
                y_buf[:, t:t + 1, d * H:(d + 1) * H] = (m * h_new)[:, None, :]  # VMEM slab

        # ---------------- stage 3: saliency / content head
        y = y_buf[...]                                             # [B, T, 2H] (pads = 0)
        inv = invlen_ref[...]                                      # [B, 1]
        mean = jnp.sum(y, axis=1) * inv                            # [B, 2H]
        enc_art = jnp.tanh(jnp.dot(mean, wart_ref[...],
                                   preferred_element_type=jnp.float32)
                           + bart_ref[...])                        # [B, 2H]
        saliency = jnp.sum(y * enc_art[:, None, :], axis=-1)       # [B, T]
        content = jnp.sum(y * wsent_ref[...][None, :, :], axis=-1) # [B, T]
        out_ref[...] = content + saliency + bsent_ref[...]         # single dense store

    return kernel


# ----------------------------- full forward (glue) -----------------------------
def extract_summ_forward(params, article_tokens, sent_nums):
    assert LSTM_LAYERS == 1  # fused kernel implements the single bi-LSTM layer used here
    B = len(sent_nums)
    T = max(sent_nums)

    # Embedding gather (no clean Pallas equivalent at this scale) + flatten (layout plumbing).
    all_tokens = jnp.concatenate(article_tokens, axis=0)                 # [N, L]
    emb_flat = params["emb"][all_tokens].reshape(-1, EMB_DIM)            # [N*L, E]

    # Pack conv weights: one [E, (3+4+5)*Hc] matrix (tap j of size k at lane block j) + bias row.
    w_all = jnp.concatenate(
        [jnp.transpose(w, (1, 0, 2)).reshape(EMB_DIM, k * CONV_HIDDEN)
         for w, k in zip(params["conv_w"], KERNEL_SIZES)], axis=-1)      # [16, 96]
    b_all = jnp.concatenate(params["conv_b"], axis=-1)                   # [1, 24]

    # Pack LSTM input projection for both directions (lane-dense 128-wide gates).
    lw = params["lstm"][0]
    wih_cat = jnp.concatenate([lw["w_ih"][0], lw["w_ih"][1]], axis=-1)   # [24, 128]
    b_lstm = jnp.concatenate([lw["b"][0], lw["b"][1]], axis=-1)          # [1, 128]
    h0 = lw["h0"][:, None, :]                                            # [2, 1, 16]
    c0 = lw["c0"][:, None, :]                                            # [2, 1, 16]

    lens = jnp.asarray(sent_nums, jnp.float32)
    mask = (jnp.arange(T, dtype=jnp.float32)[None, :] < lens[:, None]).astype(jnp.float32)
    inv_len = (1.0 / lens)[:, None]

    kernel = _make_fused_kernel(tuple(int(n) for n in sent_nums))
    logit_bt = pl.pallas_call(
        kernel,
        out_shape=jax.ShapeDtypeStruct((B, T), jnp.float32),
        in_specs=[_VMEM] * 14,
        out_specs=_VMEM,
        scratch_shapes=[
            pltpu.VMEM((B, T, SENT_FEAT), jnp.float32),   # padded sentence features
            pltpu.VMEM((B, T, LSTM_OUT), jnp.float32),    # bi-LSTM output slab
        ],
    )(emb_flat, w_all, b_all, wih_cat, b_lstm, lw["w_hh"], h0, c0,
      mask, inv_len, params["w_art"], params["b_art"], params["w_sent"], params["b_sent"])

    # torch.cat([s[:n] ...]) -- variable-length gather stays as wrapper glue.
    return jnp.concatenate([logit_bt[i, :n] for i, n in enumerate(sent_nums)], axis=0)


# ------------------------- deterministic parameter init ------------------------
def init_params(key):
    ks = jax.random.split(key, 12)
    emb = 0.1 * jax.random.normal(ks[0], (VOCAB, EMB_DIM), jnp.float32)
    emb = emb.at[0].set(0.0)  # padding_idx=0
    conv_w, conv_b = [], []
    for i, k in enumerate(KERNEL_SIZES):
        conv_w.append(0.1 * jax.random.normal(ks[1 + i], (k, EMB_DIM, CONV_HIDDEN), jnp.float32))
        conv_b.append(0.1 * jax.random.normal(ks[4 + i], (1, CONV_HIDDEN), jnp.float32))
    lstm = []
    kk = jax.random.split(ks[7], LSTM_LAYERS * 5)
    for layer in range(LSTM_LAYERS):
        din = SENT_FEAT if layer == 0 else LSTM_OUT
        base = layer * 5
        lstm.append(dict(
            w_ih=0.1 * jax.random.normal(kk[base + 0], (NUM_DIRS, din, 4 * LSTM_HIDDEN), jnp.float32),
            w_hh=0.1 * jax.random.normal(kk[base + 1], (NUM_DIRS, LSTM_HIDDEN, 4 * LSTM_HIDDEN), jnp.float32),
            b=0.1 * jax.random.normal(kk[base + 2], (NUM_DIRS, 1, 4 * LSTM_HIDDEN), jnp.float32),
            h0=0.01 * jax.random.uniform(kk[base + 3], (NUM_DIRS, LSTM_HIDDEN), jnp.float32, -1.0, 1.0),
            c0=0.01 * jax.random.uniform(kk[base + 4], (NUM_DIRS, LSTM_HIDDEN), jnp.float32, -1.0, 1.0),
        ))
    w_art = 0.1 * jax.random.normal(ks[8], (LSTM_OUT, LSTM_OUT), jnp.float32)   # stored (in, out)
    b_art = 0.1 * jax.random.normal(ks[9], (1, LSTM_OUT), jnp.float32)
    w_sent = 0.1 * jax.random.normal(ks[10], (1, LSTM_OUT), jnp.float32)        # nn.Linear(D,1).weight
    b_sent = 0.1 * jax.random.normal(ks[11], (1, 1), jnp.float32)
    return dict(emb=emb, conv_w=conv_w, conv_b=conv_b, lstm=lstm,
                w_art=w_art, b_art=b_art, w_sent=w_sent, b_sent=b_sent)


# ------------------------------ pure-JAX reference ------------------------------
def reference_forward(params, article_tokens, sent_nums):
    max_n = max(sent_nums)
    lens = jnp.asarray(sent_nums, jnp.float32)

    def conv_enc(tok):
        emb = params["emb"][tok]
        feats = []
        for kidx, k in enumerate(KERNEL_SIZES):
            w, b = params["conv_w"][kidx], params["conv_b"][kidx]
            l_out = tok.shape[1] - k + 1
            acc = jnp.zeros((tok.shape[0], l_out, CONV_HIDDEN), jnp.float32)
            for j in range(k):
                acc = acc + jnp.einsum("nle,eh->nlh", emb[:, j:j + l_out, :], w[j])
            feats.append(jnp.max(jax.nn.relu(acc + b), axis=1))
        return jnp.concatenate(feats, axis=-1)

    enc = [conv_enc(t) for t in article_tokens]
    enc_sent = jnp.stack(
        [jnp.concatenate([s, jnp.zeros((max_n - n, SENT_FEAT), jnp.float32)], axis=0)
         if n < max_n else s for s, n in zip(enc, sent_nums)], axis=0)

    def lstm_dir(x, wih, whh, b, h0, c0, reverse):
        B, T, _ = x.shape
        H = LSTM_HIDDEN
        h = jnp.broadcast_to(h0, (B, H))
        c = jnp.broadcast_to(c0, (B, H))
        outs = [None] * T
        for t in (range(T - 1, -1, -1) if reverse else range(T)):
            m = (lens > t).astype(jnp.float32)[:, None]
            gates = x[:, t, :] @ wih + h @ whh + b
            i_g = jax.nn.sigmoid(gates[:, :H])
            f_g = jax.nn.sigmoid(gates[:, H:2 * H])
            g_g = jnp.tanh(gates[:, 2 * H:3 * H])
            o_g = jax.nn.sigmoid(gates[:, 3 * H:])
            c_new = f_g * c + i_g * g_g
            h_new = o_g * jnp.tanh(c_new)
            h = m * h_new + (1 - m) * h
            c = m * c_new + (1 - m) * c
            outs[t] = m * h_new
        return jnp.stack(outs, axis=1)

    x = enc_sent
    for layer in range(LSTM_LAYERS):
        lw = params["lstm"][layer]
        fwd = lstm_dir(x, lw["w_ih"][0], lw["w_hh"][0], lw["b"][0], lw["h0"][0], lw["c0"][0], False)
        bwd = lstm_dir(x, lw["w_ih"][1], lw["w_hh"][1], lw["b"][1], lw["h0"][1], lw["c0"][1], True)
        x = jnp.concatenate([fwd, bwd], axis=-1)
    lstm_out = x

    mean = jnp.sum(lstm_out, axis=1) / lens[:, None]
    enc_art = jnp.tanh(mean @ params["w_art"] + params["b_art"])
    saliency = jnp.einsum("btd,bd->bt", lstm_out, enc_art)
    content = jnp.einsum("btd,od->bto", lstm_out, params["w_sent"])[..., 0] + params["b_sent"][0, 0]
    logit = content + saliency
    return jnp.concatenate([logit[i, :n] for i, n in enumerate(sent_nums)], axis=0)


# ------------------------------------ main --------------------------------------
if __name__ == "__main__":
    key = jax.random.PRNGKey(0)
    pkey, dkey = jax.random.split(key)
    params = init_params(pkey)
    tkeys = jax.random.split(dkey, BATCH)
    article_tokens = [
        jax.random.randint(tkeys[b], (n, SEQ_LEN), 0, VOCAB, dtype=jnp.int32)
        for b, n in enumerate(SENT_NUMS)
    ]

    logit = extract_summ_forward(params, article_tokens, SENT_NUMS)
    logit = jax.block_until_ready(logit)

    ref = jax.block_until_ready(reference_forward(params, article_tokens, SENT_NUMS))
    assert logit.shape == (sum(SENT_NUMS),), logit.shape
    np.testing.assert_allclose(np.asarray(logit), np.asarray(ref), rtol=1e-2, atol=1e-2)
    print("KERNEL_OK")
</pallas_src>

<mosaic_0001>
module attributes {stable_mosaic.version = 11 : i64} {
  func.func @kernel(%arg0: memref<96x16xf32, #tpu.memory_space<vmem>>, %arg1: memref<16x96xf32, #tpu.memory_space<vmem>>, %arg2: memref<1x24xf32, #tpu.memory_space<vmem>>, %arg3: memref<24x128xf32, #tpu.memory_space<vmem>>, %arg4: memref<1x128xf32, #tpu.memory_space<vmem>>, %arg5: memref<2x16x64xf32, #tpu.memory_space<vmem>>, %arg6: memref<2x1x16xf32, #tpu.memory_space<vmem>>, %arg7: memref<2x1x16xf32, #tpu.memory_space<vmem>>, %arg8: memref<2x5xf32, #tpu.memory_space<vmem>>, %arg9: memref<2x1xf32, #tpu.memory_space<vmem>>, %arg10: memref<32x32xf32, #tpu.memory_space<vmem>>, %arg11: memref<1x32xf32, #tpu.memory_space<vmem>>, %arg12: memref<1x32xf32, #tpu.memory_space<vmem>>, %arg13: memref<1x1xf32, #tpu.memory_space<vmem>>, %arg14: memref<2x5xf32, #tpu.memory_space<vmem>>, %arg15: memref<2x5x24xf32, #tpu.memory_space<vmem>>, %arg16: memref<2x5x32xf32, #tpu.memory_space<vmem>>) attributes {dimension_semantics = [], scalar_prefetch = 0 : i64, scratch_operands = 2 : i64, tpu.core_type = #tpu.core_type<tc>} {
    %c0 = arith.constant 0 : index
    %c0_0 = arith.constant 0 : index
    %0 = vector.load %arg0[%c0, %c0_0] : memref<96x16xf32, #tpu.memory_space<vmem>>, vector<96x16xf32>
    %c0_1 = arith.constant 0 : index
    %c0_2 = arith.constant 0 : index
    %1 = vector.load %arg1[%c0_1, %c0_2] : memref<16x96xf32, #tpu.memory_space<vmem>>, vector<16x96xf32>
    %cst = arith.constant dense<0.000000e+00> : vector<96x96xf32>
    %2 = tpu.matmul %0, %1, %cst {dimension_numbers = #tpu.dot_dimension_numbers<[1], [0], [0], [1], [0, 0, 1, 1], [], []>} : vector<96x16xf32>, vector<16x96xf32>, vector<96x96xf32> -> vector<96x96xf32>
    %c0_3 = arith.constant 0 : index
    %c0_4 = arith.constant 0 : index
    %3 = vector.load %arg2[%c0_3, %c0_4] : memref<1x24xf32, #tpu.memory_space<vmem>>, vector<1x24xf32>
    %cst_5 = arith.constant 0.000000e+00 : f32
    %4 = vector.broadcast %cst_5 : f32 to vector<2x5x24xf32>
    %c0_6 = arith.constant 0 : index
    %c0_7 = arith.constant 0 : index
    %c0_8 = arith.constant 0 : index
    %5 = vector.load %arg15[%c0_6, %c0_7, %c0_8] : memref<2x5x24xf32, #tpu.memory_space<vmem>>, vector<2x5x24xf32>
    tpu.vector_store %arg15[%c0_6, %c0_7, %c0_8], %4 {strides = array<i32>} : memref<2x5x24xf32, #tpu.memory_space<vmem>>, vector<2x5x24xf32>,
    %6 = vector.extract_strided_slice %2 {offsets = [0, 0], sizes = [12, 96], strides = [1, 1]} : vector<96x96xf32> to vector<12x96xf32>
    %7 = vector.extract_strided_slice %6 {offsets = [0, 0], sizes = [10, 8], strides = [1, 1]} : vector<12x96xf32> to vector<10x8xf32>
    %8 = vector.extract_strided_slice %6 {offsets = [1, 8], sizes = [10, 8], strides = [1, 1]} : vector<12x96xf32> to vector<10x8xf32>
    %9 = arith.addf %7, %8 : vector<10x8xf32>
    %10 = vector.extract_strided_slice %6 {offsets = [2, 16], sizes = [10, 8], strides = [1, 1]} : vector<12x96xf32> to vector<10x8xf32>
    %11 = arith.addf %9, %10 : vector<10x8xf32>
    %12 = vector.extract_strided_slice %3 {offsets = [0, 0], sizes = [1, 8], strides = [1, 1]} : vector<1x24xf32> to vector<1x8xf32>
    %13 = vector.broadcast %12 : vector<1x8xf32> to vector<10x8xf32>
    %14 = arith.addf %11, %13 : vector<10x8xf32>
    %cst_9 = arith.constant 0.000000e+00 : f32
    %15 = vector.broadcast %cst_9 : f32 to vector<10x8xf32>
    %16 = arith.maximumf %14, %15 : vector<10x8xf32>
    %cst_10 = arith.constant dense<0xFF800000> : vector<8xf32>
    %17 = vector.multi_reduction <maximumf>, %16, %cst_10 [0] : vector<10x8xf32> to vector<8xf32>
    %18 = vector.shape_cast %17 : vector<8xf32> to vector<1x8xf32>
    %19 = vector.extract_strided_slice %6 {offsets = [0, 24], sizes = [9, 8], strides = [1, 1]} : vector<12x96xf32> to vector<9x8xf32>
    %20 = vector.extract_strided_slice %6 {offsets = [1, 32], sizes = [9, 8], strides = [1, 1]} : vector<12x96xf32> to vector<9x8xf32>
    %21 = arith.addf %19, %20 : vector<9x8xf32>
    %22 = vector.extract_strided_slice %6 {offsets = [2, 40], sizes = [9, 8], strides = [1, 1]} : vector<12x96xf32> to vector<9x8xf32>
    %23 = arith.addf %21, %22 : vector<9x8xf32>
    %24 = vector.extract_strided_slice %6 {offsets = [3, 48], sizes = [9, 8], strides = [1, 1]} : vector<12x96xf32> to vector<9x8xf32>
    %25 = arith.addf %23, %24 : vector<9x8xf32>
    %26 = vector.extract_strided_slice %3 {offsets = [0, 8], sizes = [1, 8], strides = [1, 1]} : vector<1x24xf32> to vector<1x8xf32>
    %27 = vector.broadcast %26 : vector<1x8xf32> to vector<9x8xf32>
    %28 = arith.addf %25, %27 : vector<9x8xf32>
    %cst_11 = arith.constant 0.000000e+00 : f32
    %29 = vector.broadcast %cst_11 : f32 to vector<9x8xf32>
    %30 = arith.maximumf %28, %29 : vector<9x8xf32>
    %cst_12 = arith.constant dense<0xFF800000> : vector<8xf32>
    %31 = vector.multi_reduction <maximumf>, %30, %cst_12 [0] : vector<9x8xf32> to vector<8xf32>
    %32 = vector.shape_cast %31 : vector<8xf32> to vector<1x8xf32>
    %33 = vector.extract_strided_slice %6 {offsets = [0, 56], sizes = [8, 8], strides = [1, 1]} : vector<12x96xf32> to vector<8x8xf32>
    %34 = vector.extract_strided_slice %6 {offsets = [1, 64], sizes = [8, 8], strides = [1, 1]} : vector<12x96xf32> to vector<8x8xf32>
    %35 = arith.addf %33, %34 : vector<8x8xf32>
    %36 = vector.extract_strided_slice %6 {offsets = [2, 72], sizes = [8, 8], strides = [1, 1]} : vector<12x96xf32> to vector<8x8xf32>
    %37 = arith.addf %35, %36 : vector<8x8xf32>
    %38 = vector.extract_strided_slice %6 {offsets = [3, 80], sizes = [8, 8], strides = [1, 1]} : vector<12x96xf32> to vector<8x8xf32>
    %39 = arith.addf %37, %38 : vector<8x8xf32>
    %40 = vector.extract_strided_slice %6 {offsets = [4, 88], sizes = [8, 8], strides = [1, 1]} : vector<12x96xf32> to vector<8x8xf32>
    %41 = arith.addf %39, %40 : vector<8x8xf32>
    %42 = vector.extract_strided_slice %3 {offsets = [0, 16], sizes = [1, 8], strides = [1, 1]} : vector<1x24xf32> to vector<1x8xf32>
    %43 = vector.broadcast %42 : vector<1x8xf32> to vector<8x8xf32>
    %44 = arith.addf %41, %43 : vector<8x8xf32>
    %cst_13 = arith.constant 0.000000e+00 : f32
    %45 = vector.broadcast %cst_13 : f32 to vector<8x8xf32>
    %46 = arith.maximumf %44, %45 : vector<8x8xf32>
    %cst_14 = arith.constant dense<0xFF800000> : vector<8xf32>
    %47 = vector.multi_reduction <maximumf>, %46, %cst_14 [0] : vector<8x8xf32> to vector<8xf32>
    %48 = vector.shape_cast %47 : vector<8xf32> to vector<1x8xf32>
    %49 = tpu.concatenate %18, %32, %48 in 1 : vector<1x8xf32>, vector<1x8xf32>, vector<1x8xf32> -> vector<1x24xf32>
    %50 = vector.shape_cast %49 : vector<1x24xf32> to vector<1x1x24xf32>
    %c0_15 = arith.constant 0 : index
    %c0_16 = arith.constant 0 : index
    %c0_17 = arith.constant 0 : index
    %51 = vector.load %arg15[%c0_15, %c0_16, %c0_17] : memref<2x5x24xf32, #tpu.memory_space<vmem>>, vector<1x1x24xf32>
    tpu.vector_store %arg15[%c0_15, %c0_16, %c0_17], %50 {strides = array<i32>} : memref<2x5x24xf32, #tpu.memory_space<vmem>>, vector<1x1x24xf32>,
    %52 = vector.extract_strided_slice %2 {offsets = [12, 0], sizes = [12, 96], strides = [1, 1]} : vector<96x96xf32> to vector<12x96xf32>
    %53 = vector.extract_strided_slice %52 {offsets = [0, 0], sizes = [10, 8], strides = [1, 1]} : vector<12x96xf32> to vector<10x8xf32>
    %54 = vector.extract_strided_slice %52 {offsets = [1, 8], sizes = [10, 8], strides = [1, 1]} : vector<12x96xf32> to vector<10x8xf32>
    %55 = arith.addf %53, %54 : vector<10x8xf32>
    %56 = vector.extract_strided_slice %52 {offsets = [2, 16], sizes = [10, 8], strides = [1, 1]} : vector<12x96xf32> to vector<10x8xf32>
    %57 = arith.addf %55, %56 : vector<10x8xf32>
    %58 = vector.extract_strided_slice %3 {offsets = [0, 0], sizes = [1, 8], strides = [1, 1]} : vector<1x24xf32> to vector<1x8xf32>
    %59 = vector.broadcast %58 : vector<1x8xf32> to vector<10x8xf32>
    %60 = arith.addf %57, %59 : vector<10x8xf32>
    %cst_18 = arith.constant 0.000000e+00 : f32
    %61 = vector.broadcast %cst_18 : f32 to vector<10x8xf32>
    %62 = arith.maximumf %60, %61 : vector<10x8xf32>
    %cst_19 = arith.constant dense<0xFF800000> : vector<8xf32>
    %63 = vector.multi_reduction <maximumf>, %62, %cst_19 [0] : vector<10x8xf32> to vector<8xf32>
    %64 = vector.shape_cast %63 : vector<8xf32> to vector<1x8xf32>
    %65 = vector.extract_strided_slice %52 {offsets = [0, 24], sizes = [9, 8], strides = [1, 1]} : vector<12x96xf32> to vector<9x8xf32>
    %66 = vector.extract_strided_slice %52 {offsets = [1, 32], sizes = [9, 8], strides = [1, 1]} : vector<12x96xf32> to vector<9x8xf32>
    %67 = arith.addf %65, %66 : vector<9x8xf32>
    %68 = vector.extract_strided_slice %52 {offsets = [2, 40], sizes = [9, 8], strides = [1, 1]} : vector<12x96xf32> to vector<9x8xf32>
    %69 = arith.addf %67, %68 : vector<9x8xf32>
    %70 = vector.extract_strided_slice %52 {offsets = [3, 48], sizes = [9, 8], strides = [1, 1]} : vector<12x96xf32> to vector<9x8xf32>
    %71 = arith.addf %69, %70 : vector<9x8xf32>
    %72 = vector.extract_strided_slice %3 {offsets = [0, 8], sizes = [1, 8], strides = [1, 1]} : vector<1x24xf32> to vector<1x8xf32>
    %73 = vector.broadcast %72 : vector<1x8xf32> to vector<9x8xf32>
    %74 = arith.addf %71, %73 : vector<9x8xf32>
    %cst_20 = arith.constant 0.000000e+00 : f32
    %75 = vector.broadcast %cst_20 : f32 to vector<9x8xf32>
    %76 = arith.maximumf %74, %75 : vector<9x8xf32>
    %cst_21 = arith.constant dense<0xFF800000> : vector<8xf32>
    %77 = vector.multi_reduction <maximumf>, %76, %cst_21 [0] : vector<9x8xf32> to vector<8xf32>
    %78 = vector.shape_cast %77 : vector<8xf32> to vector<1x8xf32>
    %79 = vector.extract_strided_slice %52 {offsets = [0, 56], sizes = [8, 8], strides = [1, 1]} : vector<12x96xf32> to vector<8x8xf32>
    %80 = vector.extract_strided_slice %52 {offsets = [1, 64], sizes = [8, 8], strides = [1, 1]} : vector<12x96xf32> to vector<8x8xf32>
    %81 = arith.addf %79, %80 : vector<8x8xf32>
    %82 = vector.extract_strided_slice %52 {offsets = [2, 72], sizes = [8, 8], strides = [1, 1]} : vector<12x96xf32> to vector<8x8xf32>
    %83 = arith.addf %81, %82 : vector<8x8xf32>
    %84 = vector.extract_strided_slice %52 {offsets = [3, 80], sizes = [8, 8], strides = [1, 1]} : vector<12x96xf32> to vector<8x8xf32>
    %85 = arith.addf %83, %84 : vector<8x8xf32>
    %86 = vector.extract_strided_slice %52 {offsets = [4, 88], sizes = [8, 8], strides = [1, 1]} : vector<12x96xf32> to vector<8x8xf32>
    %87 = arith.addf %85, %86 : vector<8x8xf32>
    %88 = vector.extract_strided_slice %3 {offsets = [0, 16], sizes = [1, 8], strides = [1, 1]} : vector<1x24xf32> to vector<1x8xf32>
    %89 = vector.broadcast %88 : vector<1x8xf32> to vector<8x8xf32>
    %90 = arith.addf %87, %89 : vector<8x8xf32>
    %cst_22 = arith.constant 0.000000e+00 : f32
    %91 = vector.broadcast %cst_22 : f32 to vector<8x8xf32>
    %92 = arith.maximumf %90, %91 : vector<8x8xf32>
    %cst_23 = arith.constant dense<0xFF800000> : vector<8xf32>
    %93 = vector.multi_reduction <maximumf>, %92, %cst_23 [0] : vector<8x8xf32> to vector<8xf32>
    %94 = vector.shape_cast %93 : vector<8xf32> to vector<1x8xf32>
    %95 = tpu.concatenate %64, %78, %94 in 1 : vector<1x8xf32>, vector<1x8xf32>, vector<1x8xf32> -> vector<1x24xf32>
    %96 = vector.shape_cast %95 : vector<1x24xf32> to vector<1x1x24xf32>
    %c0_24 = arith.constant 0 : index
    %c1 = arith.constant 1 : index
    %c0_25 = arith.constant 0 : index
    %97 = vector.load %arg15[%c0_24, %c1, %c0_25] : memref<2x5x24xf32, #tpu.memory_space<vmem>>, vector<1x1x24xf32>
    tpu.vector_store %arg15[%c0_24, %c1, %c0_25], %96 {strides = array<i32>} : memref<2x5x24xf32, #tpu.memory_space<vmem>>, vector<1x1x24xf32>,
    %98 = vector.extract_strided_slice %2 {offsets = [24, 0], sizes = [12, 96], strides = [1, 1]} : vector<96x96xf32> to vector<12x96xf32>
    %99 = vector.extract_strided_slice %98 {offsets = [0, 0], sizes = [10, 8], strides = [1, 1]} : vector<12x96xf32> to vector<10x8xf32>
    %100 = vector.extract_strided_slice %98 {offsets = [1, 8], sizes = [10, 8], strides = [1, 1]} : vector<12x96xf32> to vector<10x8xf32>
    %101 = arith.addf %99, %100 : vector<10x8xf32>
    %102 = vector.extract_strided_slice %98 {offsets = [2, 16], sizes = [10, 8], strides = [1, 1]} : vector<12x96xf32> to vector<10x8xf32>
    %103 = arith.addf %101, %102 : vector<10x8xf32>
    %104 = vector.extract_strided_slice %3 {offsets = [0, 0], sizes = [1, 8], strides = [1, 1]} : vector<1x24xf32> to vector<1x8xf32>
    %105 = vector.broadcast %104 : vector<1x8xf32> to vector<10x8xf32>
    %106 = arith.addf %103, %105 : vector<10x8xf32>
    %cst_26 = arith.constant 0.000000e+00 : f32
    %107 = vector.broadcast %cst_26 : f32 to vector<10x8xf32>
    %108 = arith.maximumf %106, %107 : vector<10x8xf32>
    %cst_27 = arith.constant dense<0xFF800000> : vector<8xf32>
    %109 = vector.multi_reduction <maximumf>, %108, %cst_27 [0] : vector<10x8xf32> to vector<8xf32>
    %110 = vector.shape_cast %109 : vector<8xf32> to vector<1x8xf32>
    %111 = vector.extract_strided_slice %98 {offsets = [0, 24], sizes = [9, 8], strides = [1, 1]} : vector<12x96xf32> to vector<9x8xf32>
    %112 = vector.extract_strided_slice %98 {offsets = [1, 32], sizes = [9, 8], strides = [1, 1]} : vector<12x96xf32> to vector<9x8xf32>
    %113 = arith.addf %111, %112 : vector<9x8xf32>
    %114 = vector.extract_strided_slice %98 {offsets = [2, 40], sizes = [9, 8], strides = [1, 1]} : vector<12x96xf32> to vector<9x8xf32>
    %115 = arith.addf %113, %114 : vector<9x8xf32>
    %116 = vector.extract_strided_slice %98 {offsets = [3, 48], sizes = [9, 8], strides = [1, 1]} : vector<12x96xf32> to vector<9x8xf32>
    %117 = arith.addf %115, %116 : vector<9x8xf32>
    %118 = vector.extract_strided_slice %3 {offsets = [0, 8], sizes = [1, 8], strides = [1, 1]} : vector<1x24xf32> to vector<1x8xf32>
    %119 = vector.broadcast %118 : vector<1x8xf32> to vector<9x8xf32>
    %120 = arith.addf %117, %119 : vector<9x8xf32>
    %cst_28 = arith.constant 0.000000e+00 : f32
    %121 = vector.broadcast %cst_28 : f32 to vector<9x8xf32>
    %122 = arith.maximumf %120, %121 : vector<9x8xf32>
    %cst_29 = arith.constant dense<0xFF800000> : vector<8xf32>
    %123 = vector.multi_reduction <maximumf>, %122, %cst_29 [0] : vector<9x8xf32> to vector<8xf32>
    %124 = vector.shape_cast %123 : vector<8xf32> to vector<1x8xf32>
    %125 = vector.extract_strided_slice %98 {offsets = [0, 56], sizes = [8, 8], strides = [1, 1]} : vector<12x96xf32> to vector<8x8xf32>
    %126 = vector.extract_strided_slice %98 {offsets = [1, 64], sizes = [8, 8], strides = [1, 1]} : vector<12x96xf32> to vector<8x8xf32>
    %127 = arith.addf %125, %126 : vector<8x8xf32>
    %128 = vector.extract_strided_slice %98 {offsets = [2, 72], sizes = [8, 8], strides = [1, 1]} : vector<12x96xf32> to vector<8x8xf32>
    %129 = arith.addf %127, %128 : vector<8x8xf32>
    %130 = vector.extract_strided_slice %98 {offsets = [3, 80], sizes = [8, 8], strides = [1, 1]} : vector<12x96xf32> to vector<8x8xf32>
    %131 = arith.addf %129, %130 : vector<8x8xf32>
    %132 = vector.extract_strided_slice %98 {offsets = [4, 88], sizes = [8, 8], strides = [1, 1]} : vector<12x96xf32> to vector<8x8xf32>
    %133 = arith.addf %131, %132 : vector<8x8xf32>
    %134 = vector.extract_strided_slice %3 {offsets = [0, 16], sizes = [1, 8], strides = [1, 1]} : vector<1x24xf32> to vector<1x8xf32>
    %135 = vector.broadcast %134 : vector<1x8xf32> to vector<8x8xf32>
    %136 = arith.addf %133, %135 : vector<8x8xf32>
    %cst_30 = arith.constant 0.000000e+00 : f32
    %137 = vector.broadcast %cst_30 : f32 to vector<8x8xf32>
    %138 = arith.maximumf %136, %137 : vector<8x8xf32>
    %cst_31 = arith.constant dense<0xFF800000> : vector<8xf32>
    %139 = vector.multi_reduction <maximumf>, %138, %cst_31 [0] : vector<8x8xf32> to vector<8xf32>
    %140 = vector.shape_cast %139 : vector<8xf32> to vector<1x8xf32>
    %141 = tpu.concatenate %110, %124, %140 in 1 : vector<1x8xf32>, vector<1x8xf32>, vector<1x8xf32> -> vector<1x24xf32>
    %142 = vector.shape_cast %141 : vector<1x24xf32> to vector<1x1x24xf32>
    %c0_32 = arith.constant 0 : index
    %c2 = arith.constant 2 : index
    %c0_33 = arith.constant 0 : index
    %143 = vector.load %arg15[%c0_32, %c2, %c0_33] : memref<2x5x24xf32, #tpu.memory_space<vmem>>, vector<1x1x24xf32>
    tpu.vector_store %arg15[%c0_32, %c2, %c0_33], %142 {strides = array<i32>} : memref<2x5x24xf32, #tpu.memory_space<vmem>>, vector<1x1x24xf32>,
    %144 = vector.extract_strided_slice %2 {offsets = [36, 0], sizes = [12, 96], strides = [1, 1]} : vector<96x96xf32> to vector<12x96xf32>
    %145 = vector.extract_strided_slice %144 {offsets = [0, 0], sizes = [10, 8], strides = [1, 1]} : vector<12x96xf32> to vector<10x8xf32>
    %146 = vector.extract_strided_slice %144 {offsets = [1, 8], sizes = [10, 8], strides = [1, 1]} : vector<12x96xf32> to vector<10x8xf32>
    %147 = arith.addf %145, %146 : vector<10x8xf32>
    %148 = vector.extract_strided_slice %144 {offsets = [2, 16], sizes = [10, 8], strides = [1, 1]} : vector<12x96xf32> to vector<10x8xf32>
    %149 = arith.addf %147, %148 : vector<10x8xf32>
    %150 = vector.extract_strided_slice %3 {offsets = [0, 0], sizes = [1, 8], strides = [1, 1]} : vector<1x24xf32> to vector<1x8xf32>
    %151 = vector.broadcast %150 : vector<1x8xf32> to vector<10x8xf32>
    %152 = arith.addf %149, %151 : vector<10x8xf32>
    %cst_34 = arith.constant 0.000000e+00 : f32
    %153 = vector.broadcast %cst_34 : f32 to vector<10x8xf32>
    %154 = arith.maximumf %152, %153 : vector<10x8xf32>
    %cst_35 = arith.constant dense<0xFF800000> : vector<8xf32>
    %155 = vector.multi_reduction <maximumf>, %154, %cst_35 [0] : vector<10x8xf32> to vector<8xf32>
    %156 = vector.shape_cast %155 : vector<8xf32> to vector<1x8xf32>
    %157 = vector.extract_strided_slice %144 {offsets = [0, 24], sizes = [9, 8], strides = [1, 1]} : vector<12x96xf32> to vector<9x8xf32>
    %158 = vector.extract_strided_slice %144 {offsets = [1, 32], sizes = [9, 8], strides = [1, 1]} : vector<12x96xf32> to vector<9x8xf32>
    %159 = arith.addf %157, %158 : vector<9x8xf32>
    %160 = vector.extract_strided_slice %144 {offsets = [2, 40], sizes = [9, 8], strides = [1, 1]} : vector<12x96xf32> to vector<9x8xf32>
    %161 = arith.addf %159, %160 : vector<9x8xf32>
    %162 = vector.extract_strided_slice %144 {offsets = [3, 48], sizes = [9, 8], strides = [1, 1]} : vector<12x96xf32> to vector<9x8xf32>
    %163 = arith.addf %161, %162 : vector<9x8xf32>
    %164 = vector.extract_strided_slice %3 {offsets = [0, 8], sizes = [1, 8], strides = [1, 1]} : vector<1x24xf32> to vector<1x8xf32>
    %165 = vector.broadcast %164 : vector<1x8xf32> to vector<9x8xf32>
    %166 = arith.addf %163, %165 : vector<9x8xf32>
    %cst_36 = arith.constant 0.000000e+00 : f32
    %167 = vector.broadcast %cst_36 : f32 to vector<9x8xf32>
    %168 = arith.maximumf %166, %167 : vector<9x8xf32>
    %cst_37 = arith.constant dense<0xFF800000> : vector<8xf32>
    %169 = vector.multi_reduction <maximumf>, %168, %cst_37 [0] : vector<9x8xf32> to vector<8xf32>
    %170 = vector.shape_cast %169 : vector<8xf32> to vector<1x8xf32>
    %171 = vector.extract_strided_slice %144 {offsets = [0, 56], sizes = [8, 8], strides = [1, 1]} : vector<12x96xf32> to vector<8x8xf32>
    %172 = vector.extract_strided_slice %144 {offsets = [1, 64], sizes = [8, 8], strides = [1, 1]} : vector<12x96xf32> to vector<8x8xf32>
    %173 = arith.addf %171, %172 : vector<8x8xf32>
    %174 = vector.extract_strided_slice %144 {offsets = [2, 72], sizes = [8, 8], strides = [1, 1]} : vector<12x96xf32> to vector<8x8xf32>
    %175 = arith.addf %173, %174 : vector<8x8xf32>
    %176 = vector.extract_strided_slice %144 {offsets = [3, 80], sizes = [8, 8], strides = [1, 1]} : vector<12x96xf32> to vector<8x8xf32>
    %177 = arith.addf %175, %176 : vector<8x8xf32>
    %178 = vector.extract_strided_slice %144 {offsets = [4, 88], sizes = [8, 8], strides = [1, 1]} : vector<12x96xf32> to vector<8x8xf32>
    %179 = arith.addf %177, %178 : vector<8x8xf32>
    %180 = vector.extract_strided_slice %3 {offsets = [0, 16], sizes = [1, 8], strides = [1, 1]} : vector<1x24xf32> to vector<1x8xf32>
    %181 = vector.broadcast %180 : vector<1x8xf32> to vector<8x8xf32>
    %182 = arith.addf %179, %181 : vector<8x8xf32>
    %cst_38 = arith.constant 0.000000e+00 : f32
    %183 = vector.broadcast %cst_38 : f32 to vector<8x8xf32>
    %184 = arith.maximumf %182, %183 : vector<8x8xf32>
    %cst_39 = arith.constant dense<0xFF800000> : vector<8xf32>
    %185 = vector.multi_reduction <maximumf>, %184, %cst_39 [0] : vector<8x8xf32> to vector<8xf32>
    %186 = vector.shape_cast %185 : vector<8xf32> to vector<1x8xf32>
    %187 = tpu.concatenate %156, %170, %186 in 1 : vector<1x8xf32>, vector<1x8xf32>, vector<1x8xf32> -> vector<1x24xf32>
    %188 = vector.shape_cast %187 : vector<1x24xf32> to vector<1x1x24xf32>
    %c0_40 = arith.constant 0 : index
    %c3 = arith.constant 3 : index
    %c0_41 = arith.constant 0 : index
    %189 = vector.load %arg15[%c0_40, %c3, %c0_41] : memref<2x5x24xf32, #tpu.memory_space<vmem>>, vector<1x1x24xf32>
    tpu.vector_store %arg15[%c0_40, %c3, %c0_41], %188 {strides = array<i32>} : memref<2x5x24xf32, #tpu.memory_space<vmem>>, vector<1x1x24xf32>,
    %190 = vector.extract_strided_slice %2 {offsets = [48, 0], sizes = [12, 96], strides = [1, 1]} : vector<96x96xf32> to vector<12x96xf32>
    %191 = vector.extract_strided_slice %190 {offsets = [0, 0], sizes = [10, 8], strides = [1, 1]} : vector<12x96xf32> to vector<10x8xf32>
    %192 = vector.extract_strided_slice %190 {offsets = [1, 8], sizes = [10, 8], strides = [1, 1]} : vector<12x96xf32> to vector<10x8xf32>
    %193 = arith.addf %191, %192 : vector<10x8xf32>
    %194 = vector.extract_strided_slice %190 {offsets = [2, 16], sizes = [10, 8], strides = [1, 1]} : vector<12x96xf32> to vector<10x8xf32>
    %195 = arith.addf %193, %194 : vector<10x8xf32>
    %196 = vector.extract_strided_slice %3 {offsets = [0, 0], sizes = [1, 8], strides = [1, 1]} : vector<1x24xf32> to vector<1x8xf32>
    %197 = vector.broadcast %196 : vector<1x8xf32> to vector<10x8xf32>
    %198 = arith.addf %195, %197 : vector<10x8xf32>
    %cst_42 = arith.constant 0.000000e+00 : f32
    %199 = vector.broadcast %cst_42 : f32 to vector<10x8xf32>
    %200 = arith.maximumf %198, %199 : vector<10x8xf32>
    %cst_43 = arith.constant dense<0xFF800000> : vector<8xf32>
    %201 = vector.multi_reduction <maximumf>, %200, %cst_43 [0] : vector<10x8xf32> to vector<8xf32>
    %202 = vector.shape_cast %201 : vector<8xf32> to vector<1x8xf32>
    %203 = vector.extract_strided_slice %190 {offsets = [0, 24], sizes = [9, 8], strides = [1, 1]} : vector<12x96xf32> to vector<9x8xf32>
    %204 = vector.extract_strided_slice %190 {offsets = [1, 32], sizes = [9, 8], strides = [1, 1]} : vector<12x96xf32> to vector<9x8xf32>
    %205 = arith.addf %203, %204 : vector<9x8xf32>
    %206 = vector.extract_strided_slice %190 {offsets = [2, 40], sizes = [9, 8], strides = [1, 1]} : vector<12x96xf32> to vector<9x8xf32>
    %207 = arith.addf %205, %206 : vector<9x8xf32>
    %208 = vector.extract_strided_slice %190 {offsets = [3, 48], sizes = [9, 8], strides = [1, 1]} : vector<12x96xf32> to vector<9x8xf32>
    %209 = arith.addf %207, %208 : vector<9x8xf32>
    %210 = vector.extract_strided_slice %3 {offsets = [0, 8], sizes = [1, 8], strides = [1, 1]} : vector<1x24xf32> to vector<1x8xf32>
    %211 = vector.broadcast %210 : vector<1x8xf32> to vector<9x8xf32>
    %212 = arith.addf %209, %211 : vector<9x8xf32>
    %cst_44 = arith.constant 0.000000e+00 : f32
    %213 = vector.broadcast %cst_44 : f32 to vector<9x8xf32>
    %214 = arith.maximumf %212, %213 : vector<9x8xf32>
    %cst_45 = arith.constant dense<0xFF800000> : vector<8xf32>
    %215 = vector.multi_reduction <maximumf>, %214, %cst_45 [0] : vector<9x8xf32> to vector<8xf32>
    %216 = vector.shape_cast %215 : vector<8xf32> to vector<1x8xf32>
    %217 = vector.extract_strided_slice %190 {offsets = [0, 56], sizes = [8, 8], strides = [1, 1]} : vector<12x96xf32> to vector<8x8xf32>
    %218 = vector.extract_strided_slice %190 {offsets = [1, 64], sizes = [8, 8], strides = [1, 1]} : vector<12x96xf32> to vector<8x8xf32>
    %219 = arith.addf %217, %218 : vector<8x8xf32>
    %220 = vector.extract_strided_slice %190 {offsets = [2, 72], sizes = [8, 8], strides = [1, 1]} : vector<12x96xf32> to vector<8x8xf32>
    %221 = arith.addf %219, %220 : vector<8x8xf32>
    %222 = vector.extract_strided_slice %190 {offsets = [3, 80], sizes = [8, 8], strides = [1, 1]} : vector<12x96xf32> to vector<8x8xf32>
    %223 = arith.addf %221, %222 : vector<8x8xf32>
    %224 = vector.extract_strided_slice %190 {offsets = [4, 88], sizes = [8, 8], strides = [1, 1]} : vector<12x96xf32> to vector<8x8xf32>
    %225 = arith.addf %223, %224 : vector<8x8xf32>
    %226 = vector.extract_strided_slice %3 {offsets = [0, 16], sizes = [1, 8], strides = [1, 1]} : vector<1x24xf32> to vector<1x8xf32>
    %227 = vector.broadcast %226 : vector<1x8xf32> to vector<8x8xf32>
    %228 = arith.addf %225, %227 : vector<8x8xf32>
    %cst_46 = arith.constant 0.000000e+00 : f32
    %229 = vector.broadcast %cst_46 : f32 to vector<8x8xf32>
    %230 = arith.maximumf %228, %229 : vector<8x8xf32>
    %cst_47 = arith.constant dense<0xFF800000> : vector<8xf32>
    %231 = vector.multi_reduction <maximumf>, %230, %cst_47 [0] : vector<8x8xf32> to vector<8xf32>
    %232 = vector.shape_cast %231 : vector<8xf32> to vector<1x8xf32>
    %233 = tpu.concatenate %202, %216, %232 in 1 : vector<1x8xf32>, vector<1x8xf32>, vector<1x8xf32> -> vector<1x24xf32>
    %234 = vector.shape_cast %233 : vector<1x24xf32> to vector<1x1x24xf32>
    %c0_48 = arith.constant 0 : index
    %c4 = arith.constant 4 : index
    %c0_49 = arith.constant 0 : index
    %235 = vector.load %arg15[%c0_48, %c4, %c0_49] : memref<2x5x24xf32, #tpu.memory_space<vmem>>, vector<1x1x24xf32>
    tpu.vector_store %arg15[%c0_48, %c4, %c0_49], %234 {strides = array<i32>} : memref<2x5x24xf32, #tpu.memory_space<vmem>>, vector<1x1x24xf32>,
    %236 = vector.extract_strided_slice %2 {offsets = [60, 0], sizes = [12, 96], strides = [1, 1]} : vector<96x96xf32> to vector<12x96xf32>
    %237 = vector.extract_strided_slice %236 {offsets = [0, 0], sizes = [10, 8], strides = [1, 1]} : vector<12x96xf32> to vector<10x8xf32>
    %238 = vector.extract_strided_slice %236 {offsets = [1, 8], sizes = [10, 8], strides = [1, 1]} : vector<12x96xf32> to vector<10x8xf32>
    %239 = arith.addf %237, %238 : vector<10x8xf32>
    %240 = vector.extract_strided_slice %236 {offsets = [2, 16], sizes = [10, 8], strides = [1, 1]} : vector<12x96xf32> to vector<10x8xf32>
    %241 = arith.addf %239, %240 : vector<10x8xf32>
    %242 = vector.extract_strided_slice %3 {offsets = [0, 0], sizes = [1, 8], strides = [1, 1]} : vector<1x24xf32> to vector<1x8xf32>
    %243 = vector.broadcast %242 : vector<1x8xf32> to vector<10x8xf32>
    %244 = arith.addf %241, %243 : vector<10x8xf32>
    %cst_50 = arith.constant 0.000000e+00 : f32
    %245 = vector.broadcast %cst_50 : f32 to vector<10x8xf32>
    %246 = arith.maximumf %244, %245 : vector<10x8xf32>
    %cst_51 = arith.constant dense<0xFF800000> : vector<8xf32>
    %247 = vector.multi_reduction <maximumf>, %246, %cst_51 [0] : vector<10x8xf32> to vector<8xf32>
    %248 = vector.shape_cast %247 : vector<8xf32> to vector<1x8xf32>
    %249 = vector.extract_strided_slice %236 {offsets = [0, 24], sizes = [9, 8], strides = [1, 1]} : vector<12x96xf32> to vector<9x8xf32>
    %250 = vector.extract_strided_slice %236 {offsets = [1, 32], sizes = [9, 8], strides = [1, 1]} : vector<12x96xf32> to vector<9x8xf32>
    %251 = arith.addf %249, %250 : vector<9x8xf32>
    %252 = vector.extract_strided_slice %236 {offsets = [2, 40], sizes = [9, 8], strides = [1, 1]} : vector<12x96xf32> to vector<9x8xf32>
    %253 = arith.addf %251, %252 : vector<9x8xf32>
    %254 = vector.extract_strided_slice %236 {offsets = [3, 48], sizes = [9, 8], strides = [1, 1]} : vector<12x96xf32> to vector<9x8xf32>
    %255 = arith.addf %253, %254 : vector<9x8xf32>
    %256 = vector.extract_strided_slice %3 {offsets = [0, 8], sizes = [1, 8], strides = [1, 1]} : vector<1x24xf32> to vector<1x8xf32>
    %257 = vector.broadcast %256 : vector<1x8xf32> to vector<9x8xf32>
    %258 = arith.addf %255, %257 : vector<9x8xf32>
    %cst_52 = arith.constant 0.000000e+00 : f32
    %259 = vector.broadcast %cst_52 : f32 to vector<9x8xf32>
    %260 = arith.maximumf %258, %259 : vector<9x8xf32>
    %cst_53 = arith.constant dense<0xFF800000> : vector<8xf32>
    %261 = vector.multi_reduction <maximumf>, %260, %cst_53 [0] : vector<9x8xf32> to vector<8xf32>
    %262 = vector.shape_cast %261 : vector<8xf32> to vector<1x8xf32>
    %263 = vector.extract_strided_slice %236 {offsets = [0, 56], sizes = [8, 8], strides = [1, 1]} : vector<12x96xf32> to vector<8x8xf32>
    %264 = vector.extract_strided_slice %236 {offsets = [1, 64], sizes = [8, 8], strides = [1, 1]} : vector<12x96xf32> to vector<8x8xf32>
    %265 = arith.addf %263, %264 : vector<8x8xf32>
    %266 = vector.extract_strided_slice %236 {offsets = [2, 72], sizes = [8, 8], strides = [1, 1]} : vector<12x96xf32> to vector<8x8xf32>
    %267 = arith.addf %265, %266 : vector<8x8xf32>
    %268 = vector.extract_strided_slice %236 {offsets = [3, 80], sizes = [8, 8], strides = [1, 1]} : vector<12x96xf32> to vector<8x8xf32>
    %269 = arith.addf %267, %268 : vector<8x8xf32>
    %270 = vector.extract_strided_slice %236 {offsets = [4, 88], sizes = [8, 8], strides = [1, 1]} : vector<12x96xf32> to vector<8x8xf32>
    %271 = arith.addf %269, %270 : vector<8x8xf32>
    %272 = vector.extract_strided_slice %3 {offsets = [0, 16], sizes = [1, 8], strides = [1, 1]} : vector<1x24xf32> to vector<1x8xf32>
    %273 = vector.broadcast %272 : vector<1x8xf32> to vector<8x8xf32>
    %274 = arith.addf %271, %273 : vector<8x8xf32>
    %cst_54 = arith.constant 0.000000e+00 : f32
    %275 = vector.broadcast %cst_54 : f32 to vector<8x8xf32>
    %276 = arith.maximumf %274, %275 : vector<8x8xf32>
    %cst_55 = arith.constant dense<0xFF800000> : vector<8xf32>
    %277 = vector.multi_reduction <maximumf>, %276, %cst_55 [0] : vector<8x8xf32> to vector<8xf32>
    %278 = vector.shape_cast %277 : vector<8xf32> to vector<1x8xf32>
    %279 = tpu.concatenate %248, %262, %278 in 1 : vector<1x8xf32>, vector<1x8xf32>, vector<1x8xf32> -> vector<1x24xf32>
    %280 = vector.shape_cast %279 : vector<1x24xf32> to vector<1x1x24xf32>
    %c1_56 = arith.constant 1 : index
    %c0_57 = arith.constant 0 : index
    %c0_58 = arith.constant 0 : index
    %281 = vector.load %arg15[%c1_56, %c0_57, %c0_58] : memref<2x5x24xf32, #tpu.memory_space<vmem>>, vector<1x1x24xf32>
    tpu.vector_store %arg15[%c1_56, %c0_57, %c0_58], %280 {strides = array<i32>} : memref<2x5x24xf32, #tpu.memory_space<vmem>>, vector<1x1x24xf32>,
    %282 = vector.extract_strided_slice %2 {offsets = [72, 0], sizes = [12, 96], strides = [1, 1]} : vector<96x96xf32> to vector<12x96xf32>
    %283 = vector.extract_strided_slice %282 {offsets = [0, 0], sizes = [10, 8], strides = [1, 1]} : vector<12x96xf32> to vector<10x8xf32>
    %284 = vector.extract_strided_slice %282 {offsets = [1, 8], sizes = [10, 8], strides = [1, 1]} : vector<12x96xf32> to vector<10x8xf32>
    %285 = arith.addf %283, %284 : vector<10x8xf32>
    %286 = vector.extract_strided_slice %282 {offsets = [2, 16], sizes = [10, 8], strides = [1, 1]} : vector<12x96xf32> to vector<10x8xf32>
    %287 = arith.addf %285, %286 : vector<10x8xf32>
    %288 = vector.extract_strided_slice %3 {offsets = [0, 0], sizes = [1, 8], strides = [1, 1]} : vector<1x24xf32> to vector<1x8xf32>
    %289 = vector.broadcast %288 : vector<1x8xf32> to vector<10x8xf32>
    %290 = arith.addf %287, %289 : vector<10x8xf32>
    %cst_59 = arith.constant 0.000000e+00 : f32
    %291 = vector.broadcast %cst_59 : f32 to vector<10x8xf32>
    %292 = arith.maximumf %290, %291 : vector<10x8xf32>
    %cst_60 = arith.constant dense<0xFF800000> : vector<8xf32>
    %293 = vector.multi_reduction <maximumf>, %292, %cst_60 [0] : vector<10x8xf32> to vector<8xf32>
    %294 = vector.shape_cast %293 : vector<8xf32> to vector<1x8xf32>
    %295 = vector.extract_strided_slice %282 {offsets = [0, 24], sizes = [9, 8], strides = [1, 1]} : vector<12x96xf32> to vector<9x8xf32>
    %296 = vector.extract_strided_slice %282 {offsets = [1, 32], sizes = [9, 8], strides = [1, 1]} : vector<12x96xf32> to vector<9x8xf32>
    %297 = arith.addf %295, %296 : vector<9x8xf32>
    %298 = vector.extract_strided_slice %282 {offsets = [2, 40], sizes = [9, 8], strides = [1, 1]} : vector<12x96xf32> to vector<9x8xf32>
    %299 = arith.addf %297, %298 : vector<9x8xf32>
    %300 = vector.extract_strided_slice %282 {offsets = [3, 48], sizes = [9, 8], strides = [1, 1]} : vector<12x96xf32> to vector<9x8xf32>
    %301 = arith.addf %299, %300 : vector<9x8xf32>
    %302 = vector.extract_strided_slice %3 {offsets = [0, 8], sizes = [1, 8], strides = [1, 1]} : vector<1x24xf32> to vector<1x8xf32>
    %303 = vector.broadcast %302 : vector<1x8xf32> to vector<9x8xf32>
    %304 = arith.addf %301, %303 : vector<9x8xf32>
    %cst_61 = arith.constant 0.000000e+00 : f32
    %305 = vector.broadcast %cst_61 : f32 to vector<9x8xf32>
    %306 = arith.maximumf %304, %305 : vector<9x8xf32>
    %cst_62 = arith.constant dense<0xFF800000> : vector<8xf32>
    %307 = vector.multi_reduction <maximumf>, %306, %cst_62 [0] : vector<9x8xf32> to vector<8xf32>
    %308 = vector.shape_cast %307 : vector<8xf32> to vector<1x8xf32>
    %309 = vector.extract_strided_slice %282 {offsets = [0, 56], sizes = [8, 8], strides = [1, 1]} : vector<12x96xf32> to vector<8x8xf32>
    %310 = vector.extract_strided_slice %282 {offsets = [1, 64], sizes = [8, 8], strides = [1, 1]} : vector<12x96xf32> to vector<8x8xf32>
    %311 = arith.addf %309, %310 : vector<8x8xf32>
    %312 = vector.extract_strided_slice %282 {offsets = [2, 72], sizes = [8, 8], strides = [1, 1]} : vector<12x96xf32> to vector<8x8xf32>
    %313 = arith.addf %311, %312 : vector<8x8xf32>
    %314 = vector.extract_strided_slice %282 {offsets = [3, 80], sizes = [8, 8], strides = [1, 1]} : vector<12x96xf32> to vector<8x8xf32>
    %315 = arith.addf %313, %314 : vector<8x8xf32>
    %316 = vector.extract_strided_slice %282 {offsets = [4, 88], sizes = [8, 8], strides = [1, 1]} : vector<12x96xf32> to vector<8x8xf32>
    %317 = arith.addf %315, %316 : vector<8x8xf32>
    %318 = vector.extract_strided_slice %3 {offsets = [0, 16], sizes = [1, 8], strides = [1, 1]} : vector<1x24xf32> to vector<1x8xf32>
    %319 = vector.broadcast %318 : vector<1x8xf32> to vector<8x8xf32>
    %320 = arith.addf %317, %319 : vector<8x8xf32>
    %cst_63 = arith.constant 0.000000e+00 : f32
    %321 = vector.broadcast %cst_63 : f32 to vector<8x8xf32>
    %322 = arith.maximumf %320, %321 : vector<8x8xf32>
    %cst_64 = arith.constant dense<0xFF800000> : vector<8xf32>
    %323 = vector.multi_reduction <maximumf>, %322, %cst_64 [0] : vector<8x8xf32> to vector<8xf32>
    %324 = vector.shape_cast %323 : vector<8xf32> to vector<1x8xf32>
    %325 = tpu.concatenate %294, %308, %324 in 1 : vector<1x8xf32>, vector<1x8xf32>, vector<1x8xf32> -> vector<1x24xf32>
    %326 = vector.shape_cast %325 : vector<1x24xf32> to vector<1x1x24xf32>
    %c1_65 = arith.constant 1 : index
    %c1_66 = arith.constant 1 : index
    %c0_67 = arith.constant 0 : index
    %327 = vector.load %arg15[%c1_65, %c1_66, %c0_67] : memref<2x5x24xf32, #tpu.memory_space<vmem>>, vector<1x1x24xf32>
    tpu.vector_store %arg15[%c1_65, %c1_66, %c0_67], %326 {strides = array<i32>} : memref<2x5x24xf32, #tpu.memory_space<vmem>>, vector<1x1x24xf32>,
    %328 = vector.extract_strided_slice %2 {offsets = [84, 0], sizes = [12, 96], strides = [1, 1]} : vector<96x96xf32> to vector<12x96xf32>
    %329 = vector.extract_strided_slice %328 {offsets = [0, 0], sizes = [10, 8], strides = [1, 1]} : vector<12x96xf32> to vector<10x8xf32>
    %330 = vector.extract_strided_slice %328 {offsets = [1, 8], sizes = [10, 8], strides = [1, 1]} : vector<12x96xf32> to vector<10x8xf32>
    %331 = arith.addf %329, %330 : vector<10x8xf32>
    %332 = vector.extract_strided_slice %328 {offsets = [2, 16], sizes = [10, 8], strides = [1, 1]} : vector<12x96xf32> to vector<10x8xf32>
    %333 = arith.addf %331, %332 : vector<10x8xf32>
    %334 = vector.extract_strided_slice %3 {offsets = [0, 0], sizes = [1, 8], strides = [1, 1]} : vector<1x24xf32> to vector<1x8xf32>
    %335 = vector.broadcast %334 : vector<1x8xf32> to vector<10x8xf32>
    %336 = arith.addf %333, %335 : vector<10x8xf32>
    %cst_68 = arith.constant 0.000000e+00 : f32
    %337 = vector.broadcast %cst_68 : f32 to vector<10x8xf32>
    %338 = arith.maximumf %336, %337 : vector<10x8xf32>
    %cst_69 = arith.constant dense<0xFF800000> : vector<8xf32>
    %339 = vector.multi_reduction <maximumf>, %338, %cst_69 [0] : vector<10x8xf32> to vector<8xf32>
    %340 = vector.shape_cast %339 : vector<8xf32> to vector<1x8xf32>
    %341 = vector.extract_strided_slice %328 {offsets = [0, 24], sizes = [9, 8], strides = [1, 1]} : vector<12x96xf32> to vector<9x8xf32>
    %342 = vector.extract_strided_slice %328 {offsets = [1, 32], sizes = [9, 8], strides = [1, 1]} : vector<12x96xf32> to vector<9x8xf32>
    %343 = arith.addf %341, %342 : vector<9x8xf32>
    %344 = vector.extract_strided_slice %328 {offsets = [2, 40], sizes = [9, 8], strides = [1, 1]} : vector<12x96xf32> to vector<9x8xf32>
    %345 = arith.addf %343, %344 : vector<9x8xf32>
    %346 = vector.extract_strided_slice %328 {offsets = [3, 48], sizes = [9, 8], strides = [1, 1]} : vector<12x96xf32> to vector<9x8xf32>
    %347 = arith.addf %345, %346 : vector<9x8xf32>
    %348 = vector.extract_strided_slice %3 {offsets = [0, 8], sizes = [1, 8], strides = [1, 1]} : vector<1x24xf32> to vector<1x8xf32>
    %349 = vector.broadcast %348 : vector<1x8xf32> to vector<9x8xf32>
    %350 = arith.addf %347, %349 : vector<9x8xf32>
    %cst_70 = arith.constant 0.000000e+00 : f32
    %351 = vector.broadcast %cst_70 : f32 to vector<9x8xf32>
    %352 = arith.maximumf %350, %351 : vector<9x8xf32>
    %cst_71 = arith.constant dense<0xFF800000> : vector<8xf32>
    %353 = vector.multi_reduction <maximumf>, %352, %cst_71 [0] : vector<9x8xf32> to vector<8xf32>
    %354 = vector.shape_cast %353 : vector<8xf32> to vector<1x8xf32>
    %355 = vector.extract_strided_slice %328 {offsets = [0, 56], sizes = [8, 8], strides = [1, 1]} : vector<12x96xf32> to vector<8x8xf32>
    %356 = vector.extract_strided_slice %328 {offsets = [1, 64], sizes = [8, 8], strides = [1, 1]} : vector<12x96xf32> to vector<8x8xf32>
    %357 = arith.addf %355, %356 : vector<8x8xf32>
    %358 = vector.extract_strided_slice %328 {offsets = [2, 72], sizes = [8, 8], strides = [1, 1]} : vector<12x96xf32> to vector<8x8xf32>
    %359 = arith.addf %357, %358 : vector<8x8xf32>
    %360 = vector.extract_strided_slice %328 {offsets = [3, 80], sizes = [8, 8], strides = [1, 1]} : vector<12x96xf32> to vector<8x8xf32>
    %361 = arith.addf %359, %360 : vector<8x8xf32>
    %362 = vector.extract_strided_slice %328 {offsets = [4, 88], sizes = [8, 8], strides = [1, 1]} : vector<12x96xf32> to vector<8x8xf32>
    %363 = arith.addf %361, %362 : vector<8x8xf32>
    %364 = vector.extract_strided_slice %3 {offsets = [0, 16], sizes = [1, 8], strides = [1, 1]} : vector<1x24xf32> to vector<1x8xf32>
    %365 = vector.broadcast %364 : vector<1x8xf32> to vector<8x8xf32>
    %366 = arith.addf %363, %365 : vector<8x8xf32>
    %cst_72 = arith.constant 0.000000e+00 : f32
    %367 = vector.broadcast %cst_72 : f32 to vector<8x8xf32>
    %368 = arith.maximumf %366, %367 : vector<8x8xf32>
    %cst_73 = arith.constant dense<0xFF800000> : vector<8xf32>
    %369 = vector.multi_reduction <maximumf>, %368, %cst_73 [0] : vector<8x8xf32> to vector<8xf32>
    %370 = vector.shape_cast %369 : vector<8xf32> to vector<1x8xf32>
    %371 = tpu.concatenate %340, %354, %370 in 1 : vector<1x8xf32>, vector<1x8xf32>, vector<1x8xf32> -> vector<1x24xf32>
    %372 = vector.shape_cast %371 : vector<1x24xf32> to vector<1x1x24xf32>
    %c1_74 = arith.constant 1 : index
    %c2_75 = arith.constant 2 : index
    %c0_76 = arith.constant 0 : index
    %373 = vector.load %arg15[%c1_74, %c2_75, %c0_76] : memref<2x5x24xf32, #tpu.memory_space<vmem>>, vector<1x1x24xf32>
    tpu.vector_store %arg15[%c1_74, %c2_75, %c0_76], %372 {strides = array<i32>} : memref<2x5x24xf32, #tpu.memory_space<vmem>>, vector<1x1x24xf32>,
    %c0_77 = arith.constant 0 : index
    %c0_78 = arith.constant 0 : index
    %c0_79 = arith.constant 0 : index
    %374 = vector.load %arg15[%c0_77, %c0_78, %c0_79] : memref<2x5x24xf32, #tpu.memory_space<vmem>>, vector<2x5x24xf32>
    %c0_80 = arith.constant 0 : index
    %c0_81 = arith.constant 0 : index
    %375 = vector.load %arg8[%c0_80, %c0_81] : memref<2x5xf32, #tpu.memory_space<vmem>>, vector<2x5xf32>
    %c0_82 = arith.constant 0 : index
    %c0_83 = arith.constant 0 : index
    %376 = vector.load %arg3[%c0_82, %c0_83] : memref<24x128xf32, #tpu.memory_space<vmem>>, vector<24x128xf32>
    %c0_84 = arith.constant 0 : index
    %c0_85 = arith.constant 0 : index
    %377 = vector.load %arg4[%c0_84, %c0_85] : memref<1x128xf32, #tpu.memory_space<vmem>>, vector<1x128xf32>
    %378 = vector.extract_strided_slice %374 {offsets = [0, 0, 0], sizes = [2, 1, 24], strides = [1, 1, 1]} : vector<2x5x24xf32> to vector<2x1x24xf32>
    %379 = vector.shape_cast %378 : vector<2x1x24xf32> to vector<2x24xf32>
    %cst_86 = arith.constant dense<0.000000e+00> : vector<2x128xf32>
    %380 = tpu.matmul %379, %376, %cst_86 {dimension_numbers = #tpu.dot_dimension_numbers<[1], [0], [0], [1], [0, 0, 1, 1], [], []>} : vector<2x24xf32>, vector<24x128xf32>, vector<2x128xf32> -> vector<2x128xf32>
    %381 = vector.broadcast %377 : vector<1x128xf32> to vector<2x128xf32>
    %382 = arith.addf %380, %381 : vector<2x128xf32>
    %383 = vector.extract_strided_slice %374 {offsets = [0, 1, 0], sizes = [2, 1, 24], strides = [1, 1, 1]} : vector<2x5x24xf32> to vector<2x1x24xf32>
    %384 = vector.shape_cast %383 : vector<2x1x24xf32> to vector<2x24xf32>
    %cst_87 = arith.constant dense<0.000000e+00> : vector<2x128xf32>
    %385 = tpu.matmul %384, %376, %cst_87 {dimension_numbers = #tpu.dot_dimension_numbers<[1], [0], [0], [1], [0, 0, 1, 1], [], []>} : vector<2x24xf32>, vector<24x128xf32>, vector<2x128xf32> -> vector<2x128xf32>
    %386 = vector.broadcast %377 : vector<1x128xf32> to vector<2x128xf32>
    %387 = arith.addf %385, %386 : vector<2x128xf32>
    %388 = vector.extract_strided_slice %374 {offsets = [0, 2, 0], sizes = [2, 1, 24], strides = [1, 1, 1]} : vector<2x5x24xf32> to vector<2x1x24xf32>
    %389 = vector.shape_cast %388 : vector<2x1x24xf32> to vector<2x24xf32>
    %cst_88 = arith.constant dense<0.000000e+00> : vector<2x128xf32>
    %390 = tpu.matmul %389, %376, %cst_88 {dimension_numbers = #tpu.dot_dimension_numbers<[1], [0], [0], [1], [0, 0, 1, 1], [], []>} : vector<2x24xf32>, vector<24x128xf32>, vector<2x128xf32> -> vector<2x128xf32>
    %391 = vector.broadcast %377 : vector<1x128xf32> to vector<2x128xf32>
    %392 = arith.addf %390, %391 : vector<2x128xf32>
    %393 = vector.extract_strided_slice %374 {offsets = [0, 3, 0], sizes = [2, 1, 24], strides = [1, 1, 1]} : vector<2x5x24xf32> to vector<2x1x24xf32>
    %394 = vector.shape_cast %393 : vector<2x1x24xf32> to vector<2x24xf32>
    %cst_89 = arith.constant dense<0.000000e+00> : vector<2x128xf32>
    %395 = tpu.matmul %394, %376, %cst_89 {dimension_numbers = #tpu.dot_dimension_numbers<[1], [0], [0], [1], [0, 0, 1, 1], [], []>} : vector<2x24xf32>, vector<24x128xf32>, vector<2x128xf32> -> vector<2x128xf32>
    %396 = vector.broadcast %377 : vector<1x128xf32> to vector<2x128xf32>
    %397 = arith.addf %395, %396 : vector<2x128xf32>
    %398 = vector.extract_strided_slice %374 {offsets = [0, 4, 0], sizes = [2, 1, 24], strides = [1, 1, 1]} : vector<2x5x24xf32> to vector<2x1x24xf32>
    %399 = vector.shape_cast %398 : vector<2x1x24xf32> to vector<2x24xf32>
    %cst_90 = arith.constant dense<0.000000e+00> : vector<2x128xf32>
    %400 = tpu.matmul %399, %376, %cst_90 {dimension_numbers = #tpu.dot_dimension_numbers<[1], [0], [0], [1], [0, 0, 1, 1], [], []>} : vector<2x24xf32>, vector<24x128xf32>, vector<2x128xf32> -> vector<2x128xf32>
    %401 = vector.broadcast %377 : vector<1x128xf32> to vector<2x128xf32>
    %402 = arith.addf %400, %401 : vector<2x128xf32>
    %c0_91 = arith.constant 0 : index
    %c0_92 = arith.constant 0 : index
    %c0_93 = arith.constant 0 : index
    %403 = vector.load %arg5[%c0_91, %c0_92, %c0_93] : memref<2x16x64xf32, #tpu.memory_space<vmem>>, vector<1x16x64xf32>
    %404 = vector.shape_cast %403 : vector<1x16x64xf32> to vector<16x64xf32>
    %c0_94 = arith.constant 0 : index
    %c0_95 = arith.constant 0 : index
    %c0_96 = arith.constant 0 : index
    %405 = vector.load %arg6[%c0_94, %c0_95, %c0_96] : memref<2x1x16xf32, #tpu.memory_space<vmem>>, vector<1x1x16xf32>
    %406 = vector.shape_cast %405 : vector<1x1x16xf32> to vector<1x16xf32>
    %407 = vector.shape_cast %406 : vector<1x16xf32> to vector<1x16xf32>
    %408 = vector.broadcast %407 : vector<1x16xf32> to vector<2x16xf32>
    %c0_97 = arith.constant 0 : index
    %c0_98 = arith.constant 0 : index
    %c0_99 = arith.constant 0 : index
    %409 = vector.load %arg7[%c0_97, %c0_98, %c0_99] : memref<2x1x16xf32, #tpu.memory_space<vmem>>, vector<1x1x16xf32>
    %410 = vector.shape_cast %409 : vector<1x1x16xf32> to vector<1x16xf32>
    %411 = vector.shape_cast %410 : vector<1x16xf32> to vector<1x16xf32>
    %412 = vector.broadcast %411 : vector<1x16xf32> to vector<2x16xf32>
    %413 = vector.extract_strided_slice %382 {offsets = [0, 0], sizes = [2, 64], strides = [1, 1]} : vector<2x128xf32> to vector<2x64xf32>
    %cst_100 = arith.constant dense<0.000000e+00> : vector<2x64xf32>
    %414 = tpu.matmul %408, %404, %cst_100 {dimension_numbers = #tpu.dot_dimension_numbers<[1], [0], [0], [1], [0, 0, 1, 1], [], []>} : vector<2x16xf32>, vector<16x64xf32>, vector<2x64xf32> -> vector<2x64xf32>
    %415 = arith.addf %413, %414 : vector<2x64xf32>
    %416 = vector.extract_strided_slice %415 {offsets = [0, 0], sizes = [2, 32], strides = [1, 1]} : vector<2x64xf32> to vector<2x32xf32>
    %417 = arith.negf %416 : vector<2x32xf32>
    %418 = math.exp %417 : vector<2x32xf32>
    %cst_101 = arith.constant 1.000000e+00 : f32
    %419 = vector.broadcast %cst_101 : f32 to vector<2x32xf32>
    %420 = arith.addf %419, %418 : vector<2x32xf32>
    %421 = arith.divf %419, %420 : vector<2x32xf32>
    %422 = vector.extract_strided_slice %421 {offsets = [0, 0], sizes = [2, 16], strides = [1, 1]} : vector<2x32xf32> to vector<2x16xf32>
    %423 = vector.extract_strided_slice %421 {offsets = [0, 16], sizes = [2, 16], strides = [1, 1]} : vector<2x32xf32> to vector<2x16xf32>
    %424 = vector.extract_strided_slice %415 {offsets = [0, 32], sizes = [2, 16], strides = [1, 1]} : vector<2x64xf32> to vector<2x16xf32>
    %425 = math.tanh %424 : vector<2x16xf32>
    %426 = vector.extract_strided_slice %415 {offsets = [0, 48], sizes = [2, 16], strides = [1, 1]} : vector<2x64xf32> to vector<2x16xf32>
    %427 = arith.negf %426 : vector<2x16xf32>
    %428 = math.exp %427 : vector<2x16xf32>
    %cst_102 = arith.constant 1.000000e+00 : f32
    %429 = vector.broadcast %cst_102 : f32 to vector<2x16xf32>
    %430 = arith.addf %429, %428 : vector<2x16xf32>
    %431 = arith.divf %429, %430 : vector<2x16xf32>
    %432 = arith.mulf %423, %412 : vector<2x16xf32>
    %433 = arith.mulf %422, %425 : vector<2x16xf32>
    %434 = arith.addf %432, %433 : vector<2x16xf32>
    %435 = math.tanh %434 : vector<2x16xf32>
    %436 = arith.mulf %431, %435 : vector<2x16xf32>
    %437 = vector.extract_strided_slice %375 {offsets = [0, 0], sizes = [2, 1], strides = [1, 1]} : vector<2x5xf32> to vector<2x1xf32>
    %438 = vector.broadcast %437 : vector<2x1xf32> to vector<2x16xf32>
    %439 = arith.mulf %438, %436 : vector<2x16xf32>
    %cst_103 = arith.constant 1.000000e+00 : f32
    %440 = vector.broadcast %cst_103 : f32 to vector<2x1xf32>
    %441 = arith.subf %440, %437 : vector<2x1xf32>
    %442 = vector.broadcast %441 : vector<2x1xf32> to vector<2x16xf32>
    %443 = arith.mulf %442, %408 : vector<2x16xf32>
    %444 = arith.addf %439, %443 : vector<2x16xf32>
    %445 = vector.broadcast %437 : vector<2x1xf32> to vector<2x16xf32>
    %446 = arith.mulf %445, %434 : vector<2x16xf32>
    %cst_104 = arith.constant 1.000000e+00 : f32
    %447 = vector.broadcast %cst_104 : f32 to vector<2x1xf32>
    %448 = arith.subf %447, %437 : vector<2x1xf32>
    %449 = vector.broadcast %448 : vector<2x1xf32> to vector<2x16xf32>
    %450 = arith.mulf %449, %412 : vector<2x16xf32>
    %451 = arith.addf %446, %450 : vector<2x16xf32>
    %452 = vector.broadcast %437 : vector<2x1xf32> to vector<2x16xf32>
    %453 = arith.mulf %452, %436 : vector<2x16xf32>
    %454 = vector.shape_cast %453 : vector<2x16xf32> to vector<2x1x16xf32>
    %c0_105 = arith.constant 0 : index
    %c0_106 = arith.constant 0 : index
    %c0_107 = arith.constant 0 : index
    %455 = vector.load %arg16[%c0_105, %c0_106, %c0_107] : memref<2x5x32xf32, #tpu.memory_space<vmem>>, vector<2x1x16xf32>
    tpu.vector_store %arg16[%c0_105, %c0_106, %c0_107], %454 {strides = array<i32>} : memref<2x5x32xf32, #tpu.memory_space<vmem>>, vector<2x1x16xf32>,
    %456 = vector.extract_strided_slice %387 {offsets = [0, 0], sizes = [2, 64], strides = [1, 1]} : vector<2x128xf32> to vector<2x64xf32>
    %cst_108 = arith.constant dense<0.000000e+00> : vector<2x64xf32>
    %457 = tpu.matmul %444, %404, %cst_108 {dimension_numbers = #tpu.dot_dimension_numbers<[1], [0], [0], [1], [0, 0, 1, 1], [], []>} : vector<2x16xf32>, vector<16x64xf32>, vector<2x64xf32> -> vector<2x64xf32>
    %458 = arith.addf %456, %457 : vector<2x64xf32>
    %459 = vector.extract_strided_slice %458 {offsets = [0, 0], sizes = [2, 32], strides = [1, 1]} : vector<2x64xf32> to vector<2x32xf32>
    %460 = arith.negf %459 : vector<2x32xf32>
    %461 = math.exp %460 : vector<2x32xf32>
    %cst_109 = arith.constant 1.000000e+00 : f32
    %462 = vector.broadcast %cst_109 : f32 to vector<2x32xf32>
    %463 = arith.addf %462, %461 : vector<2x32xf32>
    %464 = arith.divf %462, %463 : vector<2x32xf32>
    %465 = vector.extract_strided_slice %464 {offsets = [0, 0], sizes = [2, 16], strides = [1, 1]} : vector<2x32xf32> to vector<2x16xf32>
    %466 = vector.extract_strided_slice %464 {offsets = [0, 16], sizes = [2, 16], strides = [1, 1]} : vector<2x32xf32> to vector<2x16xf32>
    %467 = vector.extract_strided_slice %458 {offsets = [0, 32], sizes = [2, 16], strides = [1, 1]} : vector<2x64xf32> to vector<2x16xf32>
    %468 = math.tanh %467 : vector<2x16xf32>
    %469 = vector.extract_strided_slice %458 {offsets = [0, 48], sizes = [2, 16], strides = [1, 1]} : vector<2x64xf32> to vector<2x16xf32>
    %470 = arith.negf %469 : vector<2x16xf32>
    %471 = math.exp %470 : vector<2x16xf32>
    %cst_110 = arith.constant 1.000000e+00 : f32
    %472 = vector.broadcast %cst_110 : f32 to vector<2x16xf32>
    %473 = arith.addf %472, %471 : vector<2x16xf32>
    %474 = arith.divf %472, %473 : vector<2x16xf32>
    %475 = arith.mulf %466, %451 : vector<2x16xf32>
    %476 = arith.mulf %465, %468 : vector<2x16xf32>
    %477 = arith.addf %475, %476 : vector<2x16xf32>
    %478 = math.tanh %477 : vector<2x16xf32>
    %479 = arith.mulf %474, %478 : vector<2x16xf32>
    %480 = vector.extract_strided_slice %375 {offsets = [0, 1], sizes = [2, 1], strides = [1, 1]} : vector<2x5xf32> to vector<2x1xf32>
    %481 = vector.broadcast %480 : vector<2x1xf32> to vector<2x16xf32>
    %482 = arith.mulf %481, %479 : vector<2x16xf32>
    %cst_111 = arith.constant 1.000000e+00 : f32
    %483 = vector.broadcast %cst_111 : f32 to vector<2x1xf32>
    %484 = arith.subf %483, %480 : vector<2x1xf32>
    %485 = vector.broadcast %484 : vector<2x1xf32> to vector<2x16xf32>
    %486 = arith.mulf %485, %444 : vector<2x16xf32>
    %487 = arith.addf %482, %486 : vector<2x16xf32>
    %488 = vector.broadcast %480 : vector<2x1xf32> to vector<2x16xf32>
    %489 = arith.mulf %488, %477 : vector<2x16xf32>
    %cst_112 = arith.constant 1.000000e+00 : f32
    %490 = vector.broadcast %cst_112 : f32 to vector<2x1xf32>
    %491 = arith.subf %490, %480 : vector<2x1xf32>
    %492 = vector.broadcast %491 : vector<2x1xf32> to vector<2x16xf32>
    %493 = arith.mulf %492, %451 : vector<2x16xf32>
    %494 = arith.addf %489, %493 : vector<2x16xf32>
    %495 = vector.broadcast %480 : vector<2x1xf32> to vector<2x16xf32>
    %496 = arith.mulf %495, %479 : vector<2x16xf32>
    %497 = vector.shape_cast %496 : vector<2x16xf32> to vector<2x1x16xf32>
    %c0_113 = arith.constant 0 : index
    %c1_114 = arith.constant 1 : index
    %c0_115 = arith.constant 0 : index
    %498 = vector.load %arg16[%c0_113, %c1_114, %c0_115] : memref<2x5x32xf32, #tpu.memory_space<vmem>>, vector<2x1x16xf32>
    tpu.vector_store %arg16[%c0_113, %c1_114, %c0_115], %497 {strides = array<i32>} : memref<2x5x32xf32, #tpu.memory_space<vmem>>, vector<2x1x16xf32>,
    %499 = vector.extract_strided_slice %392 {offsets = [0, 0], sizes = [2, 64], strides = [1, 1]} : vector<2x128xf32> to vector<2x64xf32>
    %cst_116 = arith.constant dense<0.000000e+00> : vector<2x64xf32>
    %500 = tpu.matmul %487, %404, %cst_116 {dimension_numbers = #tpu.dot_dimension_numbers<[1], [0], [0], [1], [0, 0, 1, 1], [], []>} : vector<2x16xf32>, vector<16x64xf32>, vector<2x64xf32> -> vector<2x64xf32>
    %501 = arith.addf %499, %500 : vector<2x64xf32>
    %502 = vector.extract_strided_slice %501 {offsets = [0, 0], sizes = [2, 32], strides = [1, 1]} : vector<2x64xf32> to vector<2x32xf32>
    %503 = arith.negf %502 : vector<2x32xf32>
    %504 = math.exp %503 : vector<2x32xf32>
    %cst_117 = arith.constant 1.000000e+00 : f32
    %505 = vector.broadcast %cst_117 : f32 to vector<2x32xf32>
    %506 = arith.addf %505, %504 : vector<2x32xf32>
    %507 = arith.divf %505, %506 : vector<2x32xf32>
    %508 = vector.extract_strided_slice %507 {offsets = [0, 0], sizes = [2, 16], strides = [1, 1]} : vector<2x32xf32> to vector<2x16xf32>
    %509 = vector.extract_strided_slice %507 {offsets = [0, 16], sizes = [2, 16], strides = [1, 1]} : vector<2x32xf32> to vector<2x16xf32>
    %510 = vector.extract_strided_slice %501 {offsets = [0, 32], sizes = [2, 16], strides = [1, 1]} : vector<2x64xf32> to vector<2x16xf32>
    %511 = math.tanh %510 : vector<2x16xf32>
    %512 = vector.extract_strided_slice %501 {offsets = [0, 48], sizes = [2, 16], strides = [1, 1]} : vector<2x64xf32> to vector<2x16xf32>
    %513 = arith.negf %512 : vector<2x16xf32>
    %514 = math.exp %513 : vector<2x16xf32>
    %cst_118 = arith.constant 1.000000e+00 : f32
    %515 = vector.broadcast %cst_118 : f32 to vector<2x16xf32>
    %516 = arith.addf %515, %514 : vector<2x16xf32>
    %517 = arith.divf %515, %516 : vector<2x16xf32>
    %518 = arith.mulf %509, %494 : vector<2x16xf32>
    %519 = arith.mulf %508, %511 : vector<2x16xf32>
    %520 = arith.addf %518, %519 : vector<2x16xf32>
    %521 = math.tanh %520 : vector<2x16xf32>
    %522 = arith.mulf %517, %521 : vector<2x16xf32>
    %523 = vector.extract_strided_slice %375 {offsets = [0, 2], sizes = [2, 1], strides = [1, 1]} : vector<2x5xf32> to vector<2x1xf32>
    %524 = vector.broadcast %523 : vector<2x1xf32> to vector<2x16xf32>
    %525 = arith.mulf %524, %522 : vector<2x16xf32>
    %cst_119 = arith.constant 1.000000e+00 : f32
    %526 = vector.broadcast %cst_119 : f32 to vector<2x1xf32>
    %527 = arith.subf %526, %523 : vector<2x1xf32>
    %528 = vector.broadcast %527 : vector<2x1xf32> to vector<2x16xf32>
    %529 = arith.mulf %528, %487 : vector<2x16xf32>
    %530 = arith.addf %525, %529 : vector<2x16xf32>
    %531 = vector.broadcast %523 : vector<2x1xf32> to vector<2x16xf32>
    %532 = arith.mulf %531, %520 : vector<2x16xf32>
    %cst_120 = arith.constant 1.000000e+00 : f32
    %533 = vector.broadcast %cst_120 : f32 to vector<2x1xf32>
    %534 = arith.subf %533, %523 : vector<2x1xf32>
    %535 = vector.broadcast %534 : vector<2x1xf32> to vector<2x16xf32>
    %536 = arith.mulf %535, %494 : vector<2x16xf32>
    %537 = arith.addf %532, %536 : vector<2x16xf32>
    %538 = vector.broadcast %523 : vector<2x1xf32> to vector<2x16xf32>
    %539 = arith.mulf %538, %522 : vector<2x16xf32>
    %540 = vector.shape_cast %539 : vector<2x16xf32> to vector<2x1x16xf32>
    %c0_121 = arith.constant 0 : index
    %c2_122 = arith.constant 2 : index
    %c0_123 = arith.constant 0 : index
    %541 = vector.load %arg16[%c0_121, %c2_122, %c0_123] : memref<2x5x32xf32, #tpu.memory_space<vmem>>, vector<2x1x16xf32>
    tpu.vector_store %arg16[%c0_121, %c2_122, %c0_123], %540 {strides = array<i32>} : memref<2x5x32xf32, #tpu.memory_space<vmem>>, vector<2x1x16xf32>,
    %542 = vector.extract_strided_slice %397 {offsets = [0, 0], sizes = [2, 64], strides = [1, 1]} : vector<2x128xf32> to vector<2x64xf32>
    %cst_124 = arith.constant dense<0.000000e+00> : vector<2x64xf32>
    %543 = tpu.matmul %530, %404, %cst_124 {dimension_numbers = #tpu.dot_dimension_numbers<[1], [0], [0], [1], [0, 0, 1, 1], [], []>} : vector<2x16xf32>, vector<16x64xf32>, vector<2x64xf32> -> vector<2x64xf32>
    %544 = arith.addf %542, %543 : vector<2x64xf32>
    %545 = vector.extract_strided_slice %544 {offsets = [0, 0], sizes = [2, 32], strides = [1, 1]} : vector<2x64xf32> to vector<2x32xf32>
    %546 = arith.negf %545 : vector<2x32xf32>
    %547 = math.exp %546 : vector<2x32xf32>
    %cst_125 = arith.constant 1.000000e+00 : f32
    %548 = vector.broadcast %cst_125 : f32 to vector<2x32xf32>
    %549 = arith.addf %548, %547 : vector<2x32xf32>
    %550 = arith.divf %548, %549 : vector<2x32xf32>
    %551 = vector.extract_strided_slice %550 {offsets = [0, 0], sizes = [2, 16], strides = [1, 1]} : vector<2x32xf32> to vector<2x16xf32>
    %552 = vector.extract_strided_slice %550 {offsets = [0, 16], sizes = [2, 16], strides = [1, 1]} : vector<2x32xf32> to vector<2x16xf32>
    %553 = vector.extract_strided_slice %544 {offsets = [0, 32], sizes = [2, 16], strides = [1, 1]} : vector<2x64xf32> to vector<2x16xf32>
    %554 = math.tanh %553 : vector<2x16xf32>
    %555 = vector.extract_strided_slice %544 {offsets = [0, 48], sizes = [2, 16], strides = [1, 1]} : vector<2x64xf32> to vector<2x16xf32>
    %556 = arith.negf %555 : vector<2x16xf32>
    %557 = math.exp %556 : vector<2x16xf32>
    %cst_126 = arith.constant 1.000000e+00 : f32
    %558 = vector.broadcast %cst_126 : f32 to vector<2x16xf32>
    %559 = arith.addf %558, %557 : vector<2x16xf32>
    %560 = arith.divf %558, %559 : vector<2x16xf32>
    %561 = arith.mulf %552, %537 : vector<2x16xf32>
    %562 = arith.mulf %551, %554 : vector<2x16xf32>
    %563 = arith.addf %561, %562 : vector<2x16xf32>
    %564 = math.tanh %563 : vector<2x16xf32>
    %565 = arith.mulf %560, %564 : vector<2x16xf32>
    %566 = vector.extract_strided_slice %375 {offsets = [0, 3], sizes = [2, 1], strides = [1, 1]} : vector<2x5xf32> to vector<2x1xf32>
    %567 = vector.broadcast %566 : vector<2x1xf32> to vector<2x16xf32>
    %568 = arith.mulf %567, %565 : vector<2x16xf32>
    %cst_127 = arith.constant 1.000000e+00 : f32
    %569 = vector.broadcast %cst_127 : f32 to vector<2x1xf32>
    %570 = arith.subf %569, %566 : vector<2x1xf32>
    %571 = vector.broadcast %570 : vector<2x1xf32> to vector<2x16xf32>
    %572 = arith.mulf %571, %530 : vector<2x16xf32>
    %573 = arith.addf %568, %572 : vector<2x16xf32>
    %574 = vector.broadcast %566 : vector<2x1xf32> to vector<2x16xf32>
    %575 = arith.mulf %574, %563 : vector<2x16xf32>
    %cst_128 = arith.constant 1.000000e+00 : f32
    %576 = vector.broadcast %cst_128 : f32 to vector<2x1xf32>
    %577 = arith.subf %576, %566 : vector<2x1xf32>
    %578 = vector.broadcast %577 : vector<2x1xf32> to vector<2x16xf32>
    %579 = arith.mulf %578, %537 : vector<2x16xf32>
    %580 = arith.addf %575, %579 : vector<2x16xf32>
    %581 = vector.broadcast %566 : vector<2x1xf32> to vector<2x16xf32>
    %582 = arith.mulf %581, %565 : vector<2x16xf32>
    %583 = vector.shape_cast %582 : vector<2x16xf32> to vector<2x1x16xf32>
    %c0_129 = arith.constant 0 : index
    %c3_130 = arith.constant 3 : index
    %c0_131 = arith.constant 0 : index
    %584 = vector.load %arg16[%c0_129, %c3_130, %c0_131] : memref<2x5x32xf32, #tpu.memory_space<vmem>>, vector<2x1x16xf32>
    tpu.vector_store %arg16[%c0_129, %c3_130, %c0_131], %583 {strides = array<i32>} : memref<2x5x32xf32, #tpu.memory_space<vmem>>, vector<2x1x16xf32>,
    %585 = vector.extract_strided_slice %402 {offsets = [0, 0], sizes = [2, 64], strides = [1, 1]} : vector<2x128xf32> to vector<2x64xf32>
    %cst_132 = arith.constant dense<0.000000e+00> : vector<2x64xf32>
    %586 = tpu.matmul %573, %404, %cst_132 {dimension_numbers = #tpu.dot_dimension_numbers<[1], [0], [0], [1], [0, 0, 1, 1], [], []>} : vector<2x16xf32>, vector<16x64xf32>, vector<2x64xf32> -> vector<2x64xf32>
    %587 = arith.addf %585, %586 : vector<2x64xf32>
    %588 = vector.extract_strided_slice %587 {offsets = [0, 0], sizes = [2, 32], strides = [1, 1]} : vector<2x64xf32> to vector<2x32xf32>
    %589 = arith.negf %588 : vector<2x32xf32>
    %590 = math.exp %589 : vector<2x32xf32>
    %cst_133 = arith.constant 1.000000e+00 : f32
    %591 = vector.broadcast %cst_133 : f32 to vector<2x32xf32>
    %592 = arith.addf %591, %590 : vector<2x32xf32>
    %593 = arith.divf %591, %592 : vector<2x32xf32>
    %594 = vector.extract_strided_slice %593 {offsets = [0, 0], sizes = [2, 16], strides = [1, 1]} : vector<2x32xf32> to vector<2x16xf32>
    %595 = vector.extract_strided_slice %593 {offsets = [0, 16], sizes = [2, 16], strides = [1, 1]} : vector<2x32xf32> to vector<2x16xf32>
    %596 = vector.extract_strided_slice %587 {offsets = [0, 32], sizes = [2, 16], strides = [1, 1]} : vector<2x64xf32> to vector<2x16xf32>
    %597 = math.tanh %596 : vector<2x16xf32>
    %598 = vector.extract_strided_slice %587 {offsets = [0, 48], sizes = [2, 16], strides = [1, 1]} : vector<2x64xf32> to vector<2x16xf32>
    %599 = arith.negf %598 : vector<2x16xf32>
    %600 = math.exp %599 : vector<2x16xf32>
    %cst_134 = arith.constant 1.000000e+00 : f32
    %601 = vector.broadcast %cst_134 : f32 to vector<2x16xf32>
    %602 = arith.addf %601, %600 : vector<2x16xf32>
    %603 = arith.divf %601, %602 : vector<2x16xf32>
    %604 = arith.mulf %595, %580 : vector<2x16xf32>
    %605 = arith.mulf %594, %597 : vector<2x16xf32>
    %606 = arith.addf %604, %605 : vector<2x16xf32>
    %607 = math.tanh %606 : vector<2x16xf32>
    %608 = arith.mulf %603, %607 : vector<2x16xf32>
    %609 = vector.extract_strided_slice %375 {offsets = [0, 4], sizes = [2, 1], strides = [1, 1]} : vector<2x5xf32> to vector<2x1xf32>
    %610 = vector.broadcast %609 : vector<2x1xf32> to vector<2x16xf32>
    %611 = arith.mulf %610, %608 : vector<2x16xf32>
    %612 = vector.shape_cast %611 : vector<2x16xf32> to vector<2x1x16xf32>
    %c0_135 = arith.constant 0 : index
    %c4_136 = arith.constant 4 : index
    %c0_137 = arith.constant 0 : index
    %613 = vector.load %arg16[%c0_135, %c4_136, %c0_137] : memref<2x5x32xf32, #tpu.memory_space<vmem>>, vector<2x1x16xf32>
    tpu.vector_store %arg16[%c0_135, %c4_136, %c0_137], %612 {strides = array<i32>} : memref<2x5x32xf32, #tpu.memory_space<vmem>>, vector<2x1x16xf32>,
    %c1_138 = arith.constant 1 : index
    %c0_139 = arith.constant 0 : index
    %c0_140 = arith.constant 0 : index
    %614 = vector.load %arg5[%c1_138, %c0_139, %c0_140] : memref<2x16x64xf32, #tpu.memory_space<vmem>>, vector<1x16x64xf32>
    %615 = vector.shape_cast %614 : vector<1x16x64xf32> to vector<16x64xf32>
    %c1_141 = arith.constant 1 : index
    %c0_142 = arith.constant 0 : index
    %c0_143 = arith.constant 0 : index
    %616 = vector.load %arg6[%c1_141, %c0_142, %c0_143] : memref<2x1x16xf32, #tpu.memory_space<vmem>>, vector<1x1x16xf32>
    %617 = vector.shape_cast %616 : vector<1x1x16xf32> to vector<1x16xf32>
    %618 = vector.shape_cast %617 : vector<1x16xf32> to vector<1x16xf32>
    %619 = vector.broadcast %618 : vector<1x16xf32> to vector<2x16xf32>
    %c1_144 = arith.constant 1 : index
    %c0_145 = arith.constant 0 : index
    %c0_146 = arith.constant 0 : index
    %620 = vector.load %arg7[%c1_144, %c0_145, %c0_146] : memref<2x1x16xf32, #tpu.memory_space<vmem>>, vector<1x1x16xf32>
    %621 = vector.shape_cast %620 : vector<1x1x16xf32> to vector<1x16xf32>
    %622 = vector.shape_cast %621 : vector<1x16xf32> to vector<1x16xf32>
    %623 = vector.broadcast %622 : vector<1x16xf32> to vector<2x16xf32>
    %624 = vector.extract_strided_slice %402 {offsets = [0, 64], sizes = [2, 64], strides = [1, 1]} : vector<2x128xf32> to vector<2x64xf32>
    %cst_147 = arith.constant dense<0.000000e+00> : vector<2x64xf32>
    %625 = tpu.matmul %619, %615, %cst_147 {dimension_numbers = #tpu.dot_dimension_numbers<[1], [0], [0], [1], [0, 0, 1, 1], [], []>} : vector<2x16xf32>, vector<16x64xf32>, vector<2x64xf32> -> vector<2x64xf32>
    %626 = arith.addf %624, %625 : vector<2x64xf32>
    %627 = vector.extract_strided_slice %626 {offsets = [0, 0], sizes = [2, 32], strides = [1, 1]} : vector<2x64xf32> to vector<2x32xf32>
    %628 = arith.negf %627 : vector<2x32xf32>
    %629 = math.exp %628 : vector<2x32xf32>
    %cst_148 = arith.constant 1.000000e+00 : f32
    %630 = vector.broadcast %cst_148 : f32 to vector<2x32xf32>
    %631 = arith.addf %630, %629 : vector<2x32xf32>
    %632 = arith.divf %630, %631 : vector<2x32xf32>
    %633 = vector.extract_strided_slice %632 {offsets = [0, 0], sizes = [2, 16], strides = [1, 1]} : vector<2x32xf32> to vector<2x16xf32>
    %634 = vector.extract_strided_slice %632 {offsets = [0, 16], sizes = [2, 16], strides = [1, 1]} : vector<2x32xf32> to vector<2x16xf32>
    %635 = vector.extract_strided_slice %626 {offsets = [0, 32], sizes = [2, 16], strides = [1, 1]} : vector<2x64xf32> to vector<2x16xf32>
    %636 = math.tanh %635 : vector<2x16xf32>
    %637 = vector.extract_strided_slice %626 {offsets = [0, 48], sizes = [2, 16], strides = [1, 1]} : vector<2x64xf32> to vector<2x16xf32>
    %638 = arith.negf %637 : vector<2x16xf32>
    %639 = math.exp %638 : vector<2x16xf32>
    %cst_149 = arith.constant 1.000000e+00 : f32
    %640 = vector.broadcast %cst_149 : f32 to vector<2x16xf32>
    %641 = arith.addf %640, %639 : vector<2x16xf32>
    %642 = arith.divf %640, %641 : vector<2x16xf32>
    %643 = arith.mulf %634, %623 : vector<2x16xf32>
    %644 = arith.mulf %633, %636 : vector<2x16xf32>
    %645 = arith.addf %643, %644 : vector<2x16xf32>
    %646 = math.tanh %645 : vector<2x16xf32>
    %647 = arith.mulf %642, %646 : vector<2x16xf32>
    %648 = vector.extract_strided_slice %375 {offsets = [0, 4], sizes = [2, 1], strides = [1, 1]} : vector<2x5xf32> to vector<2x1xf32>
    %649 = vector.broadcast %648 : vector<2x1xf32> to vector<2x16xf32>
    %650 = arith.mulf %649, %647 : vector<2x16xf32>
    %cst_150 = arith.constant 1.000000e+00 : f32
    %651 = vector.broadcast %cst_150 : f32 to vector<2x1xf32>
    %652 = arith.subf %651, %648 : vector<2x1xf32>
    %653 = vector.broadcast %652 : vector<2x1xf32> to vector<2x16xf32>
    %654 = arith.mulf %653, %619 : vector<2x16xf32>
    %655 = arith.addf %650, %654 : vector<2x16xf32>
    %656 = vector.broadcast %648 : vector<2x1xf32> to vector<2x16xf32>
    %657 = arith.mulf %656, %645 : vector<2x16xf32>
    %cst_151 = arith.constant 1.000000e+00 : f32
    %658 = vector.broadcast %cst_151 : f32 to vector<2x1xf32>
    %659 = arith.subf %658, %648 : vector<2x1xf32>
    %660 = vector.broadcast %659 : vector<2x1xf32> to vector<2x16xf32>
    %661 = arith.mulf %660, %623 : vector<2x16xf32>
    %662 = arith.addf %657, %661 : vector<2x16xf32>
    %663 = vector.broadcast %648 : vector<2x1xf32> to vector<2x16xf32>
    %664 = arith.mulf %663, %647 : vector<2x16xf32>
    %665 = vector.shape_cast %664 : vector<2x16xf32> to vector<2x1x16xf32>
    %c0_152 = arith.constant 0 : index
    %c4_153 = arith.constant 4 : index
    %c16 = arith.constant 16 : index
    %666 = vector.load %arg16[%c0_152, %c4_153, %c16] : memref<2x5x32xf32, #tpu.memory_space<vmem>>, vector<2x1x16xf32>
    tpu.vector_store %arg16[%c0_152, %c4_153, %c16], %665 {strides = array<i32>} : memref<2x5x32xf32, #tpu.memory_space<vmem>>, vector<2x1x16xf32>,
    %667 = vector.extract_strided_slice %397 {offsets = [0, 64], sizes = [2, 64], strides = [1, 1]} : vector<2x128xf32> to vector<2x64xf32>
    %cst_154 = arith.constant dense<0.000000e+00> : vector<2x64xf32>
    %668 = tpu.matmul %655, %615, %cst_154 {dimension_numbers = #tpu.dot_dimension_numbers<[1], [0], [0], [1], [0, 0, 1, 1], [], []>} : vector<2x16xf32>, vector<16x64xf32>, vector<2x64xf32> -> vector<2x64xf32>
    %669 = arith.addf %667, %668 : vector<2x64xf32>
    %670 = vector.extract_strided_slice %669 {offsets = [0, 0], sizes = [2, 32], strides = [1, 1]} : vector<2x64xf32> to vector<2x32xf32>
    %671 = arith.negf %670 : vector<2x32xf32>
    %672 = math.exp %671 : vector<2x32xf32>
    %cst_155 = arith.constant 1.000000e+00 : f32
    %673 = vector.broadcast %cst_155 : f32 to vector<2x32xf32>
    %674 = arith.addf %673, %672 : vector<2x32xf32>
    %675 = arith.divf %673, %674 : vector<2x32xf32>
    %676 = vector.extract_strided_slice %675 {offsets = [0, 0], sizes = [2, 16], strides = [1, 1]} : vector<2x32xf32> to vector<2x16xf32>
    %677 = vector.extract_strided_slice %675 {offsets = [0, 16], sizes = [2, 16], strides = [1, 1]} : vector<2x32xf32> to vector<2x16xf32>
    %678 = vector.extract_strided_slice %669 {offsets = [0, 32], sizes = [2, 16], strides = [1, 1]} : vector<2x64xf32> to vector<2x16xf32>
    %679 = math.tanh %678 : vector<2x16xf32>
    %680 = vector.extract_strided_slice %669 {offsets = [0, 48], sizes = [2, 16], strides = [1, 1]} : vector<2x64xf32> to vector<2x16xf32>
    %681 = arith.negf %680 : vector<2x16xf32>
    %682 = math.exp %681 : vector<2x16xf32>
    %cst_156 = arith.constant 1.000000e+00 : f32
    %683 = vector.broadcast %cst_156 : f32 to vector<2x16xf32>
    %684 = arith.addf %683, %682 : vector<2x16xf32>
    %685 = arith.divf %683, %684 : vector<2x16xf32>
    %686 = arith.mulf %677, %662 : vector<2x16xf32>
    %687 = arith.mulf %676, %679 : vector<2x16xf32>
    %688 = arith.addf %686, %687 : vector<2x16xf32>
    %689 = math.tanh %688 : vector<2x16xf32>
    %690 = arith.mulf %685, %689 : vector<2x16xf32>
    %691 = vector.extract_strided_slice %375 {offsets = [0, 3], sizes = [2, 1], strides = [1, 1]} : vector<2x5xf32> to vector<2x1xf32>
    %692 = vector.broadcast %691 : vector<2x1xf32> to vector<2x16xf32>
    %693 = arith.mulf %692, %690 : vector<2x16xf32>
    %cst_157 = arith.constant 1.000000e+00 : f32
    %694 = vector.broadcast %cst_157 : f32 to vector<2x1xf32>
    %695 = arith.subf %694, %691 : vector<2x1xf32>
    %696 = vector.broadcast %695 : vector<2x1xf32> to vector<2x16xf32>
    %697 = arith.mulf %696, %655 : vector<2x16xf32>
    %698 = arith.addf %693, %697 : vector<2x16xf32>
    %699 = vector.broadcast %691 : vector<2x1xf32> to vector<2x16xf32>
    %700 = arith.mulf %699, %688 : vector<2x16xf32>
    %cst_158 = arith.constant 1.000000e+00 : f32
    %701 = vector.broadcast %cst_158 : f32 to vector<2x1xf32>
    %702 = arith.subf %701, %691 : vector<2x1xf32>
    %703 = vector.broadcast %702 : vector<2x1xf32> to vector<2x16xf32>
    %704 = arith.mulf %703, %662 : vector<2x16xf32>
    %705 = arith.addf %700, %704 : vector<2x16xf32>
    %706 = vector.broadcast %691 : vector<2x1xf32> to vector<2x16xf32>
    %707 = arith.mulf %706, %690 : vector<2x16xf32>
    %708 = vector.shape_cast %707 : vector<2x16xf32> to vector<2x1x16xf32>
    %c0_159 = arith.constant 0 : index
    %c3_160 = arith.constant 3 : index
    %c16_161 = arith.constant 16 : index
    %709 = vector.load %arg16[%c0_159, %c3_160, %c16_161] : memref<2x5x32xf32, #tpu.memory_space<vmem>>, vector<2x1x16xf32>
    tpu.vector_store %arg16[%c0_159, %c3_160, %c16_161], %708 {strides = array<i32>} : memref<2x5x32xf32, #tpu.memory_space<vmem>>, vector<2x1x16xf32>,
    %710 = vector.extract_strided_slice %392 {offsets = [0, 64], sizes = [2, 64], strides = [1, 1]} : vector<2x128xf32> to vector<2x64xf32>
    %cst_162 = arith.constant dense<0.000000e+00> : vector<2x64xf32>
    %711 = tpu.matmul %698, %615, %cst_162 {dimension_numbers = #tpu.dot_dimension_numbers<[1], [0], [0], [1], [0, 0, 1, 1], [], []>} : vector<2x16xf32>, vector<16x64xf32>, vector<2x64xf32> -> vector<2x64xf32>
    %712 = arith.addf %710, %711 : vector<2x64xf32>
    %713 = vector.extract_strided_slice %712 {offsets = [0, 0], sizes = [2, 32], strides = [1, 1]} : vector<2x64xf32> to vector<2x32xf32>
    %714 = arith.negf %713 : vector<2x32xf32>
    %715 = math.exp %714 : vector<2x32xf32>
    %cst_163 = arith.constant 1.000000e+00 : f32
    %716 = vector.broadcast %cst_163 : f32 to vector<2x32xf32>
    %717 = arith.addf %716, %715 : vector<2x32xf32>
    %718 = arith.divf %716, %717 : vector<2x32xf32>
    %719 = vector.extract_strided_slice %718 {offsets = [0, 0], sizes = [2, 16], strides = [1, 1]} : vector<2x32xf32> to vector<2x16xf32>
    %720 = vector.extract_strided_slice %718 {offsets = [0, 16], sizes = [2, 16], strides = [1, 1]} : vector<2x32xf32> to vector<2x16xf32>
    %721 = vector.extract_strided_slice %712 {offsets = [0, 32], sizes = [2, 16], strides = [1, 1]} : vector<2x64xf32> to vector<2x16xf32>
    %722 = math.tanh %721 : vector<2x16xf32>
    %723 = vector.extract_strided_slice %712 {offsets = [0, 48], sizes = [2, 16], strides = [1, 1]} : vector<2x64xf32> to vector<2x16xf32>
    %724 = arith.negf %723 : vector<2x16xf32>
    %725 = math.exp %724 : vector<2x16xf32>
    %cst_164 = arith.constant 1.000000e+00 : f32
    %726 = vector.broadcast %cst_164 : f32 to vector<2x16xf32>
    %727 = arith.addf %726, %725 : vector<2x16xf32>
    %728 = arith.divf %726, %727 : vector<2x16xf32>
    %729 = arith.mulf %720, %705 : vector<2x16xf32>
    %730 = arith.mulf %719, %722 : vector<2x16xf32>
    %731 = arith.addf %729, %730 : vector<2x16xf32>
    %732 = math.tanh %731 : vector<2x16xf32>
    %733 = arith.mulf %728, %732 : vector<2x16xf32>
    %734 = vector.extract_strided_slice %375 {offsets = [0, 2], sizes = [2, 1], strides = [1, 1]} : vector<2x5xf32> to vector<2x1xf32>
    %735 = vector.broadcast %734 : vector<2x1xf32> to vector<2x16xf32>
    %736 = arith.mulf %735, %733 : vector<2x16xf32>
    %cst_165 = arith.constant 1.000000e+00 : f32
    %737 = vector.broadcast %cst_165 : f32 to vector<2x1xf32>
    %738 = arith.subf %737, %734 : vector<2x1xf32>
    %739 = vector.broadcast %738 : vector<2x1xf32> to vector<2x16xf32>
    %740 = arith.mulf %739, %698 : vector<2x16xf32>
    %741 = arith.addf %736, %740 : vector<2x16xf32>
    %742 = vector.broadcast %734 : vector<2x1xf32> to vector<2x16xf32>
    %743 = arith.mulf %742, %731 : vector<2x16xf32>
    %cst_166 = arith.constant 1.000000e+00 : f32
    %744 = vector.broadcast %cst_166 : f32 to vector<2x1xf32>
    %745 = arith.subf %744, %734 : vector<2x1xf32>
    %746 = vector.broadcast %745 : vector<2x1xf32> to vector<2x16xf32>
    %747 = arith.mulf %746, %705 : vector<2x16xf32>
    %748 = arith.addf %743, %747 : vector<2x16xf32>
    %749 = vector.broadcast %734 : vector<2x1xf32> to vector<2x16xf32>
    %750 = arith.mulf %749, %733 : vector<2x16xf32>
    %751 = vector.shape_cast %750 : vector<2x16xf32> to vector<2x1x16xf32>
    %c0_167 = arith.constant 0 : index
    %c2_168 = arith.constant 2 : index
    %c16_169 = arith.constant 16 : index
    %752 = vector.load %arg16[%c0_167, %c2_168, %c16_169] : memref<2x5x32xf32, #tpu.memory_space<vmem>>, vector<2x1x16xf32>
    tpu.vector_store %arg16[%c0_167, %c2_168, %c16_169], %751 {strides = array<i32>} : memref<2x5x32xf32, #tpu.memory_space<vmem>>, vector<2x1x16xf32>,
    %753 = vector.extract_strided_slice %387 {offsets = [0, 64], sizes = [2, 64], strides = [1, 1]} : vector<2x128xf32> to vector<2x64xf32>
    %cst_170 = arith.constant dense<0.000000e+00> : vector<2x64xf32>
    %754 = tpu.matmul %741, %615, %cst_170 {dimension_numbers = #tpu.dot_dimension_numbers<[1], [0], [0], [1], [0, 0, 1, 1], [], []>} : vector<2x16xf32>, vector<16x64xf32>, vector<2x64xf32> -> vector<2x64xf32>
    %755 = arith.addf %753, %754 : vector<2x64xf32>
    %756 = vector.extract_strided_slice %755 {offsets = [0, 0], sizes = [2, 32], strides = [1, 1]} : vector<2x64xf32> to vector<2x32xf32>
    %757 = arith.negf %756 : vector<2x32xf32>
    %758 = math.exp %757 : vector<2x32xf32>
    %cst_171 = arith.constant 1.000000e+00 : f32
    %759 = vector.broadcast %cst_171 : f32 to vector<2x32xf32>
    %760 = arith.addf %759, %758 : vector<2x32xf32>
    %761 = arith.divf %759, %760 : vector<2x32xf32>
    %762 = vector.extract_strided_slice %761 {offsets = [0, 0], sizes = [2, 16], strides = [1, 1]} : vector<2x32xf32> to vector<2x16xf32>
    %763 = vector.extract_strided_slice %761 {offsets = [0, 16], sizes = [2, 16], strides = [1, 1]} : vector<2x32xf32> to vector<2x16xf32>
    %764 = vector.extract_strided_slice %755 {offsets = [0, 32], sizes = [2, 16], strides = [1, 1]} : vector<2x64xf32> to vector<2x16xf32>
    %765 = math.tanh %764 : vector<2x16xf32>
    %766 = vector.extract_strided_slice %755 {offsets = [0, 48], sizes = [2, 16], strides = [1, 1]} : vector<2x64xf32> to vector<2x16xf32>
    %767 = arith.negf %766 : vector<2x16xf32>
    %768 = math.exp %767 : vector<2x16xf32>
    %cst_172 = arith.constant 1.000000e+00 : f32
    %769 = vector.broadcast %cst_172 : f32 to vector<2x16xf32>
    %770 = arith.addf %769, %768 : vector<2x16xf32>
    %771 = arith.divf %769, %770 : vector<2x16xf32>
    %772 = arith.mulf %763, %748 : vector<2x16xf32>
    %773 = arith.mulf %762, %765 : vector<2x16xf32>
    %774 = arith.addf %772, %773 : vector<2x16xf32>
    %775 = math.tanh %774 : vector<2x16xf32>
    %776 = arith.mulf %771, %775 : vector<2x16xf32>
    %777 = vector.extract_strided_slice %375 {offsets = [0, 1], sizes = [2, 1], strides = [1, 1]} : vector<2x5xf32> to vector<2x1xf32>
    %778 = vector.broadcast %777 : vector<2x1xf32> to vector<2x16xf32>
    %779 = arith.mulf %778, %776 : vector<2x16xf32>
    %cst_173 = arith.constant 1.000000e+00 : f32
    %780 = vector.broadcast %cst_173 : f32 to vector<2x1xf32>
    %781 = arith.subf %780, %777 : vector<2x1xf32>
    %782 = vector.broadcast %781 : vector<2x1xf32> to vector<2x16xf32>
    %783 = arith.mulf %782, %741 : vector<2x16xf32>
    %784 = arith.addf %779, %783 : vector<2x16xf32>
    %785 = vector.broadcast %777 : vector<2x1xf32> to vector<2x16xf32>
    %786 = arith.mulf %785, %774 : vector<2x16xf32>
    %cst_174 = arith.constant 1.000000e+00 : f32
    %787 = vector.broadcast %cst_174 : f32 to vector<2x1xf32>
    %788 = arith.subf %787, %777 : vector<2x1xf32>
    %789 = vector.broadcast %788 : vector<2x1xf32> to vector<2x16xf32>
    %790 = arith.mulf %789, %748 : vector<2x16xf32>
    %791 = arith.addf %786, %790 : vector<2x16xf32>
    %792 = vector.broadcast %777 : vector<2x1xf32> to vector<2x16xf32>
    %793 = arith.mulf %792, %776 : vector<2x16xf32>
    %794 = vector.shape_cast %793 : vector<2x16xf32> to vector<2x1x16xf32>
    %c0_175 = arith.constant 0 : index
    %c1_176 = arith.constant 1 : index
    %c16_177 = arith.constant 16 : index
    %795 = vector.load %arg16[%c0_175, %c1_176, %c16_177] : memref<2x5x32xf32, #tpu.memory_space<vmem>>, vector<2x1x16xf32>
    tpu.vector_store %arg16[%c0_175, %c1_176, %c16_177], %794 {strides = array<i32>} : memref<2x5x32xf32, #tpu.memory_space<vmem>>, vector<2x1x16xf32>,
    %796 = vector.extract_strided_slice %382 {offsets = [0, 64], sizes = [2, 64], strides = [1, 1]} : vector<2x128xf32> to vector<2x64xf32>
    %cst_178 = arith.constant dense<0.000000e+00> : vector<2x64xf32>
    %797 = tpu.matmul %784, %615, %cst_178 {dimension_numbers = #tpu.dot_dimension_numbers<[1], [0], [0], [1], [0, 0, 1, 1], [], []>} : vector<2x16xf32>, vector<16x64xf32>, vector<2x64xf32> -> vector<2x64xf32>
    %798 = arith.addf %796, %797 : vector<2x64xf32>
    %799 = vector.extract_strided_slice %798 {offsets = [0, 0], sizes = [2, 32], strides = [1, 1]} : vector<2x64xf32> to vector<2x32xf32>
    %800 = arith.negf %799 : vector<2x32xf32>
    %801 = math.exp %800 : vector<2x32xf32>
    %cst_179 = arith.constant 1.000000e+00 : f32
    %802 = vector.broadcast %cst_179 : f32 to vector<2x32xf32>
    %803 = arith.addf %802, %801 : vector<2x32xf32>
    %804 = arith.divf %802, %803 : vector<2x32xf32>
    %805 = vector.extract_strided_slice %804 {offsets = [0, 0], sizes = [2, 16], strides = [1, 1]} : vector<2x32xf32> to vector<2x16xf32>
    %806 = vector.extract_strided_slice %804 {offsets = [0, 16], sizes = [2, 16], strides = [1, 1]} : vector<2x32xf32> to vector<2x16xf32>
    %807 = vector.extract_strided_slice %798 {offsets = [0, 32], sizes = [2, 16], strides = [1, 1]} : vector<2x64xf32> to vector<2x16xf32>
    %808 = math.tanh %807 : vector<2x16xf32>
    %809 = vector.extract_strided_slice %798 {offsets = [0, 48], sizes = [2, 16], strides = [1, 1]} : vector<2x64xf32> to vector<2x16xf32>
    %810 = arith.negf %809 : vector<2x16xf32>
    %811 = math.exp %810 : vector<2x16xf32>
    %cst_180 = arith.constant 1.000000e+00 : f32
    %812 = vector.broadcast %cst_180 : f32 to vector<2x16xf32>
    %813 = arith.addf %812, %811 : vector<2x16xf32>
    %814 = arith.divf %812, %813 : vector<2x16xf32>
    %815 = arith.mulf %806, %791 : vector<2x16xf32>
    %816 = arith.mulf %805, %808 : vector<2x16xf32>
    %817 = arith.addf %815, %816 : vector<2x16xf32>
    %818 = math.tanh %817 : vector<2x16xf32>
    %819 = arith.mulf %814, %818 : vector<2x16xf32>
    %820 = vector.extract_strided_slice %375 {offsets = [0, 0], sizes = [2, 1], strides = [1, 1]} : vector<2x5xf32> to vector<2x1xf32>
    %821 = vector.broadcast %820 : vector<2x1xf32> to vector<2x16xf32>
    %822 = arith.mulf %821, %819 : vector<2x16xf32>
    %823 = vector.shape_cast %822 : vector<2x16xf32> to vector<2x1x16xf32>
    %c0_181 = arith.constant 0 : index
    %c0_182 = arith.constant 0 : index
    %c16_183 = arith.constant 16 : index
    %824 = vector.load %arg16[%c0_181, %c0_182, %c16_183] : memref<2x5x32xf32, #tpu.memory_space<vmem>>, vector<2x1x16xf32>
    tpu.vector_store %arg16[%c0_181, %c0_182, %c16_183], %823 {strides = array<i32>} : memref<2x5x32xf32, #tpu.memory_space<vmem>>, vector<2x1x16xf32>,
    %c0_184 = arith.constant 0 : index
    %c0_185 = arith.constant 0 : index
    %c0_186 = arith.constant 0 : index
    %825 = vector.load %arg16[%c0_184, %c0_185, %c0_186] : memref<2x5x32xf32, #tpu.memory_space<vmem>>, vector<2x5x32xf32>
    %c0_187 = arith.constant 0 : index
    %c0_188 = arith.constant 0 : index
    %826 = vector.load %arg9[%c0_187, %c0_188] : memref<2x1xf32, #tpu.memory_space<vmem>>, vector<2x1xf32>
    %cst_189 = arith.constant dense<0.000000e+00> : vector<2x32xf32>
    %827 = vector.multi_reduction <add>, %825, %cst_189 [1] : vector<2x5x32xf32> to vector<2x32xf32>
    %828 = vector.broadcast %826 : vector<2x1xf32> to vector<2x32xf32>
    %829 = arith.mulf %827, %828 : vector<2x32xf32>
    %c0_190 = arith.constant 0 : index
    %c0_191 = arith.constant 0 : index
    %830 = vector.load %arg10[%c0_190, %c0_191] : memref<32x32xf32, #tpu.memory_space<vmem>>, vector<32x32xf32>
    %cst_192 = arith.constant dense<0.000000e+00> : vector<2x32xf32>
    %831 = tpu.matmul %829, %830, %cst_192 {dimension_numbers = #tpu.dot_dimension_numbers<[1], [0], [0], [1], [0, 0, 1, 1], [], []>} : vector<2x32xf32>, vector<32x32xf32>, vector<2x32xf32> -> vector<2x32xf32>
    %c0_193 = arith.constant 0 : index
    %c0_194 = arith.constant 0 : index
    %832 = vector.load %arg11[%c0_193, %c0_194] : memref<1x32xf32, #tpu.memory_space<vmem>>, vector<1x32xf32>
    %833 = vector.broadcast %832 : vector<1x32xf32> to vector<2x32xf32>
    %834 = arith.addf %831, %833 : vector<2x32xf32>
    %835 = math.tanh %834 : vector<2x32xf32>
    %836 = vector.shape_cast %835 : vector<2x32xf32> to vector<2x1x32xf32>
    %837 = vector.broadcast %836 : vector<2x1x32xf32> to vector<2x5x32xf32>
    %838 = arith.mulf %825, %837 : vector<2x5x32xf32>
    %cst_195 = arith.constant dense<0.000000e+00> : vector<2x5xf32>
    %839 = vector.multi_reduction <add>, %838, %cst_195 [2] : vector<2x5x32xf32> to vector<2x5xf32>
    %c0_196 = arith.constant 0 : index
    %c0_197 = arith.constant 0 : index
    %840 = vector.load %arg12[%c0_196, %c0_197] : memref<1x32xf32, #tpu.memory_space<vmem>>, vector<1x32xf32>
    %841 = vector.shape_cast %840 : vector<1x32xf32> to vector<1x1x32xf32>
    %842 = vector.broadcast %841 : vector<1x1x32xf32> to vector<2x5x32xf32>
    %843 = arith.mulf %825, %842 : vector<2x5x32xf32>
    %cst_198 = arith.constant dense<0.000000e+00> : vector<2x5xf32>
    %844 = vector.multi_reduction <add>, %843, %cst_198 [2] : vector<2x5x32xf32> to vector<2x5xf32>
    %845 = arith.addf %844, %839 : vector<2x5xf32>
    %c0_199 = arith.constant 0 : index
    %c0_200 = arith.constant 0 : index
    %846 = vector.load %arg13[%c0_199, %c0_200] : memref<1x1xf32, #tpu.memory_space<vmem>>, vector<1x1xf32>
    %847 = vector.broadcast %846 : vector<1x1xf32> to vector<2x5xf32>
    %848 = arith.addf %845, %847 : vector<2x5xf32>
    %c0_201 = arith.constant 0 : index
    %c0_202 = arith.constant 0 : index
    %849 = vector.load %arg14[%c0_201, %c0_202] : memref<2x5xf32, #tpu.memory_space<vmem>>, vector<2x5xf32>
    tpu.vector_store %arg14[%c0_201, %c0_202], %848 {strides = array<i32>} : memref<2x5xf32, #tpu.memory_space<vmem>>, vector<2x5xf32>,
    return
  }
}

</mosaic_0001>

<llo_original>
// kernel: tpu_custom_call.1
$region0: #{tpu_custom_call.1}
  #allocation0 [shape = 'u32[]', space=smem, size = 0x4, offset = 0x4, fixed_abs, tag = 'smem constant byte address 0x4 - core index']
  #allocation1 [shape = 'u32[144,128]{1,0:T(1,128)}', space=vmem, size = 0x12000, scoped, tag = 'internal scratch']
  #allocation2 [shape = 'f32[2,5,24]{2,1,0:T(8,128)}', space=vmem, size = 0x2000, scoped, tag = 'scratch operand']
  #allocation3 [shape = 'f32[2,5,32]{2,1,0:T(8,128)}', space=vmem, size = 0x2000, scoped, tag = 'scratch operand']
  #allocation4 [shape = 'f32[1,1]{1,0:T(1,128)S(1)}', space=vmem, size = 0x200, scoped, tag = 'scoped memory for tpu_custom_call.1']
  %s0 = inlined_call_operand.vmem [shape: f32[96,16], index: 0, kind: input, shape index: {}]
  %s1 = inlined_call_operand.vmem [shape: f32[16,96], index: 1, kind: input, shape index: {}]
  %s2 = inlined_call_operand.vmem [shape: f32[1,24], index: 2, kind: input, shape index: {}]
  %s3 = inlined_call_operand.vmem [shape: f32[24,128], index: 3, kind: input, shape index: {}]
  %s4 = inlined_call_operand.vmem [shape: f32[1,128], index: 4, kind: input, shape index: {}]
  %s5 = inlined_call_operand.vmem [shape: f32[2,16,64], index: 5, kind: input, shape index: {}]
  %s6 = inlined_call_operand.vmem [shape: f32[2,1,16], index: 6, kind: input, shape index: {}]
  %s7 = inlined_call_operand.vmem [shape: f32[2,1,16], index: 7, kind: input, shape index: {}]
  %s8 = inlined_call_operand.vmem [shape: f32[2,5], index: 8, kind: input, shape index: {}]
  %s9 = inlined_call_operand.vmem [shape: f32[2,1], index: 9, kind: input, shape index: {}]
  %s10 = inlined_call_operand.vmem [shape: f32[32,32], index: 10, kind: input, shape index: {}]
  %s11 = inlined_call_operand.vmem [shape: f32[1,32], index: 11, kind: input, shape index: {}]
  %s12 = inlined_call_operand.vmem [shape: f32[1,32], index: 12, kind: input, shape index: {}]
  %s13 = inlined_call_operand.<no memory space> [shape: f32[1,1], index: 13, kind: input, shape index: {}]
  %s14 = inlined_call_operand.hbm [shape: f32[2,5], index: 14, kind: output, shape index: {}]
  %s15 = sld [smem:[#allocation0]]
  $region66: #{tpu_custom_call.1} parent=0
    _
  %s17 = ssub.s32 1, %s15
  %s18 = scalar_select 0, %s17, %s15
  %v19 = vstv %s13
  %20 = vst [vmem:[#allocation4] sm:$0x1] %v19
  $region1: #{tpu_custom_call.1} parent=0
    #allocation5 [shape = 'u8[1024]{0}', space=vmem, size = 0x400, scoped, tag = 'output window, operand 0, single buffered']
    #allocation6 [shape = 's32[1]{0}', space=sflag, size = 0x4, scoped, tag = 'scoped memory for tpu_custom_call.1']
    %21 = vsyncpa [#allocation6], 0
    // Predicated region
    $region2: #{tpu_custom_call.1} parent=1 // pred_check
      _
    $region3: #{tpu_custom_call.1} parent=1 // pred_check_branch
      %23 = sbr.rel (0) target = $region5
    $region4: #{tpu_custom_call.1} parent=1 // pred_region
      _
    $region5: #{tpu_custom_call.1} parent=1 // pred_fallthru
      _
    // Predicated region
    $region6: #{tpu_custom_call.1} parent=1 // pred_check
      _
    $region7: #{tpu_custom_call.1} parent=1 // pred_check_branch
      %25 = sbr.rel (0) target = $region9
    $region8: #{tpu_custom_call.1} parent=1 // pred_region
      _
    $region9: #{tpu_custom_call.1} parent=1 // pred_fallthru
      _
    // Predicated region
    $region10: #{tpu_custom_call.1} parent=1 // pred_check
      _
    $region11: #{tpu_custom_call.1} parent=1 // pred_check_branch
      %27 = sbr.rel (0) target = $region13
    $region12: #{tpu_custom_call.1} parent=1 // pred_region
      _
    $region13: #{tpu_custom_call.1} parent=1 // pred_fallthru
      _
    // Predicated region
    $region14: #{tpu_custom_call.1} parent=1 // pred_check
      _
    $region15: #{tpu_custom_call.1} parent=1 // pred_check_branch
      %29 = sbr.rel (0) target = $region17
    $region16: #{tpu_custom_call.1} parent=1 // pred_region
      _
    $region17: #{tpu_custom_call.1} parent=1 // pred_fallthru
      _
    // Predicated region
    $region18: #{tpu_custom_call.1} parent=1 // pred_check
      _
    $region19: #{tpu_custom_call.1} parent=1 // pred_check_branch
      %31 = sbr.rel (0) target = $region21
    $region20: #{tpu_custom_call.1} parent=1 // pred_region
      _
    $region21: #{tpu_custom_call.1} parent=1 // pred_fallthru
      _
    // Predicated region
    $region22: #{tpu_custom_call.1} parent=1 // pred_check
      _
    $region23: #{tpu_custom_call.1} parent=1 // pred_check_branch
      %33 = sbr.rel (0) target = $region25
    $region24: #{tpu_custom_call.1} parent=1 // pred_region
      _
    $region25: #{tpu_custom_call.1} parent=1 // pred_fallthru
      _
    // Predicated region
    $region26: #{tpu_custom_call.1} parent=1 // pred_check
      _
    $region27: #{tpu_custom_call.1} parent=1 // pred_check_branch
      %35 = sbr.rel (0) target = $region29
    $region28: #{tpu_custom_call.1} parent=1 // pred_region
      _
    $region29: #{tpu_custom_call.1} parent=1 // pred_fallthru
      _
    // Predicated region
    $region30: #{tpu_custom_call.1} parent=1 // pred_check
      _
    $region31: #{tpu_custom_call.1} parent=1 // pred_check_branch
      %37 = sbr.rel (0) target = $region33
    $region32: #{tpu_custom_call.1} parent=1 // pred_region
      _
    $region33: #{tpu_custom_call.1} parent=1 // pred_fallthru
      _
    // Predicated region
    $region34: #{tpu_custom_call.1} parent=1 // pred_check
      _
    $region35: #{tpu_custom_call.1} parent=1 // pred_check_branch
      %39 = sbr.rel (0) target = $region37
    $region36: #{tpu_custom_call.1} parent=1 // pred_region
      _
    $region37: #{tpu_custom_call.1} parent=1 // pred_fallthru
      _
    // Predicated region
    $region38: #{tpu_custom_call.1} parent=1 // pred_check
      _
    $region39: #{tpu_custom_call.1} parent=1 // pred_check_branch
      %41 = sbr.rel (0) target = $region41
    $region40: #{tpu_custom_call.1} parent=1 // pred_region
      _
    $region41: #{tpu_custom_call.1} parent=1 // pred_fallthru
      _
    // Predicated region
    $region42: #{tpu_custom_call.1} parent=1 // pred_check
      _
    $region43: #{tpu_custom_call.1} parent=1 // pred_check_branch
      %43 = sbr.rel (0) target = $region45
    $region44: #{tpu_custom_call.1} parent=1 // pred_region
      _
    $region45: #{tpu_custom_call.1} parent=1 // pred_fallthru
      _
    // Predicated region
    $region46: #{tpu_custom_call.1} parent=1 // pred_check
      _
    $region47: #{tpu_custom_call.1} parent=1 // pred_check_branch
      %45 = sbr.rel (0) target = $region49
    $region48: #{tpu_custom_call.1} parent=1 // pred_region
      _
    $region49: #{tpu_custom_call.1} parent=1 // pred_fallthru
      _
    // Predicated region
    $region50: #{tpu_custom_call.1} parent=1 // pred_check
      _
    $region51: #{tpu_custom_call.1} parent=1 // pred_check_branch
      %47 = sbr.rel (0) target = $region53
    $region52: #{tpu_custom_call.1} parent=1 // pred_region
      _
    $region53: #{tpu_custom_call.1} parent=1 // pred_fallthru
      _
    // Predicated region
    $region54: #{tpu_custom_call.1} parent=1 // pred_check
      _
    $region55: #{tpu_custom_call.1} parent=1 // pred_check_branch
      %49 = sbr.rel (0) target = $region57
    $region56: #{tpu_custom_call.1} parent=1 // pred_region
      _
    $region57: #{tpu_custom_call.1} parent=1 // pred_fallthru
      _
    %v50 = vld [vmem:[%s0] sm:$0xff]
    %v51 = vld [vmem:[%s0 + $0x8] sm:$0xff]
    %v52 = vld [vmem:[%s0 + $0x10] sm:$0xff]
    %v53 = vld [vmem:[%s0 + $0x18] sm:$0xff]
    %v54 = vld [vmem:[%s0 + $0x20] sm:$0xff]
    %v55 = vld [vmem:[%s0 + $0x28] sm:$0xff]
    %v56 = vld [vmem:[%s0 + $0x30] sm:$0xff]
    %v57 = vld [vmem:[%s0 + $0x38] sm:$0xff]
    %v58 = vld [vmem:[%s0 + $0x40] sm:$0xff]
    %v59 = vld [vmem:[%s0 + $0x48] sm:$0xff]
    %v60 = vld [vmem:[%s0 + $0x50] sm:$0xff]
    %v61 = vld [vmem:[%s0 + $0x58] sm:$0xff]
    %v62 = vld [vmem:[%s1] sm:$0xff]
    %v63 = vld [vmem:[%s1 + $0x8] sm:$0xff]
    %vm64 = vcmask 130048
    %v66 = vsel %vm64, %v50, 0
    %v69 = vsel %vm64, %v51, 0
    %v72 = vsel %vm64, %v52, 0
    %v75 = vsel %vm64, %v53, 0
    %v78 = vsel %vm64, %v54, 0
    %v81 = vsel %vm64, %v55, 0
    %v84 = vsel %vm64, %v56, 0
    %v87 = vsel %vm64, %v57, 0
    %v90 = vsel %vm64, %v58, 0
    %v93 = vsel %vm64, %v59, 0
    %v96 = vsel %vm64, %v60, 0
    %v99 = vsel %vm64, %v61, 0
    %101 = vmatprep.subr.mxu0 0.0
    %102 = vmatpush1.msra.mxu0 %v62
    %103 = vmatprep.subr.mxu0 0.0
    %104 = vmatpush1.msra.mxu0 %v63
    %105 = vmatprep.subr.mxu0 0.0
    %106 = vmatpush1.msra.mxu0 0.0
    %107 = vmatprep.subr.mxu0 0.0
    %108 = vmatpush1.msra.mxu0 0.0
    %109 = vmatprep.subr.mxu0 0.0
    %110 = vmatpush1.msra.mxu0 0.0
    %111 = vmatprep.subr.mxu0 0.0
    %112 = vmatpush1.msra.mxu0 0.0
    %113 = vmatprep.subr.mxu0 0.0
    %114 = vmatpush1.msra.mxu0 0.0
    %115 = vmatprep.subr.mxu0 0.0
    %116 = vmatpush1.msra.mxu0 0.0
    %117 = vmatprep.subr.mxu0 0.0
    %118 = vmatpush1.msra.mxu0 0.0
    %119 = vmatprep.subr.mxu0 0.0
    %120 = vmatpush1.msra.mxu0 0.0
    %121 = vmatprep.subr.mxu0 0.0
    %122 = vmatpush1.msra.mxu0 0.0
    %123 = vmatprep.subr.mxu0 0.0
    %124 = vmatpush1.msra.mxu0 0.0
    %125 = vmatprep.subr.mxu0 0.0
    %126 = vmatpush1.msra.mxu0 0.0
    %127 = vmatprep.subr.mxu0 0.0
    %128 = vmatpush1.msra.mxu0 0.0
    %129 = vmatprep.subr.mxu0 0.0
    %130 = vmatpush1.msra.mxu0 0.0
    %131 = vmatprep.subr.mxu0 0.0
    %132 = vmatpush1.msra.mxu0 0.0
    %133 = vmatprep.subr.mxu0 0.0
    %134 = vmatpush1.msra.mxu0 0.0
    %135 = vmatprep.subr.mxu0 0.0
    %136 = vmatpush1.msra.mxu0 0.0
    %137 = vmatprep.subr.mxu0 0.0
    %138 = vmatpush1.msra.mxu0 0.0
    %139 = vmatprep.subr.mxu0 0.0
    %140 = vmatpush1.msra.mxu0 0.0
    %141 = vmatprep.subr.mxu0 0.0
    %142 = vmatpush1.msra.mxu0 0.0
    %143 = vmatprep.subr.mxu0 0.0
    %144 = vmatpush1.msra.mxu0 0.0
    %145 = vmatprep.subr.mxu0 0.0
    %146 = vmatpush1.msra.mxu0 0.0
    %147 = vmatprep.subr.mxu0 0.0
    %148 = vmatpush1.msra.mxu0 0.0
    %149 = vmatprep.subr.mxu0 0.0
    %150 = vmatpush1.msra.mxu0 0.0
    %151 = vmatprep.subr.mxu0 0.0
    %152 = vmatpush1.msra.mxu0 0.0
    %153 = vmatprep.subr.mxu0 0.0
    %154 = vmatpush1.msra.mxu0 0.0
    %155 = vmatprep.subr.mxu0 0.0
    %156 = vmatpush1.msra.mxu0 0.0
    %157 = vmatprep.subr.mxu0 0.0
    %158 = vmatpush1.msra.mxu0 0.0
    %159 = vmatprep.subr.mxu0 0.0
    %160 = vmatpush1.msra.mxu0 0.0
    %161 = vmatprep.subr.mxu0 0.0
    %162 = vmatpush1.msra.mxu0 0.0
    %163 = vmatprep.subr.mxu0 0.0
    %164 = vmatpush1.msra.mxu0 0.0
    %165 = vmatprep.mubr.f32.mxu0 0.0
    %166 = vmatmul.mubr.f32.gmra.mrb[0].mxu0 %v66
    %v167 = vpop.f32.mrb[0].mxu0
    %v168 = vadd.f32 0.0, %v167
    %v169 = vpop.f32.mrb[0].mxu0
    %170 = vmatprep.mubr.f32.mxu0 0.0
    %171 = vmatmul.mubr.f32.gmra.mrb[0].mxu0 %v69
    %v172 = vpop.f32.mrb[0].mxu0
    %v173 = vadd.f32 0.0, %v172
    %v174 = vpop.f32.mrb[0].mxu0
    %175 = vmatprep.mubr.f32.mxu0 0.0
    %176 = vmatmul.mubr.f32.gmra.mrb[0].mxu0 %v72
    %v177 = vpop.f32.mrb[0].mxu0
    %v178 = vadd.f32 0.0, %v177
    %v179 = vpop.f32.mrb[0].mxu0
    %180 = vmatprep.mubr.f32.mxu0 0.0
    %181 = vmatmul.mubr.f32.gmra.mrb[0].mxu0 %v75
    %v182 = vpop.f32.mrb[0].mxu0
    %v183 = vadd.f32 0.0, %v182
    %v184 = vpop.f32.mrb[0].mxu0
    %185 = vmatprep.mubr.f32.mxu0 0.0
    %186 = vmatmul.mubr.f32.gmra.mrb[0].mxu0 %v78
    %v187 = vpop.f32.mrb[0].mxu0
    %v188 = vadd.f32 0.0, %v187
    %v189 = vpop.f32.mrb[0].mxu0
    %190 = vmatprep.mubr.f32.mxu0 0.0
    %191 = vmatmul.mubr.f32.gmra.mrb[0].mxu0 %v81
    %v192 = vpop.f32.mrb[0].mxu0
    %v193 = vadd.f32 0.0, %v192
    %v194 = vpop.f32.mrb[0].mxu0
    %195 = vmatprep.mubr.f32.mxu0 0.0
    %196 = vmatmul.mubr.f32.gmra.mrb[0].mxu0 %v84
    %v197 = vpop.f32.mrb[0].mxu0
    %v198 = vadd.f32 0.0, %v197
    %v199 = vpop.f32.mrb[0].mxu0
    %200 = vmatprep.mubr.f32.mxu0 0.0
    %201 = vmatmul.mubr.f32.gmra.mrb[0].mxu0 %v87
    %v202 = vpop.f32.mrb[0].mxu0
    %v203 = vadd.f32 0.0, %v202
    %v204 = vpop.f32.mrb[0].mxu0
    %205 = vmatprep.mubr.f32.mxu0 0.0
    %206 = vmatmul.mubr.f32.gmra.mrb[0].mxu0 %v90
    %v207 = vpop.f32.mrb[0].mxu0
    %v208 = vadd.f32 0.0, %v207
    %v209 = vpop.f32.mrb[0].mxu0
    %210 = vmatprep.mubr.f32.mxu0 0.0
    %211 = vmatmul.mubr.f32.gmra.mrb[0].mxu0 %v93
    %v212 = vpop.f32.mrb[0].mxu0
    %v213 = vadd.f32 0.0, %v212
    %v214 = vpop.f32.mrb[0].mxu0
    %215 = vmatprep.mubr.f32.mxu0 0.0
    %216 = vmatmul.mubr.f32.gmra.mrb[0].mxu0 %v96
    %v217 = vpop.f32.mrb[0].mxu0
    %v218 = vadd.f32 0.0, %v217
    %v219 = vpop.f32.mrb[0].mxu0
    %220 = vmatprep.mubr.f32.mxu0 0.0
    %221 = vmatmul.mubr.f32.gmra.mrb[0].mxu0 %v99
    %v222 = vpop.f32.mrb[0].mxu0
    %v223 = vadd.f32 0.0, %v222
    %v224 = vpop.f32.mrb[0].mxu0
    %225 = vdwg.mxu0
    %v226 = vld [vmem:[%s2] sm:$0x1]
    %vm227 = vcmask 192512
    %228 = vst.msk [vmem:[#allocation2] sm:$0x1f] %vm227, 0.0
    %229 = vst.msk [vmem:[#allocation2 + $0x8] sm:$0x1f] %vm227, 0.0
    %vm232 = vcmask 1046528
    %v233 = vrot.slane %v168, 1
    %v234 = vrot.slane %v173, 1
    %v235 = vsel %vm232, %v233, %v234
    %236 = vrot.lane.b32.xlu0 %v235, 120
    %v237 = vpop.permute.xlu0 %236
    %238 = vrot.lane.b32.xlu0 %v234, 120
    %v239 = vpop.permute.xlu0 %238
    %v242 = vadd.f32 %v168, %v237
    %v243 = vadd.f32 %v173, %v239
    %vm244 = vcmask 1045504
    %v245 = vrot.slane %v168, 2
    %v246 = vrot.slane %v173, 2
    %v247 = vsel %vm244, %v245, %v246
    %248 = vrot.lane.b32.xlu0 %v247, 112
    %v249 = vpop.permute.xlu0 %248
    %250 = vrot.lane.b32.xlu0 %v246, 112
    %v251 = vpop.permute.xlu0 %250
    %v254 = vadd.f32 %v242, %v249
    %v255 = vadd.f32 %v243, %v251
    %v257 = vlaneseq
    %v258 = vshrl.u32 %v257, 7
    %v259 = vsub.s32 0, %v258
    %v260 = vrot.slane %v226, %v259
    %v262 = vadd.f32 %v254, %v260
    %v263 = vadd.f32 %v255, %v260
    %v264 = vmax.f32 %v262, 0.0
    %v265 = vmax.f32 %v263, 0.0
    %vm266 = vcmask 64512
    %v267 = vsel %vm266, %v264, -inf
    %vm268 = vcmask 58368
    %v269 = vsel %vm268, %v265, -inf
    %v270 = vmax.f32 %v267, %v269
    %v271 = vrot.slane %v270, 4
    %v272 = vmax.f32 %v270, %v271
    %v273 = vrot.slane %v272, 2
    %v274 = vmax.f32 %v272, %v273
    %v275 = vrot.slane %v274, 1
    %v276 = vmax.f32 %v274, %v275
    %vm277 = vcmask 1044480
    %v278 = vrot.slane %v168, 3
    %v279 = vrot.slane %v173, 3
    %v280 = vsel %vm277, %v278, %v279
    %281 = vrot.lane.b32.xlu0 %v280, 104
    %v282 = vpop.permute.xlu0 %281
    %283 = vrot.lane.b32.xlu0 %v279, 104
    %v284 = vpop.permute.xlu0 %283
    %v287 = vadd.f32 %v254, %v282
    %v288 = vadd.f32 %v255, %v284
    %289 = vrot.lane.b32.xlu0 %v260, 16
    %v290 = vpop.permute.xlu0 %289
    %v292 = vadd.f32 %v287, %v290
    %v293 = vadd.f32 %v288, %v290
    %v294 = vmax.f32 %v292, 0.0
    %v295 = vmax.f32 %v293, 0.0
    %vm296 = vcmask 261312
    %v297 = vsel %vm296, %v294, -inf
    %vm298 = vcmask 254144
    %v299 = vsel %vm298, %v295, -inf
    %v300 = vmax.f32 %v297, %v299
    %v301 = vrot.slane %v300, 4
    %v302 = vmax.f32 %v300, %v301
    %v303 = vrot.slane %v302, 2
    %v304 = vmax.f32 %v302, %v303
    %v305 = vrot.slane %v304, 1
    %v306 = vmax.f32 %v304, %v305
    %vm307 = vcmask 1043456
    %v308 = vrot.slane %v168, 4
    %v309 = vrot.slane %v173, 4
    %v310 = vsel %vm307, %v308, %v309
    %311 = vrot.lane.b32.xlu0 %v310, 96
    %v312 = vpop.permute.xlu0 %311
    %v314 = vadd.f32 %v287, %v312
    %315 = vrot.lane.b32.xlu0 %v260, 40
    %v316 = vpop.permute.xlu0 %315
    %v318 = vadd.f32 %v314, %v316
    %v319 = vmax.f32 %v318, 0.0
    %vm320 = vcmask 523712
    %v321 = vsel %vm320, %v319, -inf
    %v322 = vrot.slane %v321, 4
    %v323 = vmax.f32 %v321, %v322
    %v324 = vrot.slane %v323, 2
    %v325 = vmax.f32 %v323, %v324
    %v326 = vrot.slane %v325, 1
    %v327 = vmax.f32 %v325, %v326
    %329 = vrot.lane.b32.xlu0 %v306, 112
    %v330 = vpop.permute.xlu0 %329
    %333 = vrot.lane.b32.xlu0 %v327, 88
    %v334 = vpop.permute.xlu0 %333
    %v336 = vsel %vm266, %v276, %v330
    %v337 = vsel %vm64, %v336, %v334
    %vm338 = vcmask 188416
    %339 = vst.msk [vmem:[#allocation2] sm:$0x1] %vm338, %v337
    %v341 = vrot.slane %v178, 1
    %v342 = vsel %vm232, %v234, %v341
    %343 = vrot.lane.b32.xlu0 %v342, 120
    %v344 = vpop.permute.xlu0 %343
    %345 = vrot.lane.b32.xlu0 %v341, 120
    %v346 = vpop.permute.xlu0 %345
    %v349 = vadd.f32 %v173, %v344
    %v350 = vadd.f32 %v178, %v346
    %v351 = vrot.slane %v178, 2
    %v352 = vsel %vm244, %v246, %v351
    %353 = vrot.lane.b32.xlu0 %v352, 112
    %v354 = vpop.permute.xlu0 %353
    %355 = vrot.lane.b32.xlu0 %v351, 112
    %v356 = vpop.permute.xlu0 %355
    %v359 = vadd.f32 %v349, %v354
    %v360 = vadd.f32 %v350, %v356
    %v361 = vadd.f32 %v359, %v260
    %v362 = vadd.f32 %v360, %v260
    %v363 = vmax.f32 %v361, 0.0
    %v364 = vmax.f32 %v362, 0.0
    %vm365 = vcmask 64516
    %v366 = vsel %vm365, %v363, -inf
    %vm367 = vcmask 62464
    %v368 = vsel %vm367, %v364, -inf
    %v369 = vmax.f32 %v366, %v368
    %v370 = vrot.slane %v369, 4
    %v371 = vmax.f32 %v369, %v370
    %v372 = vrot.slane %v371, 2
    %v373 = vmax.f32 %v371, %v372
    %v374 = vrot.slane %v373, 1
    %v375 = vmax.f32 %v373, %v374
    %v376 = vrot.slane %v178, 3
    %v377 = vsel %vm277, %v279, %v376
    %378 = vrot.lane.b32.xlu0 %v377, 104
    %v379 = vpop.permute.xlu0 %378
    %380 = vrot.lane.b32.xlu0 %v376, 104
    %v381 = vpop.permute.xlu0 %380
    %v384 = vadd.f32 %v359, %v379
    %v385 = vadd.f32 %v360, %v381
    %v386 = vadd.f32 %v384, %v290
    %v387 = vadd.f32 %v385, %v290
    %v388 = vmax.f32 %v386, 0.0
    %v389 = vmax.f32 %v387, 0.0
    %vm390 = vcmask 261316
    %v391 = vsel %vm390, %v388, -inf
    %vm392 = vcmask 258240
    %v393 = vsel %vm392, %v389, -inf
    %v394 = vmax.f32 %v391, %v393
    %v395 = vrot.slane %v394, 4
    %v396 = vmax.f32 %v394, %v395
    %v397 = vrot.slane %v396, 2
    %v398 = vmax.f32 %v396, %v397
    %v399 = vrot.slane %v398, 1
    %v400 = vmax.f32 %v398, %v399
    %v401 = vrot.slane %v178, 4
    %402 = vrot.lane.b32.xlu0 %v401, 96
    %v403 = vpop.permute.xlu0 %402
    %v405 = vadd.f32 %v384, %v403
    %v406 = vadd.f32 %v385, %v403
    %v407 = vadd.f32 %v405, %v316
    %v408 = vadd.f32 %v406, %v316
    %v409 = vmax.f32 %v407, 0.0
    %v410 = vmax.f32 %v408, 0.0
    %vm411 = vcmask 523716
    %v412 = vsel %vm411, %v409, -inf
    %vm413 = vcmask 519616
    %v414 = vsel %vm413, %v410, -inf
    %v415 = vmax.f32 %v412, %v414
    %v416 = vrot.slane %v415, 4
    %v417 = vmax.f32 %v415, %v416
    %v418 = vrot.slane %v417, 2
    %v419 = vmax.f32 %v417, %v418
    %v420 = vrot.slane %v419, 1
    %v421 = vmax.f32 %v419, %v420
    %423 = vrot.lane.b32.xlu0 %v400, 112
    %v424 = vpop.permute.xlu0 %423
    %427 = vrot.lane.b32.xlu0 %v421, 88
    %v428 = vpop.permute.xlu0 %427
    %v430 = vsel %vm266, %v375, %v424
    %v431 = vsel %vm64, %v430, %v428
    %432 = vst.msk [vmem:[#allocation2 + $0x1] sm:$0x1] %vm338, %v431
    %v435 = vrot.slane %v183, 1
    %v436 = vrot.slane %v188, 1
    %v437 = vsel %vm232, %v435, %v436
    %438 = vrot.lane.b32.xlu0 %v437, 120
    %v439 = vpop.permute.xlu0 %438
    %440 = vrot.lane.b32.xlu0 %v436, 120
    %v441 = vpop.permute.xlu0 %440
    %v444 = vadd.f32 %v183, %v439
    %v445 = vadd.f32 %v188, %v441
    %v446 = vrot.slane %v183, 2
    %v447 = vrot.slane %v188, 2
    %v448 = vsel %vm244, %v446, %v447
    %449 = vrot.lane.b32.xlu0 %v448, 112
    %v450 = vpop.permute.xlu0 %449
    %451 = vrot.lane.b32.xlu0 %v447, 112
    %v452 = vpop.permute.xlu0 %451
    %v455 = vadd.f32 %v444, %v450
    %v456 = vadd.f32 %v445, %v452
    %v457 = vadd.f32 %v455, %v260
    %v458 = vadd.f32 %v456, %v260
    %v459 = vmax.f32 %v457, 0.0
    %v460 = vmax.f32 %v458, 0.0
    %v461 = vsel %vm266, %v459, -inf
    %v462 = vsel %vm268, %v460, -inf
    %v463 = vmax.f32 %v461, %v462
    %v464 = vrot.slane %v463, 4
    %v465 = vmax.f32 %v463, %v464
    %v466 = vrot.slane %v465, 2
    %v467 = vmax.f32 %v465, %v466
    %v468 = vrot.slane %v467, 1
    %v469 = vmax.f32 %v467, %v468
    %v470 = vrot.slane %v183, 3
    %v471 = vrot.slane %v188, 3
    %v472 = vsel %vm277, %v470, %v471
    %473 = vrot.lane.b32.xlu0 %v472, 104
    %v474 = vpop.permute.xlu0 %473
    %475 = vrot.lane.b32.xlu0 %v471, 104
    %v476 = vpop.permute.xlu0 %475
    %v479 = vadd.f32 %v455, %v474
    %v480 = vadd.f32 %v456, %v476
    %v481 = vadd.f32 %v479, %v290
    %v482 = vadd.f32 %v480, %v290
    %v483 = vmax.f32 %v481, 0.0
    %v484 = vmax.f32 %v482, 0.0
    %v485 = vsel %vm296, %v483, -inf
    %v486 = vsel %vm298, %v484, -inf
    %v487 = vmax.f32 %v485, %v486
    %v488 = vrot.slane %v487, 4
    %v489 = vmax.f32 %v487, %v488
    %v490 = vrot.slane %v489, 2
    %v491 = vmax.f32 %v489, %v490
    %v492 = vrot.slane %v491, 1
    %v493 = vmax.f32 %v491, %v492
    %v494 = vrot.slane %v183, 4
    %v495 = vrot.slane %v188, 4
    %v496 = vsel %vm307, %v494, %v495
    %497 = vrot.lane.b32.xlu0 %v496, 96
    %v498 = vpop.permute.xlu0 %497
    %v500 = vadd.f32 %v479, %v498
    %v501 = vadd.f32 %v500, %v316
    %v502 = vmax.f32 %v501, 0.0
    %v503 = vsel %vm320, %v502, -inf
    %v504 = vrot.slane %v503, 4
    %v505 = vmax.f32 %v503, %v504
    %v506 = vrot.slane %v505, 2
    %v507 = vmax.f32 %v505, %v506
    %v508 = vrot.slane %v507, 1
    %v509 = vmax.f32 %v507, %v508
    %511 = vrot.lane.b32.xlu0 %v493, 112
    %v512 = vpop.permute.xlu0 %511
    %515 = vrot.lane.b32.xlu0 %v509, 88
    %v516 = vpop.permute.xlu0 %515
    %v518 = vsel %vm266, %v469, %v512
    %v519 = vsel %vm64, %v518, %v516
    %520 = vst.msk [vmem:[#allocation2 + $0x2] sm:$0x1] %vm338, %v519
    %v522 = vrot.slane %v193, 1
    %v523 = vsel %vm232, %v436, %v522
    %524 = vrot.lane.b32.xlu0 %v523, 120
    %v525 = vpop.permute.xlu0 %524
    %526 = vrot.lane.b32.xlu0 %v522, 120
    %v527 = vpop.permute.xlu0 %526
    %v530 = vadd.f32 %v188, %v525
    %v531 = vadd.f32 %v193, %v527
    %v532 = vrot.slane %v193, 2
    %v533 = vsel %vm244, %v447, %v532
    %534 = vrot.lane.b32.xlu0 %v533, 112
    %v535 = vpop.permute.xlu0 %534
    %536 = vrot.lane.b32.xlu0 %v532, 112
    %v537 = vpop.permute.xlu0 %536
    %v540 = vadd.f32 %v530, %v535
    %v541 = vadd.f32 %v531, %v537
    %v542 = vadd.f32 %v540, %v260
    %v543 = vadd.f32 %v541, %v260
    %v544 = vmax.f32 %v542, 0.0
    %v545 = vmax.f32 %v543, 0.0
    %v546 = vsel %vm365, %v544, -inf
    %v547 = vsel %vm367, %v545, -inf
    %v548 = vmax.f32 %v546, %v547
    %v549 = vrot.slane %v548, 4
    %v550 = vmax.f32 %v548, %v549
    %v551 = vrot.slane %v550, 2
    %v552 = vmax.f32 %v550, %v551
    %v553 = vrot.slane %v552, 1
    %v554 = vmax.f32 %v552, %v553
    %v555 = vrot.slane %v193, 3
    %v556 = vsel %vm277, %v471, %v555
    %557 = vrot.lane.b32.xlu0 %v556, 104
    %v558 = vpop.permute.xlu0 %557
    %559 = vrot.lane.b32.xlu0 %v555, 104
    %v560 = vpop.permute.xlu0 %559
    %v563 = vadd.f32 %v540, %v558
    %v564 = vadd.f32 %v541, %v560
    %v565 = vadd.f32 %v563, %v290
    %v566 = vadd.f32 %v564, %v290
    %v567 = vmax.f32 %v565, 0.0
    %v568 = vmax.f32 %v566, 0.0
    %v569 = vsel %vm390, %v567, -inf
    %v570 = vsel %vm392, %v568, -inf
    %v571 = vmax.f32 %v569, %v570
    %v572 = vrot.slane %v571, 4
    %v573 = vmax.f32 %v571, %v572
    %v574 = vrot.slane %v573, 2
    %v575 = vmax.f32 %v573, %v574
    %v576 = vrot.slane %v575, 1
    %v577 = vmax.f32 %v575, %v576
    %v578 = vrot.slane %v193, 4
    %579 = vrot.lane.b32.xlu0 %v578, 96
    %v580 = vpop.permute.xlu0 %579
    %v582 = vadd.f32 %v563, %v580
    %v583 = vadd.f32 %v564, %v580
    %v584 = vadd.f32 %v582, %v316
    %v585 = vadd.f32 %v583, %v316
    %v586 = vmax.f32 %v584, 0.0
    %v587 = vmax.f32 %v585, 0.0
    %v588 = vsel %vm411, %v586, -inf
    %v589 = vsel %vm413, %v587, -inf
    %v590 = vmax.f32 %v588, %v589
    %v591 = vrot.slane %v590, 4
    %v592 = vmax.f32 %v590, %v591
    %v593 = vrot.slane %v592, 2
    %v594 = vmax.f32 %v592, %v593
    %v595 = vrot.slane %v594, 1
    %v596 = vmax.f32 %v594, %v595
    %598 = vrot.lane.b32.xlu0 %v577, 112
    %v599 = vpop.permute.xlu0 %598
    %602 = vrot.lane.b32.xlu0 %v596, 88
    %v603 = vpop.permute.xlu0 %602
    %v605 = vsel %vm266, %v554, %v599
    %v606 = vsel %vm64, %v605, %v603
    %607 = vst.msk [vmem:[#allocation2 + $0x3] sm:$0x1] %vm338, %v606
    %v610 = vrot.slane %v198, 1
    %v611 = vrot.slane %v203, 1
    %v612 = vsel %vm232, %v610, %v611
    %613 = vrot.lane.b32.xlu0 %v612, 120
    %v614 = vpop.permute.xlu0 %613
    %615 = vrot.lane.b32.xlu0 %v611, 120
    %v616 = vpop.permute.xlu0 %615
    %v619 = vadd.f32 %v198, %v614
    %v620 = vadd.f32 %v203, %v616
    %v621 = vrot.slane %v198, 2
    %v622 = vrot.slane %v203, 2
    %v623 = vsel %vm244, %v621, %v622
    %624 = vrot.lane.b32.xlu0 %v623, 112
    %v625 = vpop.permute.xlu0 %624
    %626 = vrot.lane.b32.xlu0 %v622, 112
    %v627 = vpop.permute.xlu0 %626
    %v630 = vadd.f32 %v619, %v625
    %v631 = vadd.f32 %v620, %v627
    %v632 = vadd.f32 %v630, %v260
    %v633 = vadd.f32 %v631, %v260
    %v634 = vmax.f32 %v632, 0.0
    %v635 = vmax.f32 %v633, 0.0
    %v636 = vsel %vm266, %v634, -inf
    %v637 = vsel %vm268, %v635, -inf
    %v638 = vmax.f32 %v636, %v637
    %v639 = vrot.slane %v638, 4
    %v640 = vmax.f32 %v638, %v639
    %v641 = vrot.slane %v640, 2
    %v642 = vmax.f32 %v640, %v641
    %v643 = vrot.slane %v642, 1
    %v644 = vmax.f32 %v642, %v643
    %v645 = vrot.slane %v198, 3
    %v646 = vrot.slane %v203, 3
    %v647 = vsel %vm277, %v645, %v646
    %648 = vrot.lane.b32.xlu0 %v647, 104
    %v649 = vpop.permute.xlu0 %648
    %650 = vrot.lane.b32.xlu0 %v646, 104
    %v651 = vpop.permute.xlu0 %650
    %v654 = vadd.f32 %v630, %v649
    %v655 = vadd.f32 %v631, %v651
    %v656 = vadd.f32 %v654, %v290
    %v657 = vadd.f32 %v655, %v290
    %v658 = vmax.f32 %v656, 0.0
    %v659 = vmax.f32 %v657, 0.0
    %v660 = vsel %vm296, %v658, -inf
    %v661 = vsel %vm298, %v659, -inf
    %v662 = vmax.f32 %v660, %v661
    %v663 = vrot.slane %v662, 4
    %v664 = vmax.f32 %v662, %v663
    %v665 = vrot.slane %v664, 2
    %v666 = vmax.f32 %v664, %v665
    %v667 = vrot.slane %v666, 1
    %v668 = vmax.f32 %v666, %v667
    %v669 = vrot.slane %v198, 4
    %v670 = vrot.slane %v203, 4
    %v671 = vsel %vm307, %v669, %v670
    %672 = vrot.lane.b32.xlu0 %v671, 96
    %v673 = vpop.permute.xlu0 %672
    %v675 = vadd.f32 %v654, %v673
    %v676 = vadd.f32 %v675, %v316
    %v677 = vmax.f32 %v676, 0.0
    %v678 = vsel %vm320, %v677, -inf
    %v679 = vrot.slane %v678, 4
    %v680 = vmax.f32 %v678, %v679
    %v681 = vrot.slane %v680, 2
    %v682 = vmax.f32 %v680, %v681
    %v683 = vrot.slane %v682, 1
    %v684 = vmax.f32 %v682, %v683
    %686 = vrot.lane.b32.xlu0 %v668, 112
    %v687 = vpop.permute.xlu0 %686
    %690 = vrot.lane.b32.xlu0 %v684, 88
    %v691 = vpop.permute.xlu0 %690
    %v693 = vsel %vm266, %v644, %v687
    %v694 = vsel %vm64, %v693, %v691
    %695 = vst.msk [vmem:[#allocation2 + $0x4] sm:$0x1] %vm338, %v694
    %v697 = vrot.slane %v208, 1
    %v698 = vsel %vm232, %v611, %v697
    %699 = vrot.lane.b32.xlu0 %v698, 120
    %v700 = vpop.permute.xlu0 %699
    %701 = vrot.lane.b32.xlu0 %v697, 120
    %v702 = vpop.permute.xlu0 %701
    %v705 = vadd.f32 %v203, %v700
    %v706 = vadd.f32 %v208, %v702
    %v707 = vrot.slane %v208, 2
    %v708 = vsel %vm244, %v622, %v707
    %709 = vrot.lane.b32.xlu0 %v708, 112
    %v710 = vpop.permute.xlu0 %709
    %711 = vrot.lane.b32.xlu0 %v707, 112
    %v712 = vpop.permute.xlu0 %711
    %v715 = vadd.f32 %v705, %v710
    %v716 = vadd.f32 %v706, %v712
    %v717 = vadd.f32 %v715, %v260
    %v718 = vadd.f32 %v716, %v260
    %v719 = vmax.f32 %v717, 0.0
    %v720 = vmax.f32 %v718, 0.0
    %v721 = vsel %vm365, %v719, -inf
    %v722 = vsel %vm367, %v720, -inf
    %v723 = vmax.f32 %v721, %v722
    %v724 = vrot.slane %v723, 4
    %v725 = vmax.f32 %v723, %v724
    %v726 = vrot.slane %v725, 2
    %v727 = vmax.f32 %v725, %v726
    %v728 = vrot.slane %v727, 1
    %v729 = vmax.f32 %v727, %v728
    %v730 = vrot.slane %v208, 3
    %v731 = vsel %vm277, %v646, %v730
    %732 = vrot.lane.b32.xlu0 %v731, 104
    %v733 = vpop.permute.xlu0 %732
    %734 = vrot.lane.b32.xlu0 %v730, 104
    %v735 = vpop.permute.xlu0 %734
    %v738 = vadd.f32 %v715, %v733
    %v739 = vadd.f32 %v716, %v735
    %v740 = vadd.f32 %v738, %v290
    %v741 = vadd.f32 %v739, %v290
    %v742 = vmax.f32 %v740, 0.0
    %v743 = vmax.f32 %v741, 0.0
    %v744 = vsel %vm390, %v742, -inf
    %v745 = vsel %vm392, %v743, -inf
    %v746 = vmax.f32 %v744, %v745
    %v747 = vrot.slane %v746, 4
    %v748 = vmax.f32 %v746, %v747
    %v749 = vrot.slane %v748, 2
    %v750 = vmax.f32 %v748, %v749
    %v751 = vrot.slane %v750, 1
    %v752 = vmax.f32 %v750, %v751
    %v753 = vrot.slane %v208, 4
    %754 = vrot.lane.b32.xlu0 %v753, 96
    %v755 = vpop.permute.xlu0 %754
    %v757 = vadd.f32 %v738, %v755
    %v758 = vadd.f32 %v739, %v755
    %v759 = vadd.f32 %v757, %v316
    %v760 = vadd.f32 %v758, %v316
    %v761 = vmax.f32 %v759, 0.0
    %v762 = vmax.f32 %v760, 0.0
    %v763 = vsel %vm411, %v761, -inf
    %v764 = vsel %vm413, %v762, -inf
    %v765 = vmax.f32 %v763, %v764
    %v766 = vrot.slane %v765, 4
    %v767 = vmax.f32 %v765, %v766
    %v768 = vrot.slane %v767, 2
    %v769 = vmax.f32 %v767, %v768
    %v770 = vrot.slane %v769, 1
    %v771 = vmax.f32 %v769, %v770
    %773 = vrot.lane.b32.xlu0 %v752, 112
    %v774 = vpop.permute.xlu0 %773
    %777 = vrot.lane.b32.xlu0 %v771, 88
    %v778 = vpop.permute.xlu0 %777
    %v780 = vsel %vm266, %v729, %v774
    %v781 = vsel %vm64, %v780, %v778
    %s782 = scalar_lea.vmem [#allocation2], 8
    %783 = vst.msk [vmem:[%s782] sm:$0x1] %vm338, %v781
    %v786 = vrot.slane %v213, 1
    %v787 = vrot.slane %v218, 1
    %v788 = vsel %vm232, %v786, %v787
    %789 = vrot.lane.b32.xlu0 %v788, 120
    %v790 = vpop.permute.xlu0 %789
    %791 = vrot.lane.b32.xlu0 %v787, 120
    %v792 = vpop.permute.xlu0 %791
    %v795 = vadd.f32 %v213, %v790
    %v796 = vadd.f32 %v218, %v792
    %v797 = vrot.slane %v213, 2
    %v798 = vrot.slane %v218, 2
    %v799 = vsel %vm244, %v797, %v798
    %800 = vrot.lane.b32.xlu0 %v799, 112
    %v801 = vpop.permute.xlu0 %800
    %802 = vrot.lane.b32.xlu0 %v798, 112
    %v803 = vpop.permute.xlu0 %802
    %v806 = vadd.f32 %v795, %v801
    %v807 = vadd.f32 %v796, %v803
    %v808 = vadd.f32 %v806, %v260
    %v809 = vadd.f32 %v807, %v260
    %v810 = vmax.f32 %v808, 0.0
    %v811 = vmax.f32 %v809, 0.0
    %v812 = vsel %vm266, %v810, -inf
    %v813 = vsel %vm268, %v811, -inf
    %v814 = vmax.f32 %v812, %v813
    %v815 = vrot.slane %v814, 4
    %v816 = vmax.f32 %v814, %v815
    %v817 = vrot.slane %v816, 2
    %v818 = vmax.f32 %v816, %v817
    %v819 = vrot.slane %v818, 1
    %v820 = vmax.f32 %v818, %v819
    %v821 = vrot.slane %v213, 3
    %v822 = vrot.slane %v218, 3
    %v823 = vsel %vm277, %v821, %v822
    %824 = vrot.lane.b32.xlu0 %v823, 104
    %v825 = vpop.permute.xlu0 %824
    %826 = vrot.lane.b32.xlu0 %v822, 104
    %v827 = vpop.permute.xlu0 %826
    %v830 = vadd.f32 %v806, %v825
    %v831 = vadd.f32 %v807, %v827
    %v832 = vadd.f32 %v830, %v290
    %v833 = vadd.f32 %v831, %v290
    %v834 = vmax.f32 %v832, 0.0
    %v835 = vmax.f32 %v833, 0.0
    %v836 = vsel %vm296, %v834, -inf
    %v837 = vsel %vm298, %v835, -inf
    %v838 = vmax.f32 %v836, %v837
    %v839 = vrot.slane %v838, 4
    %v840 = vmax.f32 %v838, %v839
    %v841 = vrot.slane %v840, 2
    %v842 = vmax.f32 %v840, %v841
    %v843 = vrot.slane %v842, 1
    %v844 = vmax.f32 %v842, %v843
    %v845 = vrot.slane %v213, 4
    %v846 = vrot.slane %v218, 4
    %v847 = vsel %vm307, %v845, %v846
    %848 = vrot.lane.b32.xlu0 %v847, 96
    %v849 = vpop.permute.xlu0 %848
    %v851 = vadd.f32 %v830, %v849
    %v852 = vadd.f32 %v851, %v316
    %v853 = vmax.f32 %v852, 0.0
    %v854 = vsel %vm320, %v853, -inf
    %v855 = vrot.slane %v854, 4
    %v856 = vmax.f32 %v854, %v855
    %v857 = vrot.slane %v856, 2
    %v858 = vmax.f32 %v856, %v857
    %v859 = vrot.slane %v858, 1
    %v860 = vmax.f32 %v858, %v859
    %862 = vrot.lane.b32.xlu0 %v844, 112
    %v863 = vpop.permute.xlu0 %862
    %866 = vrot.lane.b32.xlu0 %v860, 88
    %v867 = vpop.permute.xlu0 %866
    %v869 = vsel %vm266, %v820, %v863
    %v870 = vsel %vm64, %v869, %v867
    %871 = vst.msk [vmem:[%s782 + $0x1] sm:$0x1] %vm338, %v870
    %v873 = vrot.slane %v223, 1
    %v874 = vsel %vm232, %v787, %v873
    %875 = vrot.lane.b32.xlu0 %v874, 120
    %v876 = vpop.permute.xlu0 %875
    %877 = vrot.lane.b32.xlu0 %v873, 120
    %v878 = vpop.permute.xlu0 %877
    %v881 = vadd.f32 %v218, %v876
    %v882 = vadd.f32 %v223, %v878
    %v883 = vrot.slane %v223, 2
    %v884 = vsel %vm244, %v798, %v883
    %885 = vrot.lane.b32.xlu0 %v884, 112
    %v886 = vpop.permute.xlu0 %885
    %887 = vrot.lane.b32.xlu0 %v883, 112
    %v888 = vpop.permute.xlu0 %887
    %v891 = vadd.f32 %v881, %v886
    %v892 = vadd.f32 %v882, %v888
    %v893 = vadd.f32 %v891, %v260
    %v894 = vadd.f32 %v892, %v260
    %v895 = vmax.f32 %v893, 0.0
    %v896 = vmax.f32 %v894, 0.0
    %v897 = vsel %vm365, %v895, -inf
    %v898 = vsel %vm367, %v896, -inf
    %v899 = vmax.f32 %v897, %v898
    %v900 = vrot.slane %v899, 4
    %v901 = vmax.f32 %v899, %v900
    %v902 = vrot.slane %v901, 2
    %v903 = vmax.f32 %v901, %v902
    %v904 = vrot.slane %v903, 1
    %v905 = vmax.f32 %v903, %v904
    %v906 = vrot.slane %v223, 3
    %v907 = vsel %vm277, %v822, %v906
    %908 = vrot.lane.b32.xlu0 %v907, 104
    %v909 = vpop.permute.xlu0 %908
    %910 = vrot.lane.b32.xlu0 %v906, 104
    %v911 = vpop.permute.xlu0 %910
    %v914 = vadd.f32 %v891, %v909
    %v915 = vadd.f32 %v892, %v911
    %v916 = vadd.f32 %v914, %v290
    %v917 = vadd.f32 %v915, %v290
    %v918 = vmax.f32 %v916, 0.0
    %v919 = vmax.f32 %v917, 0.0
    %v920 = vsel %vm390, %v918, -inf
    %v921 = vsel %vm392, %v919, -inf
    %v922 = vmax.f32 %v920, %v921
    %v923 = vrot.slane %v922, 4
    %v924 = vmax.f32 %v922, %v923
    %v925 = vrot.slane %v924, 2
    %v926 = vmax.f32 %v924, %v925
    %v927 = vrot.slane %v926, 1
    %v928 = vmax.f32 %v926, %v927
    %v929 = vrot.slane %v223, 4
    %930 = vrot.lane.b32.xlu0 %v929, 96
    %v931 = vpop.permute.xlu0 %930
    %v933 = vadd.f32 %v914, %v931
    %v934 = vadd.f32 %v915, %v931
    %v935 = vadd.f32 %v933, %v316
    %v936 = vadd.f32 %v934, %v316
    %v937 = vmax.f32 %v935, 0.0
    %v938 = vmax.f32 %v936, 0.0
    %v939 = vsel %vm411, %v937, -inf
    %v940 = vsel %vm413, %v938, -inf
    %v941 = vmax.f32 %v939, %v940
    %v942 = vrot.slane %v941, 4
    %v943 = vmax.f32 %v941, %v942
    %v944 = vrot.slane %v943, 2
    %v945 = vmax.f32 %v943, %v944
    %v946 = vrot.slane %v945, 1
    %v947 = vmax.f32 %v945, %v946
    %949 = vrot.lane.b32.xlu0 %v928, 112
    %v950 = vpop.permute.xlu0 %949
    %953 = vrot.lane.b32.xlu0 %v947, 88
    %v954 = vpop.permute.xlu0 %953
    %v956 = vsel %vm266, %v905, %v950
    %v957 = vsel %vm64, %v956, %v954
    %958 = vst.msk [vmem:[%s782 + $0x2] sm:$0x1] %vm338, %v957
    %v959 = vld [vmem:[#allocation2] sm:$0x1f]
    %v960 = vld [vmem:[#allocation2 + $0x8] sm:$0x1f]
    %v961 = vld [vmem:[%s8] sm:$0x3]
    %v962 = vld [vmem:[%s3] sm:$0xff]
    %v963 = vld [vmem:[%s3 + $0x8] sm:$0xff]
    %v964 = vld [vmem:[%s3 + $0x10] sm:$0xff]
    %v965 = vld [vmem:[%s4] sm:$0x1]
    %v967 = vlaneseq
    %v968 = vshrl.u32 %v967, 7
    %v969 = vsub.s32 0, %v968
    %v970 = vrot.slane %v965, %v969
    %v974 = vrot.slane %v960, 7
    %vm975 = vcmask 1041409
    %v976 = vsel %vm975, %v974, %v959
    %vm977 = vcmask 195584
    %v978 = vsel %vm977, %v976, 0
    %980 = vmatprep.subr.mxu0 0.0
    %981 = vmatpush1.msra.mxu0 %v962
    %982 = vmatprep.subr.mxu0 0.0
    %983 = vmatpush1.msra.mxu0 %v963
    %984 = vmatprep.subr.mxu0 0.0
    %985 = vmatpush1.msra.mxu0 %v964
    %986 = vmatprep.subr.mxu0 0.0
    %987 = vmatpush1.msra.mxu0 0.0
    %988 = vmatprep.subr.mxu0 0.0
    %989 = vmatpush1.msra.mxu0 0.0
    %990 = vmatprep.subr.mxu0 0.0
    %991 = vmatpush1.msra.mxu0 0.0
    %992 = vmatprep.subr.mxu0 0.0
    %993 = vmatpush1.msra.mxu0 0.0
    %994 = vmatprep.subr.mxu0 0.0
    %995 = vmatpush1.msra.mxu0 0.0
    %996 = vmatprep.subr.mxu0 0.0
    %997 = vmatpush1.msra.mxu0 0.0
    %998 = vmatprep.subr.mxu0 0.0
    %999 = vmatpush1.msra.mxu0 0.0
    %1000 = vmatprep.subr.mxu0 0.0
    %1001 = vmatpush1.msra.mxu0 0.0
    %1002 = vmatprep.subr.mxu0 0.0
    %1003 = vmatpush1.msra.mxu0 0.0
    %1004 = vmatprep.subr.mxu0 0.0
    %1005 = vmatpush1.msra.mxu0 0.0
    %1006 = vmatprep.subr.mxu0 0.0
    %1007 = vmatpush1.msra.mxu0 0.0
    %1008 = vmatprep.subr.mxu0 0.0
    %1009 = vmatpush1.msra.mxu0 0.0
    %1010 = vmatprep.subr.mxu0 0.0
    %1011 = vmatpush1.msra.mxu0 0.0
    %1012 = vmatprep.subr.mxu0 0.0
    %1013 = vmatpush1.msra.mxu0 0.0
    %1014 = vmatprep.subr.mxu0 0.0
    %1015 = vmatpush1.msra.mxu0 0.0
    %1016 = vmatprep.subr.mxu0 0.0
    %1017 = vmatpush1.msra.mxu0 0.0
    %1018 = vmatprep.subr.mxu0 0.0
    %1019 = vmatpush1.msra.mxu0 0.0
    %1020 = vmatprep.subr.mxu0 0.0
    %1021 = vmatpush1.msra.mxu0 0.0
    %1022 = vmatprep.subr.mxu0 0.0
    %1023 = vmatpush1.msra.mxu0 0.0
    %1024 = vmatprep.subr.mxu0 0.0
    %1025 = vmatpush1.msra.mxu0 0.0
    %1026 = vmatprep.subr.mxu0 0.0
    %1027 = vmatpush1.msra.mxu0 0.0
    %1028 = vmatprep.subr.mxu0 0.0
    %1029 = vmatpush1.msra.mxu0 0.0
    %1030 = vmatprep.subr.mxu0 0.0
    %1031 = vmatpush1.msra.mxu0 0.0
    %1032 = vmatprep.subr.mxu0 0.0
    %1033 = vmatpush1.msra.mxu0 0.0
    %1034 = vmatprep.subr.mxu0 0.0
    %1035 = vmatpush1.msra.mxu0 0.0
    %1036 = vmatprep.subr.mxu0 0.0
    %1037 = vmatpush1.msra.mxu0 0.0
    %1038 = vmatprep.subr.mxu0 0.0
    %1039 = vmatpush1.msra.mxu0 0.0
    %1040 = vmatprep.subr.mxu0 0.0
    %1041 = vmatpush1.msra.mxu0 0.0
    %1042 = vmatprep.subr.mxu0 0.0
    %1043 = vmatpush1.msra.mxu0 0.0
    %1044 = vmatprep.mubr.f32.mxu0 0.0
    %1045 = vmatmul.mubr.f32.gmra.mrb[0].mxu0 %v978
    %v1046 = vpop.f32.mrb[0].mxu0
    %v1047 = vadd.f32 %v970, %v1046
    %v1048 = vpop.f32.mrb[0].mxu0
    %1049 = vdwg.mxu0
    %v1050 = vrot.slane %v959, 1
    %v1051 = vsel %vm975, %v960, %v1050
    %v1052 = vsel %vm977, %v1051, 0
    %1054 = vmatprep.subr.mxu0 0.0
    %1055 = vmatpush1.msra.mxu0 %v962
    %1056 = vmatprep.subr.mxu0 0.0
    %1057 = vmatpush1.msra.mxu0 %v963
    %1058 = vmatprep.subr.mxu0 0.0
    %1059 = vmatpush1.msra.mxu0 %v964
    %1060 = vmatprep.subr.mxu0 0.0
    %1061 = vmatpush1.msra.mxu0 0.0
    %1062 = vmatprep.subr.mxu0 0.0
    %1063 = vmatpush1.msra.mxu0 0.0
    %1064 = vmatprep.subr.mxu0 0.0
    %1065 = vmatpush1.msra.mxu0 0.0
    %1066 = vmatprep.subr.mxu0 0.0
    %1067 = vmatpush1.msra.mxu0 0.0
    %1068 = vmatprep.subr.mxu0 0.0
    %1069 = vmatpush1.msra.mxu0 0.0
    %1070 = vmatprep.subr.mxu0 0.0
    %1071 = vmatpush1.msra.mxu0 0.0
    %1072 = vmatprep.subr.mxu0 0.0
    %1073 = vmatpush1.msra.mxu0 0.0
    %1074 = vmatprep.subr.mxu0 0.0
    %1075 = vmatpush1.msra.mxu0 0.0
    %1076 = vmatprep.subr.mxu0 0.0
    %1077 = vmatpush1.msra.mxu0 0.0
    %1078 = vmatprep.subr.mxu0 0.0
    %1079 = vmatpush1.msra.mxu0 0.0
    %1080 = vmatprep.subr.mxu0 0.0
    %1081 = vmatpush1.msra.mxu0 0.0
    %1082 = vmatprep.subr.mxu0 0.0
    %1083 = vmatpush1.msra.mxu0 0.0
    %1084 = vmatprep.subr.mxu0 0.0
    %1085 = vmatpush1.msra.mxu0 0.0
    %1086 = vmatprep.subr.mxu0 0.0
    %1087 = vmatpush1.msra.mxu0 0.0
    %1088 = vmatprep.subr.mxu0 0.0
    %1089 = vmatpush1.msra.mxu0 0.0
    %1090 = vmatprep.subr.mxu0 0.0
    %1091 = vmatpush1.msra.mxu0 0.0
    %1092 = vmatprep.subr.mxu0 0.0
    %1093 = vmatpush1.msra.mxu0 0.0
    %1094 = vmatprep.subr.mxu0 0.0
    %1095 = vmatpush1.msra.mxu0 0.0
    %1096 = vmatprep.subr.mxu0 0.0
    %1097 = vmatpush1.msra.mxu0 0.0
    %1098 = vmatprep.subr.mxu0 0.0
    %1099 = vmatpush1.msra.mxu0 0.0
    %1100 = vmatprep.subr.mxu0 0.0
    %1101 = vmatpush1.msra.mxu0 0.0
    %1102 = vmatprep.subr.mxu0 0.0
    %1103 = vmatpush1.msra.mxu0 0.0
    %1104 = vmatprep.subr.mxu0 0.0
    %1105 = vmatpush1.msra.mxu0 0.0
    %1106 = vmatprep.subr.mxu0 0.0
    %1107 = vmatpush1.msra.mxu0 0.0
    %1108 = vmatprep.subr.mxu0 0.0
    %1109 = vmatpush1.msra.mxu0 0.0
    %1110 = vmatprep.subr.mxu0 0.0
    %1111 = vmatpush1.msra.mxu0 0.0
    %1112 = vmatprep.subr.mxu0 0.0
    %1113 = vmatpush1.msra.mxu0 0.0
    %1114 = vmatprep.subr.mxu0 0.0
    %1115 = vmatpush1.msra.mxu0 0.0
    %1116 = vmatprep.subr.mxu0 0.0
    %1117 = vmatpush1.msra.mxu0 0.0
    %1118 = vmatprep.mubr.f32.mxu0 0.0
    %1119 = vmatmul.mubr.f32.gmra.mrb[0].mxu0 %v1052
    %v1120 = vpop.f32.mrb[0].mxu0
    %v1121 = vadd.f32 %v970, %v1120
    %v1122 = vpop.f32.mrb[0].mxu0
    %1123 = vdwg.mxu0
    %v1124 = vrot.slane %v959, 2
    %v1125 = vrot.slane %v960, 1
    %v1126 = vsel %vm975, %v1125, %v1124
    %v1127 = vsel %vm977, %v1126, 0
    %1129 = vmatprep.subr.mxu0 0.0
    %1130 = vmatpush1.msra.mxu0 %v962
    %1131 = vmatprep.subr.mxu0 0.0
    %1132 = vmatpush1.msra.mxu0 %v963
    %1133 = vmatprep.subr.mxu0 0.0
    %1134 = vmatpush1.msra.mxu0 %v964
    %1135 = vmatprep.subr.mxu0 0.0
    %1136 = vmatpush1.msra.mxu0 0.0
    %1137 = vmatprep.subr.mxu0 0.0
    %1138 = vmatpush1.msra.mxu0 0.0
    %1139 = vmatprep.subr.mxu0 0.0
    %1140 = vmatpush1.msra.mxu0 0.0
    %1141 = vmatprep.subr.mxu0 0.0
    %1142 = vmatpush1.msra.mxu0 0.0
    %1143 = vmatprep.subr.mxu0 0.0
    %1144 = vmatpush1.msra.mxu0 0.0
    %1145 = vmatprep.subr.mxu0 0.0
    %1146 = vmatpush1.msra.mxu0 0.0
    %1147 = vmatprep.subr.mxu0 0.0
    %1148 = vmatpush1.msra.mxu0 0.0
    %1149 = vmatprep.subr.mxu0 0.0
    %1150 = vmatpush1.msra.mxu0 0.0
    %1151 = vmatprep.subr.mxu0 0.0
    %1152 = vmatpush1.msra.mxu0 0.0
    %1153 = vmatprep.subr.mxu0 0.0
    %1154 = vmatpush1.msra.mxu0 0.0
    %1155 = vmatprep.subr.mxu0 0.0
    %1156 = vmatpush1.msra.mxu0 0.0
    %1157 = vmatprep.subr.mxu0 0.0
    %1158 = vmatpush1.msra.mxu0 0.0
    %1159 = vmatprep.subr.mxu0 0.0
    %1160 = vmatpush1.msra.mxu0 0.0
    %1161 = vmatprep.subr.mxu0 0.0
    %1162 = vmatpush1.msra.mxu0 0.0
    %1163 = vmatprep.subr.mxu0 0.0
    %1164 = vmatpush1.msra.mxu0 0.0
    %1165 = vmatprep.subr.mxu0 0.0
    %1166 = vmatpush1.msra.mxu0 0.0
    %1167 = vmatprep.subr.mxu0 0.0
    %1168 = vmatpush1.msra.mxu0 0.0
    %1169 = vmatprep.subr.mxu0 0.0
    %1170 = vmatpush1.msra.mxu0 0.0
    %1171 = vmatprep.subr.mxu0 0.0
    %1172 = vmatpush1.msra.mxu0 0.0
    %1173 = vmatprep.subr.mxu0 0.0
    %1174 = vmatpush1.msra.mxu0 0.0
    %1175 = vmatprep.subr.mxu0 0.0
    %1176 = vmatpush1.msra.mxu0 0.0
    %1177 = vmatprep.subr.mxu0 0.0
    %1178 = vmatpush1.msra.mxu0 0.0
    %1179 = vmatprep.subr.mxu0 0.0
    %1180 = vmatpush1.msra.mxu0 0.0
    %1181 = vmatprep.subr.mxu0 0.0
    %1182 = vmatpush1.msra.mxu0 0.0
    %1183 = vmatprep.subr.mxu0 0.0
    %1184 = vmatpush1.msra.mxu0 0.0
    %1185 = vmatprep.subr.mxu0 0.0
    %1186 = vmatpush1.msra.mxu0 0.0
    %1187 = vmatprep.subr.mxu0 0.0
    %1188 = vmatpush1.msra.mxu0 0.0
    %1189 = vmatprep.subr.mxu0 0.0
    %1190 = vmatpush1.msra.mxu0 0.0
    %1191 = vmatprep.subr.mxu0 0.0
    %1192 = vmatpush1.msra.mxu0 0.0
    %1193 = vmatprep.mubr.f32.mxu0 0.0
    %1194 = vmatmul.mubr.f32.gmra.mrb[0].mxu0 %v1127
    %v1195 = vpop.f32.mrb[0].mxu0
    %v1196 = vadd.f32 %v970, %v1195
    %v1197 = vpop.f32.mrb[0].mxu0
    %1198 = vdwg.mxu0
    %v1199 = vrot.slane %v959, 3
    %v1200 = vrot.slane %v960, 2
    %v1201 = vsel %vm975, %v1200, %v1199
    %v1202 = vsel %vm977, %v1201, 0
    %1204 = vmatprep.subr.mxu0 0.0
    %1205 = vmatpush1.msra.mxu0 %v962
    %1206 = vmatprep.subr.mxu0 0.0
    %1207 = vmatpush1.msra.mxu0 %v963
    %1208 = vmatprep.subr.mxu0 0.0
    %1209 = vmatpush1.msra.mxu0 %v964
    %1210 = vmatprep.subr.mxu0 0.0
    %1211 = vmatpush1.msra.mxu0 0.0
    %1212 = vmatprep.subr.mxu0 0.0
    %1213 = vmatpush1.msra.mxu0 0.0
    %1214 = vmatprep.subr.mxu0 0.0
    %1215 = vmatpush1.msra.mxu0 0.0
    %1216 = vmatprep.subr.mxu0 0.0
    %1217 = vmatpush1.msra.mxu0 0.0
    %1218 = vmatprep.subr.mxu0 0.0
    %1219 = vmatpush1.msra.mxu0 0.0
    %1220 = vmatprep.subr.mxu0 0.0
    %1221 = vmatpush1.msra.mxu0 0.0
    %1222 = vmatprep.subr.mxu0 0.0
    %1223 = vmatpush1.msra.mxu0 0.0
    %1224 = vmatprep.subr.mxu0 0.0
    %1225 = vmatpush1.msra.mxu0 0.0
    %1226 = vmatprep.subr.mxu0 0.0
    %1227 = vmatpush1.msra.mxu0 0.0
    %1228 = vmatprep.subr.mxu0 0.0
    %1229 = vmatpush1.msra.mxu0 0.0
    %1230 = vmatprep.subr.mxu0 0.0
    %1231 = vmatpush1.msra.mxu0 0.0
    %1232 = vmatprep.subr.mxu0 0.0
    %1233 = vmatpush1.msra.mxu0 0.0
    %1234 = vmatprep.subr.mxu0 0.0
    %1235 = vmatpush1.msra.mxu0 0.0
    %1236 = vmatprep.subr.mxu0 0.0
    %1237 = vmatpush1.msra.mxu0 0.0
    %1238 = vmatprep.subr.mxu0 0.0
    %1239 = vmatpush1.msra.mxu0 0.0
    %1240 = vmatprep.subr.mxu0 0.0
    %1241 = vmatpush1.msra.mxu0 0.0
    %1242 = vmatprep.subr.mxu0 0.0
    %1243 = vmatpush1.msra.mxu0 0.0
    %1244 = vmatprep.subr.mxu0 0.0
    %1245 = vmatpush1.msra.mxu0 0.0
    %1246 = vmatprep.subr.mxu0 0.0
    %1247 = vmatpush1.msra.mxu0 0.0
    %1248 = vmatprep.subr.mxu0 0.0
    %1249 = vmatpush1.msra.mxu0 0.0
    %1250 = vmatprep.subr.mxu0 0.0
    %1251 = vmatpush1.msra.mxu0 0.0
    %1252 = vmatprep.subr.mxu0 0.0
    %1253 = vmatpush1.msra.mxu0 0.0
    %1254 = vmatprep.subr.mxu0 0.0
    %1255 = vmatpush1.msra.mxu0 0.0
    %1256 = vmatprep.subr.mxu0 0.0
    %1257 = vmatpush1.msra.mxu0 0.0
    %1258 = vmatprep.subr.mxu0 0.0
    %1259 = vmatpush1.msra.mxu0 0.0
    %1260 = vmatprep.subr.mxu0 0.0
    %1261 = vmatpush1.msra.mxu0 0.0
    %1262 = vmatprep.subr.mxu0 0.0
    %1263 = vmatpush1.msra.mxu0 0.0
    %1264 = vmatprep.subr.mxu0 0.0
    %1265 = vmatpush1.msra.mxu0 0.0
    %1266 = vmatprep.subr.mxu0 0.0
    %1267 = vmatpush1.msra.mxu0 0.0
    %1268 = vmatprep.mubr.f32.mxu0 0.0
    %1269 = vmatmul.mubr.f32.gmra.mrb[0].mxu0 %v1202
    %v1270 = vpop.f32.mrb[0].mxu0
    %v1271 = vadd.f32 %v970, %v1270
    %v1272 = vpop.f32.mrb[0].mxu0
    %1273 = vdwg.mxu0
    %v1274 = vrot.slane %v959, 4
    %v1275 = vrot.slane %v960, 3
    %v1276 = vsel %vm975, %v1275, %v1274
    %v1277 = vsel %vm977, %v1276, 0
    %1279 = vmatprep.subr.mxu0 0.0
    %1280 = vmatpush1.msra.mxu0 %v962
    %1281 = vmatprep.subr.mxu0 0.0
    %1282 = vmatpush1.msra.mxu0 %v963
    %1283 = vmatprep.subr.mxu0 0.0
    %1284 = vmatpush1.msra.mxu0 %v964
    %1285 = vmatprep.subr.mxu0 0.0
    %1286 = vmatpush1.msra.mxu0 0.0
    %1287 = vmatprep.subr.mxu0 0.0
    %1288 = vmatpush1.msra.mxu0 0.0
    %1289 = vmatprep.subr.mxu0 0.0
    %1290 = vmatpush1.msra.mxu0 0.0
    %1291 = vmatprep.subr.mxu0 0.0
    %1292 = vmatpush1.msra.mxu0 0.0
    %1293 = vmatprep.subr.mxu0 0.0
    %1294 = vmatpush1.msra.mxu0 0.0
    %1295 = vmatprep.subr.mxu0 0.0
    %1296 = vmatpush1.msra.mxu0 0.0
    %1297 = vmatprep.subr.mxu0 0.0
    %1298 = vmatpush1.msra.mxu0 0.0
    %1299 = vmatprep.subr.mxu0 0.0
    %1300 = vmatpush1.msra.mxu0 0.0
    %1301 = vmatprep.subr.mxu0 0.0
    %1302 = vmatpush1.msra.mxu0 0.0
    %1303 = vmatprep.subr.mxu0 0.0
    %1304 = vmatpush1.msra.mxu0 0.0
    %1305 = vmatprep.subr.mxu0 0.0
    %1306 = vmatpush1.msra.mxu0 0.0
    %1307 = vmatprep.subr.mxu0 0.0
    %1308 = vmatpush1.msra.mxu0 0.0
    %1309 = vmatprep.subr.mxu0 0.0
    %1310 = vmatpush1.msra.mxu0 0.0
    %1311 = vmatprep.subr.mxu0 0.0
    %1312 = vmatpush1.msra.mxu0 0.0
    %1313 = vmatprep.subr.mxu0 0.0
    %1314 = vmatpush1.msra.mxu0 0.0
    %1315 = vmatprep.subr.mxu0 0.0
    %1316 = vmatpush1.msra.mxu0 0.0
    %1317 = vmatprep.subr.mxu0 0.0
    %1318 = vmatpush1.msra.mxu0 0.0
    %1319 = vmatprep.subr.mxu0 0.0
    %1320 = vmatpush1.msra.mxu0 0.0
    %1321 = vmatprep.subr.mxu0 0.0
    %1322 = vmatpush1.msra.mxu0 0.0
    %1323 = vmatprep.subr.mxu0 0.0
    %1324 = vmatpush1.msra.mxu0 0.0
    %1325 = vmatprep.subr.mxu0 0.0
    %1326 = vmatpush1.msra.mxu0 0.0
    %1327 = vmatprep.subr.mxu0 0.0
    %1328 = vmatpush1.msra.mxu0 0.0
    %1329 = vmatprep.subr.mxu0 0.0
    %1330 = vmatpush1.msra.mxu0 0.0
    %1331 = vmatprep.subr.mxu0 0.0
    %1332 = vmatpush1.msra.mxu0 0.0
    %1333 = vmatprep.subr.mxu0 0.0
    %1334 = vmatpush1.msra.mxu0 0.0
    %1335 = vmatprep.subr.mxu0 0.0
    %1336 = vmatpush1.msra.mxu0 0.0
    %1337 = vmatprep.subr.mxu0 0.0
    %1338 = vmatpush1.msra.mxu0 0.0
    %1339 = vmatprep.subr.mxu0 0.0
    %1340 = vmatpush1.msra.mxu0 0.0
    %1341 = vmatprep.subr.mxu0 0.0
    %1342 = vmatpush1.msra.mxu0 0.0
    %1343 = vmatprep.mubr.f32.mxu0 0.0
    %1344 = vmatmul.mubr.f32.gmra.mrb[0].mxu0 %v1277
    %v1345 = vpop.f32.mrb[0].mxu0
    %v1346 = vadd.f32 %v970, %v1345
    %v1347 = vpop.f32.mrb[0].mxu0
    %1348 = vdwg.mxu0
    %v1349 = vld [vmem:[%s5] sm:$0xff]
    %v1350 = vld [vmem:[%s5 + $0x8] sm:$0xff]
    %v1351 = vld [vmem:[%s6] sm:$0x1]
    %v1353 = vlaneseq
    %v1354 = vshrl.u32 %v1353, 7
    %v1355 = vsub.s32 0, %v1354
    %v1356 = vrot.slane %v1351, %v1355
    %v1358 = vld [vmem:[%s7] sm:$0x1]
    %v1360 = vlaneseq
    %v1361 = vshrl.u32 %v1360, 7
    %v1362 = vsub.s32 0, %v1361
    %v1363 = vrot.slane %v1358, %v1362
    %v1365 = vsel %vm64, %v1356, 0
    %1367 = vmatprep.subr.mxu0 0.0
    %1368 = vmatpush1.msra.mxu0 %v1349
    %1369 = vmatprep.subr.mxu0 0.0
    %1370 = vmatpush1.msra.mxu0 %v1350
    %1371 = vmatprep.subr.mxu0 0.0
    %1372 = vmatpush1.msra.mxu0 0.0
    %1373 = vmatprep.subr.mxu0 0.0
    %1374 = vmatpush1.msra.mxu0 0.0
    %1375 = vmatprep.subr.mxu0 0.0
    %1376 = vmatpush1.msra.mxu0 0.0
    %1377 = vmatprep.subr.mxu0 0.0
    %1378 = vmatpush1.msra.mxu0 0.0
    %1379 = vmatprep.subr.mxu0 0.0
    %1380 = vmatpush1.msra.mxu0 0.0
    %1381 = vmatprep.subr.mxu0 0.0
    %1382 = vmatpush1.msra.mxu0 0.0
    %1383 = vmatprep.subr.mxu0 0.0
    %1384 = vmatpush1.msra.mxu0 0.0
    %1385 = vmatprep.subr.mxu0 0.0
    %1386 = vmatpush1.msra.mxu0 0.0
    %1387 = vmatprep.subr.mxu0 0.0
    %1388 = vmatpush1.msra.mxu0 0.0
    %1389 = vmatprep.subr.mxu0 0.0
    %1390 = vmatpush1.msra.mxu0 0.0
    %1391 = vmatprep.subr.mxu0 0.0
    %1392 = vmatpush1.msra.mxu0 0.0
    %1393 = vmatprep.subr.mxu0 0.0
    %1394 = vmatpush1.msra.mxu0 0.0
    %1395 = vmatprep.subr.mxu0 0.0
    %1396 = vmatpush1.msra.mxu0 0.0
    %1397 = vmatprep.subr.mxu0 0.0
    %1398 = vmatpush1.msra.mxu0 0.0
    %1399 = vmatprep.subr.mxu0 0.0
    %1400 = vmatpush1.msra.mxu0 0.0
    %1401 = vmatprep.subr.mxu0 0.0
    %1402 = vmatpush1.msra.mxu0 0.0
    %1403 = vmatprep.subr.mxu0 0.0
    %1404 = vmatpush1.msra.mxu0 0.0
    %1405 = vmatprep.subr.mxu0 0.0
    %1406 = vmatpush1.msra.mxu0 0.0
    %1407 = vmatprep.subr.mxu0 0.0
    %1408 = vmatpush1.msra.mxu0 0.0
    %1409 = vmatprep.subr.mxu0 0.0
    %1410 = vmatpush1.msra.mxu0 0.0
    %1411 = vmatprep.subr.mxu0 0.0
    %1412 = vmatpush1.msra.mxu0 0.0
    %1413 = vmatprep.subr.mxu0 0.0
    %1414 = vmatpush1.msra.mxu0 0.0
    %1415 = vmatprep.subr.mxu0 0.0
    %1416 = vmatpush1.msra.mxu0 0.0
    %1417 = vmatprep.subr.mxu0 0.0
    %1418 = vmatpush1.msra.mxu0 0.0
    %1419 = vmatprep.subr.mxu0 0.0
    %1420 = vmatpush1.msra.mxu0 0.0
    %1421 = vmatprep.subr.mxu0 0.0
    %1422 = vmatpush1.msra.mxu0 0.0
    %1423 = vmatprep.subr.mxu0 0.0
    %1424 = vmatpush1.msra.mxu0 0.0
    %1425 = vmatprep.subr.mxu0 0.0
    %1426 = vmatpush1.msra.mxu0 0.0
    %1427 = vmatprep.subr.mxu0 0.0
    %1428 = vmatpush1.msra.mxu0 0.0
    %1429 = vmatprep.subr.mxu0 0.0
    %1430 = vmatpush1.msra.mxu0 0.0
    %1431 = vmatprep.mubr.f32.mxu0 0.0
    %1432 = vmatmul.mubr.f32.gmra.mrb[0].mxu0 %v1365
    %v1433 = vpop.f32.mrb[0].mxu0
    %v1434 = vadd.f32 0.0, %v1433
    %v1435 = vpop.f32.mrb[0].mxu0
    %1436 = vdwg.mxu0
    %v1437 = vadd.f32 %v1047, %v1434
    %v1438 = vxor.u32 %v1437, 2147483648
    %v1439 = vmul.f32 %v1438, 1.442695
    %v1440 = vpow.pop %v1439
    %v1441 = vadd.f32 %v1440, 1.0
    %v1442 = vrcp.pop %v1441
    %v1443 = vmul.f32 1.0, %v1442
    %v1444 = vtanh.pop %v1437
    %1445 = vrot.lane.b32.xlu0 %v1363, 16
    %v1446 = vpop.permute.xlu0 %1445
    %v1448 = vmul.f32 %v1443, %v1446
    %1450 = vrot.lane.b32.xlu0 %v1444, 96
    %v1451 = vpop.permute.xlu0 %1450
    %v1453 = vmul.f32 %v1443, %v1451
    %1455 = vrot.lane.b32.xlu0 %v1453, 16
    %v1456 = vpop.permute.xlu0 %1455
    %v1458 = vadd.f32 %v1448, %v1456
    %v1459 = vtanh.pop %v1458
    %1461 = vrot.lane.b32.xlu0 %v1459, 32
    %v1462 = vpop.permute.xlu0 %1461
    %v1464 = vmul.f32 %v1443, %v1462
    %1466 = vset.pattern.permute.xlu0 0
    %1467 = vperm.xlu0 %1466, %v961
    %v1468 = vpop.permute.xlu0 %1467
    %v1470 = vmul.f32 %v1468, %v1464
    %v1471 = vsub.f32 1.0, %v961
    %1473 = vset.pattern.permute.xlu0 0
    %1474 = vperm.xlu0 %1473, %v1471
    %v1475 = vpop.permute.xlu0 %1474
    %v1477 = vmul.f32 %v1475, %v1356
    %1479 = vrot.lane.b32.xlu0 %v1477, 48
    %v1480 = vpop.permute.xlu0 %1479
    %v1482 = vadd.f32 %v1470, %v1480
    %v1483 = vmul.f32 %v1468, %v1458
    %v1484 = vmul.f32 %v1475, %v1363
    %1486 = vrot.lane.b32.xlu0 %v1484, 16
    %v1487 = vpop.permute.xlu0 %1486
    %v1489 = vadd.f32 %v1483, %v1487
    %v1492 = vunpack.c.l.s4 1966171168
    %v1493 = vunpack.c.0.s8 %v1492
    %v1494 = vlaneseq
    %v1495 = vshrl.u32 %v1494, 7
    %v1496 = vsub.s32 %v1493, %v1495
    %v1497 = vrot.slane %v1470, %v1496
    %v1498 = vcombine.high %v1497, %v1497
    %v1500 = vunpack.c.l.s4 1966171168
    %v1501 = vunpack.c.0.s8 %v1500
    %v1502 = vlaneseq
    %v1503 = vshrl.u32 %v1502, 7
    %v1504 = vsub.s32 %v1501, %v1503
    %v1505 = vrot.slane %v1497, %v1504
    %v1507 = vunpack.c.l.s4 1966171168
    %v1508 = vunpack.c.0.s8 %v1507
    %v1509 = vlaneseq
    %v1510 = vshrl.u32 %v1509, 7
    %v1511 = vsub.s32 %v1508, %v1510
    %v1512 = vrot.slane %v1498, %v1511
    %v1513 = vlaneseq
    %v1514 = vshrl.u32 %v1513, 7
    %v1515 = vsub.s32 0, %v1514
    %v1516 = vrot.slane %v1505, %v1515
    %v1517 = vlaneseq
    %v1518 = vshrl.u32 %v1517, 7
    %v1519 = vsub.s32 0, %v1518
    %v1520 = vrot.slane %v1512, %v1519
    %1521 = vrot.lane.b32.xlu0 %v1516, 80
    %v1522 = vpop.permute.xlu0 %1521
    %1523 = vrot.lane.b32.xlu0 %v1520, 80
    %v1524 = vpop.permute.xlu0 %1523
    %vm1527 = vcmask 122880
    %1528 = vst.msk [vmem:[#allocation3] sm:$0x1] %vm1527, %v1522
    %1529 = vst.msk [vmem:[#allocation3 + $0x8] sm:$0x1] %vm1527, %v1524
    %1531 = vrot.lane.b32.xlu0 %v1482, 80
    %v1532 = vpop.permute.xlu0 %1531
    %v1533 = vsel %vm64, %v1532, 0
    %1535 = vmatprep.subr.mxu0 0.0
    %1536 = vmatpush1.msra.mxu0 %v1349
    %1537 = vmatprep.subr.mxu0 0.0
    %1538 = vmatpush1.msra.mxu0 %v1350
    %1539 = vmatprep.subr.mxu0 0.0
    %1540 = vmatpush1.msra.mxu0 0.0
    %1541 = vmatprep.subr.mxu0 0.0
    %1542 = vmatpush1.msra.mxu0 0.0
    %1543 = vmatprep.subr.mxu0 0.0
    %1544 = vmatpush1.msra.mxu0 0.0
    %1545 = vmatprep.subr.mxu0 0.0
    %1546 = vmatpush1.msra.mxu0 0.0
    %1547 = vmatprep.subr.mxu0 0.0
    %1548 = vmatpush1.msra.mxu0 0.0
    %1549 = vmatprep.subr.mxu0 0.0
    %1550 = vmatpush1.msra.mxu0 0.0
    %1551 = vmatprep.subr.mxu0 0.0
    %1552 = vmatpush1.msra.mxu0 0.0
    %1553 = vmatprep.subr.mxu0 0.0
    %1554 = vmatpush1.msra.mxu0 0.0
    %1555 = vmatprep.subr.mxu0 0.0
    %1556 = vmatpush1.msra.mxu0 0.0
    %1557 = vmatprep.subr.mxu0 0.0
    %1558 = vmatpush1.msra.mxu0 0.0
    %1559 = vmatprep.subr.mxu0 0.0
    %1560 = vmatpush1.msra.mxu0 0.0
    %1561 = vmatprep.subr.mxu0 0.0
    %1562 = vmatpush1.msra.mxu0 0.0
    %1563 = vmatprep.subr.mxu0 0.0
    %1564 = vmatpush1.msra.mxu0 0.0
    %1565 = vmatprep.subr.mxu0 0.0
    %1566 = vmatpush1.msra.mxu0 0.0
    %1567 = vmatprep.subr.mxu0 0.0
    %1568 = vmatpush1.msra.mxu0 0.0
    %1569 = vmatprep.subr.mxu0 0.0
    %1570 = vmatpush1.msra.mxu0 0.0
    %1571 = vmatprep.subr.mxu0 0.0
    %1572 = vmatpush1.msra.mxu0 0.0
    %1573 = vmatprep.subr.mxu0 0.0
    %1574 = vmatpush1.msra.mxu0 0.0
    %1575 = vmatprep.subr.mxu0 0.0
    %1576 = vmatpush1.msra.mxu0 0.0
    %1577 = vmatprep.subr.mxu0 0.0
    %1578 = vmatpush1.msra.mxu0 0.0
    %1579 = vmatprep.subr.mxu0 0.0
    %1580 = vmatpush1.msra.mxu0 0.0
    %1581 = vmatprep.subr.mxu0 0.0
    %1582 = vmatpush1.msra.mxu0 0.0
    %1583 = vmatprep.subr.mxu0 0.0
    %1584 = vmatpush1.msra.mxu0 0.0
    %1585 = vmatprep.subr.mxu0 0.0
    %1586 = vmatpush1.msra.mxu0 0.0
    %1587 = vmatprep.subr.mxu0 0.0
    %1588 = vmatpush1.msra.mxu0 0.0
    %1589 = vmatprep.subr.mxu0 0.0
    %1590 = vmatpush1.msra.mxu0 0.0
    %1591 = vmatprep.subr.mxu0 0.0
    %1592 = vmatpush1.msra.mxu0 0.0
    %1593 = vmatprep.subr.mxu0 0.0
    %1594 = vmatpush1.msra.mxu0 0.0
    %1595 = vmatprep.subr.mxu0 0.0
    %1596 = vmatpush1.msra.mxu0 0.0
    %1597 = vmatprep.subr.mxu0 0.0
    %1598 = vmatpush1.msra.mxu0 0.0
    %1599 = vmatprep.mubr.f32.mxu0 0.0
    %1600 = vmatmul.mubr.f32.gmra.mrb[0].mxu0 %v1533
    %v1601 = vpop.f32.mrb[0].mxu0
    %v1602 = vadd.f32 0.0, %v1601
    %v1603 = vpop.f32.mrb[0].mxu0
    %1604 = vdwg.mxu0
    %v1605 = vadd.f32 %v1121, %v1602
    %v1606 = vxor.u32 %v1605, 2147483648
    %v1607 = vmul.f32 %v1606, 1.442695
    %v1608 = vpow.pop %v1607
    %v1609 = vadd.f32 %v1608, 1.0
    %v1610 = vrcp.pop %v1609
    %v1611 = vmul.f32 1.0, %v1610
    %v1612 = vtanh.pop %v1605
    %v1613 = vmul.f32 %v1611, %v1489
    %1615 = vrot.lane.b32.xlu0 %v1612, 96
    %v1616 = vpop.permute.xlu0 %1615
    %v1618 = vmul.f32 %v1611, %v1616
    %1620 = vrot.lane.b32.xlu0 %v1618, 16
    %v1621 = vpop.permute.xlu0 %1620
    %v1623 = vadd.f32 %v1613, %v1621
    %v1624 = vtanh.pop %v1623
    %1626 = vrot.lane.b32.xlu0 %v1624, 32
    %v1627 = vpop.permute.xlu0 %1626
    %v1629 = vmul.f32 %v1611, %v1627
    %1630 = vset.pattern.permute.xlu0 1
    %1631 = vperm.xlu0 %1630, %v961
    %v1632 = vpop.permute.xlu0 %1631
    %v1634 = vmul.f32 %v1632, %v1629
    %1635 = vset.pattern.permute.xlu0 1
    %1636 = vperm.xlu0 %1635, %v1471
    %v1637 = vpop.permute.xlu0 %1636
    %v1639 = vmul.f32 %v1637, %v1482
    %v1640 = vadd.f32 %v1634, %v1639
    %v1641 = vmul.f32 %v1632, %v1623
    %v1642 = vmul.f32 %v1637, %v1489
    %v1643 = vadd.f32 %v1641, %v1642
    %v1646 = vunpack.c.l.s4 1966171168
    %v1647 = vunpack.c.0.s8 %v1646
    %v1648 = vlaneseq
    %v1649 = vshrl.u32 %v1648, 7
    %v1650 = vsub.s32 %v1647, %v1649
    %v1651 = vrot.slane %v1634, %v1650
    %v1652 = vcombine.high %v1651, %v1651
    %v1654 = vunpack.c.l.s4 1966171168
    %v1655 = vunpack.c.0.s8 %v1654
    %v1656 = vlaneseq
    %v1657 = vshrl.u32 %v1656, 7
    %v1658 = vsub.s32 %v1655, %v1657
    %v1659 = vrot.slane %v1651, %v1658
    %v1661 = vunpack.c.l.s4 1966171168
    %v1662 = vunpack.c.0.s8 %v1661
    %v1663 = vlaneseq
    %v1664 = vshrl.u32 %v1663, 7
    %v1665 = vsub.s32 %v1662, %v1664
    %v1666 = vrot.slane %v1652, %v1665
    %v1667 = vlaneseq
    %v1668 = vshrl.u32 %v1667, 7
    %v1669 = vsub.s32 0, %v1668
    %v1670 = vrot.slane %v1659, %v1669
    %v1671 = vlaneseq
    %v1672 = vshrl.u32 %v1671, 7
    %v1673 = vsub.s32 0, %v1672
    %v1674 = vrot.slane %v1666, %v1673
    %1675 = vrot.lane.b32.xlu0 %v1670, 80
    %v1676 = vpop.permute.xlu0 %1675
    %1677 = vrot.lane.b32.xlu0 %v1674, 80
    %v1678 = vpop.permute.xlu0 %1677
    %1681 = vst.msk [vmem:[#allocation3 + $0x1] sm:$0x1] %vm1527, %v1676
    %1682 = vst.msk [vmem:[#allocation3 + $0x9] sm:$0x1] %vm1527, %v1678
    %1684 = vrot.lane.b32.xlu0 %v1640, 80
    %v1685 = vpop.permute.xlu0 %1684
    %v1686 = vsel %vm64, %v1685, 0
    %1688 = vmatprep.subr.mxu0 0.0
    %1689 = vmatpush1.msra.mxu0 %v1349
    %1690 = vmatprep.subr.mxu0 0.0
    %1691 = vmatpush1.msra.mxu0 %v1350
    %1692 = vmatprep.subr.mxu0 0.0
    %1693 = vmatpush1.msra.mxu0 0.0
    %1694 = vmatprep.subr.mxu0 0.0
    %1695 = vmatpush1.msra.mxu0 0.0
    %1696 = vmatprep.subr.mxu0 0.0
    %1697 = vmatpush1.msra.mxu0 0.0
    %1698 = vmatprep.subr.mxu0 0.0
    %1699 = vmatpush1.msra.mxu0 0.0
    %1700 = vmatprep.subr.mxu0 0.0
    %1701 = vmatpush1.msra.mxu0 0.0
    %1702 = vmatprep.subr.mxu0 0.0
    %1703 = vmatpush1.msra.mxu0 0.0
    %1704 = vmatprep.subr.mxu0 0.0
    %1705 = vmatpush1.msra.mxu0 0.0
    %1706 = vmatprep.subr.mxu0 0.0
    %1707 = vmatpush1.msra.mxu0 0.0
    %1708 = vmatprep.subr.mxu0 0.0
    %1709 = vmatpush1.msra.mxu0 0.0
    %1710 = vmatprep.subr.mxu0 0.0
    %1711 = vmatpush1.msra.mxu0 0.0
    %1712 = vmatprep.subr.mxu0 0.0
    %1713 = vmatpush1.msra.mxu0 0.0
    %1714 = vmatprep.subr.mxu0 0.0
    %1715 = vmatpush1.msra.mxu0 0.0
    %1716 = vmatprep.subr.mxu0 0.0
    %1717 = vmatpush1.msra.mxu0 0.0
    %1718 = vmatprep.subr.mxu0 0.0
    %1719 = vmatpush1.msra.mxu0 0.0
    %1720 = vmatprep.subr.mxu0 0.0
    %1721 = vmatpush1.msra.mxu0 0.0
    %1722 = vmatprep.subr.mxu0 0.0
    %1723 = vmatpush1.msra.mxu0 0.0
    %1724 = vmatprep.subr.mxu0 0.0
    %1725 = vmatpush1.msra.mxu0 0.0
    %1726 = vmatprep.subr.mxu0 0.0
    %1727 = vmatpush1.msra.mxu0 0.0
    %1728 = vmatprep.subr.mxu0 0.0
    %1729 = vmatpush1.msra.mxu0 0.0
    %1730 = vmatprep.subr.mxu0 0.0
    %1731 = vmatpush1.msra.mxu0 0.0
    %1732 = vmatprep.subr.mxu0 0.0
    %1733 = vmatpush1.msra.mxu0 0.0
    %1734 = vmatprep.subr.mxu0 0.0
    %1735 = vmatpush1.msra.mxu0 0.0
    %1736 = vmatprep.subr.mxu0 0.0
    %1737 = vmatpush1.msra.mxu0 0.0
    %1738 = vmatprep.subr.mxu0 0.0
    %1739 = vmatpush1.msra.mxu0 0.0
    %1740 = vmatprep.subr.mxu0 0.0
    %1741 = vmatpush1.msra.mxu0 0.0
    %1742 = vmatprep.subr.mxu0 0.0
    %1743 = vmatpush1.msra.mxu0 0.0
    %1744 = vmatprep.subr.mxu0 0.0
    %1745 = vmatpush1.msra.mxu0 0.0
    %1746 = vmatprep.subr.mxu0 0.0
    %1747 = vmatpush1.msra.mxu0 0.0
    %1748 = vmatprep.subr.mxu0 0.0
    %1749 = vmatpush1.msra.mxu0 0.0
    %1750 = vmatprep.subr.mxu0 0.0
    %1751 = vmatpush1.msra.mxu0 0.0
    %1752 = vmatprep.mubr.f32.mxu0 0.0
    %1753 = vmatmul.mubr.f32.gmra.mrb[0].mxu0 %v1686
    %v1754 = vpop.f32.mrb[0].mxu0
    %v1755 = vadd.f32 0.0, %v1754
    %v1756 = vpop.f32.mrb[0].mxu0
    %1757 = vdwg.mxu0
    %v1758 = vadd.f32 %v1196, %v1755
    %v1759 = vxor.u32 %v1758, 2147483648
    %v1760 = vmul.f32 %v1759, 1.442695
    %v1761 = vpow.pop %v1760
    %v1762 = vadd.f32 %v1761, 1.0
    %v1763 = vrcp.pop %v1762
    %v1764 = vmul.f32 1.0, %v1763
    %v1765 = vtanh.pop %v1758
    %v1766 = vmul.f32 %v1764, %v1643
    %1768 = vrot.lane.b32.xlu0 %v1765, 96
    %v1769 = vpop.permute.xlu0 %1768
    %v1771 = vmul.f32 %v1764, %v1769
    %1773 = vrot.lane.b32.xlu0 %v1771, 16
    %v1774 = vpop.permute.xlu0 %1773
    %v1776 = vadd.f32 %v1766, %v1774
    %v1777 = vtanh.pop %v1776
    %1779 = vrot.lane.b32.xlu0 %v1777, 32
    %v1780 = vpop.permute.xlu0 %1779
    %v1782 = vmul.f32 %v1764, %v1780
    %1783 = vset.pattern.permute.xlu0 2
    %1784 = vperm.xlu0 %1783, %v961
    %v1785 = vpop.permute.xlu0 %1784
    %v1787 = vmul.f32 %v1785, %v1782
    %1788 = vset.pattern.permute.xlu0 2
    %1789 = vperm.xlu0 %1788, %v1471
    %v1790 = vpop.permute.xlu0 %1789
    %v1792 = vmul.f32 %v1790, %v1640
    %v1793 = vadd.f32 %v1787, %v1792
    %v1794 = vmul.f32 %v1785, %v1776
    %v1795 = vmul.f32 %v1790, %v1643
    %v1796 = vadd.f32 %v1794, %v1795
    %v1799 = vunpack.c.l.s4 1966171168
    %v1800 = vunpack.c.0.s8 %v1799
    %v1801 = vlaneseq
    %v1802 = vshrl.u32 %v1801, 7
    %v1803 = vsub.s32 %v1800, %v1802
    %v1804 = vrot.slane %v1787, %v1803
    %v1805 = vcombine.high %v1804, %v1804
    %v1807 = vunpack.c.l.s4 1966171168
    %v1808 = vunpack.c.0.s8 %v1807
    %v1809 = vlaneseq
    %v1810 = vshrl.u32 %v1809, 7
    %v1811 = vsub.s32 %v1808, %v1810
    %v1812 = vrot.slane %v1804, %v1811
    %v1814 = vunpack.c.l.s4 1966171168
    %v1815 = vunpack.c.0.s8 %v1814
    %v1816 = vlaneseq
    %v1817 = vshrl.u32 %v1816, 7
    %v1818 = vsub.s32 %v1815, %v1817
    %v1819 = vrot.slane %v1805, %v1818
    %v1820 = vlaneseq
    %v1821 = vshrl.u32 %v1820, 7
    %v1822 = vsub.s32 0, %v1821
    %v1823 = vrot.slane %v1812, %v1822
    %v1824 = vlaneseq
    %v1825 = vshrl.u32 %v1824, 7
    %v1826 = vsub.s32 0, %v1825
    %v1827 = vrot.slane %v1819, %v1826
    %1828 = vrot.lane.b32.xlu0 %v1823, 80
    %v1829 = vpop.permute.xlu0 %1828
    %1830 = vrot.lane.b32.xlu0 %v1827, 80
    %v1831 = vpop.permute.xlu0 %1830
    %1834 = vst.msk [vmem:[#allocation3 + $0x2] sm:$0x1] %vm1527, %v1829
    %1835 = vst.msk [vmem:[#allocation3 + $0xa] sm:$0x1] %vm1527, %v1831
    %1837 = vrot.lane.b32.xlu0 %v1793, 80
    %v1838 = vpop.permute.xlu0 %1837
    %v1839 = vsel %vm64, %v1838, 0
    %1841 = vmatprep.subr.mxu0 0.0
    %1842 = vmatpush1.msra.mxu0 %v1349
    %1843 = vmatprep.subr.mxu0 0.0
    %1844 = vmatpush1.msra.mxu0 %v1350
    %1845 = vmatprep.subr.mxu0 0.0
    %1846 = vmatpush1.msra.mxu0 0.0
    %1847 = vmatprep.subr.mxu0 0.0
    %1848 = vmatpush1.msra.mxu0 0.0
    %1849 = vmatprep.subr.mxu0 0.0
    %1850 = vmatpush1.msra.mxu0 0.0
    %1851 = vmatprep.subr.mxu0 0.0
    %1852 = vmatpush1.msra.mxu0 0.0
    %1853 = vmatprep.subr.mxu0 0.0
    %1854 = vmatpush1.msra.mxu0 0.0
    %1855 = vmatprep.subr.mxu0 0.0
    %1856 = vmatpush1.msra.mxu0 0.0
    %1857 = vmatprep.subr.mxu0 0.0
    %1858 = vmatpush1.msra.mxu0 0.0
    %1859 = vmatprep.subr.mxu0 0.0
    %1860 = vmatpush1.msra.mxu0 0.0
    %1861 = vmatprep.subr.mxu0 0.0
    %1862 = vmatpush1.msra.mxu0 0.0
    %1863 = vmatprep.subr.mxu0 0.0
    %1864 = vmatpush1.msra.mxu0 0.0
    %1865 = vmatprep.subr.mxu0 0.0
    %1866 = vmatpush1.msra.mxu0 0.0
    %1867 = vmatprep.subr.mxu0 0.0
    %1868 = vmatpush1.msra.mxu0 0.0
    %1869 = vmatprep.subr.mxu0 0.0
    %1870 = vmatpush1.msra.mxu0 0.0
    %1871 = vmatprep.subr.mxu0 0.0
    %1872 = vmatpush1.msra.mxu0 0.0
    %1873 = vmatprep.subr.mxu0 0.0
    %1874 = vmatpush1.msra.mxu0 0.0
    %1875 = vmatprep.subr.mxu0 0.0
    %1876 = vmatpush1.msra.mxu0 0.0
    %1877 = vmatprep.subr.mxu0 0.0
    %1878 = vmatpush1.msra.mxu0 0.0
    %1879 = vmatprep.subr.mxu0 0.0
    %1880 = vmatpush1.msra.mxu0 0.0
    %1881 = vmatprep.subr.mxu0 0.0
    %1882 = vmatpush1.msra.mxu0 0.0
    %1883 = vmatprep.subr.mxu0 0.0
    %1884 = vmatpush1.msra.mxu0 0.0
    %1885 = vmatprep.subr.mxu0 0.0
    %1886 = vmatpush1.msra.mxu0 0.0
    %1887 = vmatprep.subr.mxu0 0.0
    %1888 = vmatpush1.msra.mxu0 0.0
    %1889 = vmatprep.subr.mxu0 0.0
    %1890 = vmatpush1.msra.mxu0 0.0
    %1891 = vmatprep.subr.mxu0 0.0
    %1892 = vmatpush1.msra.mxu0 0.0
    %1893 = vmatprep.subr.mxu0 0.0
    %1894 = vmatpush1.msra.mxu0 0.0
    %1895 = vmatprep.subr.mxu0 0.0
    %1896 = vmatpush1.msra.mxu0 0.0
    %1897 = vmatprep.subr.mxu0 0.0
    %1898 = vmatpush1.msra.mxu0 0.0
    %1899 = vmatprep.subr.mxu0 0.0
    %1900 = vmatpush1.msra.mxu0 0.0
    %1901 = vmatprep.subr.mxu0 0.0
    %1902 = vmatpush1.msra.mxu0 0.0
    %1903 = vmatprep.subr.mxu0 0.0
    %1904 = vmatpush1.msra.mxu0 0.0
    %1905 = vmatprep.mubr.f32.mxu0 0.0
    %1906 = vmatmul.mubr.f32.gmra.mrb[0].mxu0 %v1839
    %v1907 = vpop.f32.mrb[0].mxu0
    %v1908 = vadd.f32 0.0, %v1907
    %v1909 = vpop.f32.mrb[0].mxu0
    %1910 = vdwg.mxu0
    %v1911 = vadd.f32 %v1271, %v1908
    %v1912 = vxor.u32 %v1911, 2147483648
    %v1913 = vmul.f32 %v1912, 1.442695
    %v1914 = vpow.pop %v1913
    %v1915 = vadd.f32 %v1914, 1.0
    %v1916 = vrcp.pop %v1915
    %v1917 = vmul.f32 1.0, %v1916
    %v1918 = vtanh.pop %v1911
    %v1919 = vmul.f32 %v1917, %v1796
    %1921 = vrot.lane.b32.xlu0 %v1918, 96
    %v1922 = vpop.permute.xlu0 %1921
    %v1924 = vmul.f32 %v1917, %v1922
    %1926 = vrot.lane.b32.xlu0 %v1924, 16
    %v1927 = vpop.permute.xlu0 %1926
    %v1929 = vadd.f32 %v1919, %v1927
    %v1930 = vtanh.pop %v1929
    %1932 = vrot.lane.b32.xlu0 %v1930, 32
    %v1933 = vpop.permute.xlu0 %1932
    %v1935 = vmul.f32 %v1917, %v1933
    %1936 = vset.pattern.permute.xlu0 3
    %1937 = vperm.xlu0 %1936, %v961
    %v1938 = vpop.permute.xlu0 %1937
    %v1940 = vmul.f32 %v1938, %v1935
    %1941 = vset.pattern.permute.xlu0 3
    %1942 = vperm.xlu0 %1941, %v1471
    %v1943 = vpop.permute.xlu0 %1942
    %v1945 = vmul.f32 %v1943, %v1793
    %v1946 = vadd.f32 %v1940, %v1945
    %v1947 = vmul.f32 %v1938, %v1929
    %v1948 = vmul.f32 %v1943, %v1796
    %v1949 = vadd.f32 %v1947, %v1948
    %v1952 = vunpack.c.l.s4 1966171168
    %v1953 = vunpack.c.0.s8 %v1952
    %v1954 = vlaneseq
    %v1955 = vshrl.u32 %v1954, 7
    %v1956 = vsub.s32 %v1953, %v1955
    %v1957 = vrot.slane %v1940, %v1956
    %v1958 = vcombine.high %v1957, %v1957
    %v1960 = vunpack.c.l.s4 1966171168
    %v1961 = vunpack.c.0.s8 %v1960
    %v1962 = vlaneseq
    %v1963 = vshrl.u32 %v1962, 7
    %v1964 = vsub.s32 %v1961, %v1963
    %v1965 = vrot.slane %v1957, %v1964
    %v1967 = vunpack.c.l.s4 1966171168
    %v1968 = vunpack.c.0.s8 %v1967
    %v1969 = vlaneseq
    %v1970 = vshrl.u32 %v1969, 7
    %v1971 = vsub.s32 %v1968, %v1970
    %v1972 = vrot.slane %v1958, %v1971
    %v1973 = vlaneseq
    %v1974 = vshrl.u32 %v1973, 7
    %v1975 = vsub.s32 0, %v1974
    %v1976 = vrot.slane %v1965, %v1975
    %v1977 = vlaneseq
    %v1978 = vshrl.u32 %v1977, 7
    %v1979 = vsub.s32 0, %v1978
    %v1980 = vrot.slane %v1972, %v1979
    %1981 = vrot.lane.b32.xlu0 %v1976, 80
    %v1982 = vpop.permute.xlu0 %1981
    %1983 = vrot.lane.b32.xlu0 %v1980, 80
    %v1984 = vpop.permute.xlu0 %1983
    %1987 = vst.msk [vmem:[#allocation3 + $0x3] sm:$0x1] %vm1527, %v1982
    %1988 = vst.msk [vmem:[#allocation3 + $0xb] sm:$0x1] %vm1527, %v1984
    %1990 = vrot.lane.b32.xlu0 %v1946, 80
    %v1991 = vpop.permute.xlu0 %1990
    %v1992 = vsel %vm64, %v1991, 0
    %1994 = vmatprep.subr.mxu0 0.0
    %1995 = vmatpush1.msra.mxu0 %v1349
    %1996 = vmatprep.subr.mxu0 0.0
    %1997 = vmatpush1.msra.mxu0 %v1350
    %1998 = vmatprep.subr.mxu0 0.0
    %1999 = vmatpush1.msra.mxu0 0.0
    %2000 = vmatprep.subr.mxu0 0.0
    %2001 = vmatpush1.msra.mxu0 0.0
    %2002 = vmatprep.subr.mxu0 0.0
    %2003 = vmatpush1.msra.mxu0 0.0
    %2004 = vmatprep.subr.mxu0 0.0
    %2005 = vmatpush1.msra.mxu0 0.0
    %2006 = vmatprep.subr.mxu0 0.0
    %2007 = vmatpush1.msra.mxu0 0.0
    %2008 = vmatprep.subr.mxu0 0.0
    %2009 = vmatpush1.msra.mxu0 0.0
    %2010 = vmatprep.subr.mxu0 0.0
    %2011 = vmatpush1.msra.mxu0 0.0
    %2012 = vmatprep.subr.mxu0 0.0
    %2013 = vmatpush1.msra.mxu0 0.0
    %2014 = vmatprep.subr.mxu0 0.0
    %2015 = vmatpush1.msra.mxu0 0.0
    %2016 = vmatprep.subr.mxu0 0.0
    %2017 = vmatpush1.msra.mxu0 0.0
    %2018 = vmatprep.subr.mxu0 0.0
    %2019 = vmatpush1.msra.mxu0 0.0
    %2020 = vmatprep.subr.mxu0 0.0
    %2021 = vmatpush1.msra.mxu0 0.0
    %2022 = vmatprep.subr.mxu0 0.0
    %2023 = vmatpush1.msra.mxu0 0.0
    %2024 = vmatprep.subr.mxu0 0.0
    %2025 = vmatpush1.msra.mxu0 0.0
    %2026 = vmatprep.subr.mxu0 0.0
    %2027 = vmatpush1.msra.mxu0 0.0
    %2028 = vmatprep.subr.mxu0 0.0
    %2029 = vmatpush1.msra.mxu0 0.0
    %2030 = vmatprep.subr.mxu0 0.0
    %2031 = vmatpush1.msra.mxu0 0.0
    %2032 = vmatprep.subr.mxu0 0.0
    %2033 = vmatpush1.msra.mxu0 0.0
    %2034 = vmatprep.subr.mxu0 0.0
    %2035 = vmatpush1.msra.mxu0 0.0
    %2036 = vmatprep.subr.mxu0 0.0
    %2037 = vmatpush1.msra.mxu0 0.0
    %2038 = vmatprep.subr.mxu0 0.0
    %2039 = vmatpush1.msra.mxu0 0.0
    %2040 = vmatprep.subr.mxu0 0.0
    %2041 = vmatpush1.msra.mxu0 0.0
    %2042 = vmatprep.subr.mxu0 0.0
    %2043 = vmatpush1.msra.mxu0 0.0
    %2044 = vmatprep.subr.mxu0 0.0
    %2045 = vmatpush1.msra.mxu0 0.0
    %2046 = vmatprep.subr.mxu0 0.0
    %2047 = vmatpush1.msra.mxu0 0.0
    %2048 = vmatprep.subr.mxu0 0.0
    %2049 = vmatpush1.msra.mxu0 0.0
    %2050 = vmatprep.subr.mxu0 0.0
    %2051 = vmatpush1.msra.mxu0 0.0
    %2052 = vmatprep.subr.mxu0 0.0
    %2053 = vmatpush1.msra.mxu0 0.0
    %2054 = vmatprep.subr.mxu0 0.0
    %2055 = vmatpush1.msra.mxu0 0.0
    %2056 = vmatprep.subr.mxu0 0.0
    %2057 = vmatpush1.msra.mxu0 0.0
    %2058 = vmatprep.mubr.f32.mxu0 0.0
    %2059 = vmatmul.mubr.f32.gmra.mrb[0].mxu0 %v1992
    %v2060 = vpop.f32.mrb[0].mxu0
    %v2061 = vadd.f32 0.0, %v2060
    %v2062 = vpop.f32.mrb[0].mxu0
    %2063 = vdwg.mxu0
    %v2064 = vadd.f32 %v1346, %v2061
    %v2065 = vxor.u32 %v2064, 2147483648
    %v2066 = vmul.f32 %v2065, 1.442695
    %v2067 = vpow.pop %v2066
    %v2068 = vadd.f32 %v2067, 1.0
    %v2069 = vrcp.pop %v2068
    %v2070 = vmul.f32 1.0, %v2069
    %v2071 = vtanh.pop %v2064
    %v2072 = vmul.f32 %v2070, %v1949
    %2074 = vrot.lane.b32.xlu0 %v2071, 96
    %v2075 = vpop.permute.xlu0 %2074
    %v2077 = vmul.f32 %v2070, %v2075
    %2079 = vrot.lane.b32.xlu0 %v2077, 16
    %v2080 = vpop.permute.xlu0 %2079
    %v2082 = vadd.f32 %v2072, %v2080
    %v2083 = vtanh.pop %v2082
    %2085 = vrot.lane.b32.xlu0 %v2083, 32
    %v2086 = vpop.permute.xlu0 %2085
    %v2088 = vmul.f32 %v2070, %v2086
    %2089 = vset.pattern.permute.xlu0 4
    %2090 = vperm.xlu0 %2089, %v961
    %v2091 = vpop.permute.xlu0 %2090
    %v2093 = vmul.f32 %v2091, %v2088
    %v2096 = vunpack.c.l.s4 1966171168
    %v2097 = vunpack.c.0.s8 %v2096
    %v2098 = vlaneseq
    %v2099 = vshrl.u32 %v2098, 7
    %v2100 = vsub.s32 %v2097, %v2099
    %v2101 = vrot.slane %v2093, %v2100
    %v2102 = vcombine.high %v2101, %v2101
    %v2104 = vunpack.c.l.s4 1966171168
    %v2105 = vunpack.c.0.s8 %v2104
    %v2106 = vlaneseq
    %v2107 = vshrl.u32 %v2106, 7
    %v2108 = vsub.s32 %v2105, %v2107
    %v2109 = vrot.slane %v2101, %v2108
    %v2111 = vunpack.c.l.s4 1966171168
    %v2112 = vunpack.c.0.s8 %v2111
    %v2113 = vlaneseq
    %v2114 = vshrl.u32 %v2113, 7
    %v2115 = vsub.s32 %v2112, %v2114
    %v2116 = vrot.slane %v2102, %v2115
    %v2117 = vlaneseq
    %v2118 = vshrl.u32 %v2117, 7
    %v2119 = vsub.s32 0, %v2118
    %v2120 = vrot.slane %v2109, %v2119
    %v2121 = vlaneseq
    %v2122 = vshrl.u32 %v2121, 7
    %v2123 = vsub.s32 0, %v2122
    %v2124 = vrot.slane %v2116, %v2123
    %2125 = vrot.lane.b32.xlu0 %v2120, 80
    %v2126 = vpop.permute.xlu0 %2125
    %2127 = vrot.lane.b32.xlu0 %v2124, 80
    %v2128 = vpop.permute.xlu0 %2127
    %2131 = vst.msk [vmem:[#allocation3 + $0x4] sm:$0x1] %vm1527, %v2126
    %2132 = vst.msk [vmem:[#allocation3 + $0xc] sm:$0x1] %vm1527, %v2128
    %s2133 = scalar_lea.vmem %s5, 16
    %v2134 = vld [vmem:[%s2133] sm:$0xff]
    %v2135 = vld [vmem:[%s2133 + $0x8] sm:$0xff]
    %s2136 = scalar_lea.vmem %s6, 1
    %v2137 = vld [vmem:[%s2136] sm:$0x1]
    %v2139 = vlaneseq
    %v2140 = vshrl.u32 %v2139, 7
    %v2141 = vsub.s32 0, %v2140
    %v2142 = vrot.slane %v2137, %v2141
    %s2144 = scalar_lea.vmem %s7, 1
    %v2145 = vld [vmem:[%s2144] sm:$0x1]
    %v2147 = vlaneseq
    %v2148 = vshrl.u32 %v2147, 7
    %v2149 = vsub.s32 0, %v2148
    %v2150 = vrot.slane %v2145, %v2149
    %v2152 = vsel %vm64, %v2142, 0
    %2154 = vmatprep.subr.mxu0 0.0
    %2155 = vmatpush1.msra.mxu0 %v2134
    %2156 = vmatprep.subr.mxu0 0.0
    %2157 = vmatpush1.msra.mxu0 %v2135
    %2158 = vmatprep.subr.mxu0 0.0
    %2159 = vmatpush1.msra.mxu0 0.0
    %2160 = vmatprep.subr.mxu0 0.0
    %2161 = vmatpush1.msra.mxu0 0.0
    %2162 = vmatprep.subr.mxu0 0.0
    %2163 = vmatpush1.msra.mxu0 0.0
    %2164 = vmatprep.subr.mxu0 0.0
    %2165 = vmatpush1.msra.mxu0 0.0
    %2166 = vmatprep.subr.mxu0 0.0
    %2167 = vmatpush1.msra.mxu0 0.0
    %2168 = vmatprep.subr.mxu0 0.0
    %2169 = vmatpush1.msra.mxu0 0.0
    %2170 = vmatprep.subr.mxu0 0.0
    %2171 = vmatpush1.msra.mxu0 0.0
    %2172 = vmatprep.subr.mxu0 0.0
    %2173 = vmatpush1.msra.mxu0 0.0
    %2174 = vmatprep.subr.mxu0 0.0
    %2175 = vmatpush1.msra.mxu0 0.0
    %2176 = vmatprep.subr.mxu0 0.0
    %2177 = vmatpush1.msra.mxu0 0.0
    %2178 = vmatprep.subr.mxu0 0.0
    %2179 = vmatpush1.msra.mxu0 0.0
    %2180 = vmatprep.subr.mxu0 0.0
    %2181 = vmatpush1.msra.mxu0 0.0
    %2182 = vmatprep.subr.mxu0 0.0
    %2183 = vmatpush1.msra.mxu0 0.0
    %2184 = vmatprep.subr.mxu0 0.0
    %2185 = vmatpush1.msra.mxu0 0.0
    %2186 = vmatprep.subr.mxu0 0.0
    %2187 = vmatpush1.msra.mxu0 0.0
    %2188 = vmatprep.subr.mxu0 0.0
    %2189 = vmatpush1.msra.mxu0 0.0
    %2190 = vmatprep.subr.mxu0 0.0
    %2191 = vmatpush1.msra.mxu0 0.0
    %2192 = vmatprep.subr.mxu0 0.0
    %2193 = vmatpush1.msra.mxu0 0.0
    %2194 = vmatprep.subr.mxu0 0.0
    %2195 = vmatpush1.msra.mxu0 0.0
    %2196 = vmatprep.subr.mxu0 0.0
    %2197 = vmatpush1.msra.mxu0 0.0
    %2198 = vmatprep.subr.mxu0 0.0
    %2199 = vmatpush1.msra.mxu0 0.0
    %2200 = vmatprep.subr.mxu0 0.0
    %2201 = vmatpush1.msra.mxu0 0.0
    %2202 = vmatprep.subr.mxu0 0.0
    %2203 = vmatpush1.msra.mxu0 0.0
    %2204 = vmatprep.subr.mxu0 0.0
    %2205 = vmatpush1.msra.mxu0 0.0
    %2206 = vmatprep.subr.mxu0 0.0
    %2207 = vmatpush1.msra.mxu0 0.0
    %2208 = vmatprep.subr.mxu0 0.0
    %2209 = vmatpush1.msra.mxu0 0.0
    %2210 = vmatprep.subr.mxu0 0.0
    %2211 = vmatpush1.msra.mxu0 0.0
    %2212 = vmatprep.subr.mxu0 0.0
    %2213 = vmatpush1.msra.mxu0 0.0
    %2214 = vmatprep.subr.mxu0 0.0
    %2215 = vmatpush1.msra.mxu0 0.0
    %2216 = vmatprep.subr.mxu0 0.0
    %2217 = vmatpush1.msra.mxu0 0.0
    %2218 = vmatprep.mubr.f32.mxu0 0.0
    %2219 = vmatmul.mubr.f32.gmra.mrb[0].mxu0 %v2152
    %v2220 = vpop.f32.mrb[0].mxu0
    %v2221 = vadd.f32 0.0, %v2220
    %v2222 = vpop.f32.mrb[0].mxu0
    %2223 = vdwg.mxu0
    %2225 = vrot.lane.b32.xlu0 %v2221, 64
    %v2226 = vpop.permute.xlu0 %2225
    %v2228 = vadd.f32 %v1346, %v2226
    %v2229 = vxor.u32 %v2228, 2147483648
    %v2230 = vmul.f32 %v2229, 1.442695
    %v2231 = vpow.pop %v2230
    %v2232 = vadd.f32 %v2231, 1.0
    %v2233 = vrcp.pop %v2232
    %v2234 = vmul.f32 1.0, %v2233
    %v2235 = vtanh.pop %v2228
    %2236 = vrot.lane.b32.xlu0 %v2150, 80
    %v2237 = vpop.permute.xlu0 %2236
    %v2239 = vmul.f32 %v2234, %v2237
    %2241 = vrot.lane.b32.xlu0 %v2235, 96
    %v2242 = vpop.permute.xlu0 %2241
    %v2244 = vmul.f32 %v2234, %v2242
    %2246 = vrot.lane.b32.xlu0 %v2244, 16
    %v2247 = vpop.permute.xlu0 %2246
    %v2249 = vadd.f32 %v2239, %v2247
    %v2250 = vtanh.pop %v2249
    %2252 = vrot.lane.b32.xlu0 %v2250, 32
    %v2253 = vpop.permute.xlu0 %2252
    %v2255 = vmul.f32 %v2234, %v2253
    %v2256 = vmul.f32 %v2091, %v2255
    %2257 = vset.pattern.permute.xlu0 4
    %2258 = vperm.xlu0 %2257, %v1471
    %v2259 = vpop.permute.xlu0 %2258
    %v2261 = vmul.f32 %v2259, %v2142
    %2263 = vrot.lane.b32.xlu0 %v2261, 112
    %v2264 = vpop.permute.xlu0 %2263
    %v2266 = vadd.f32 %v2256, %v2264
    %v2267 = vmul.f32 %v2091, %v2249
    %v2268 = vmul.f32 %v2259, %v2150
    %2270 = vrot.lane.b32.xlu0 %v2268, 80
    %v2271 = vpop.permute.xlu0 %2270
    %v2273 = vadd.f32 %v2267, %v2271
    %v2276 = vunpack.c.l.s4 1966171168
    %v2277 = vunpack.c.0.s8 %v2276
    %v2278 = vlaneseq
    %v2279 = vshrl.u32 %v2278, 7
    %v2280 = vsub.s32 %v2277, %v2279
    %v2281 = vrot.slane %v2256, %v2280
    %v2282 = vcombine.high %v2281, %v2281
    %v2284 = vunpack.c.l.s4 1966171168
    %v2285 = vunpack.c.0.s8 %v2284
    %v2286 = vlaneseq
    %v2287 = vshrl.u32 %v2286, 7
    %v2288 = vsub.s32 %v2285, %v2287
    %v2289 = vrot.slane %v2281, %v2288
    %v2291 = vunpack.c.l.s4 1966171168
    %v2292 = vunpack.c.0.s8 %v2291
    %v2293 = vlaneseq
    %v2294 = vshrl.u32 %v2293, 7
    %v2295 = vsub.s32 %v2292, %v2294
    %v2296 = vrot.slane %v2282, %v2295
    %v2297 = vlaneseq
    %v2298 = vshrl.u32 %v2297, 7
    %v2299 = vsub.s32 0, %v2298
    %v2300 = vrot.slane %v2289, %v2299
    %v2301 = vlaneseq
    %v2302 = vshrl.u32 %v2301, 7
    %v2303 = vsub.s32 0, %v2302
    %v2304 = vrot.slane %v2296, %v2303
    %2305 = vrot.lane.b32.xlu0 %v2300, 32
    %v2306 = vpop.permute.xlu0 %2305
    %2307 = vrot.lane.b32.xlu0 %v2304, 32
    %v2308 = vpop.permute.xlu0 %2307
    %vm2311 = vcmask 254080
    %2312 = vst.msk [vmem:[#allocation3 + $0x4] sm:$0x1] %vm2311, %v2306
    %2313 = vst.msk [vmem:[#allocation3 + $0xc] sm:$0x1] %vm2311, %v2308
    %2315 = vrot.lane.b32.xlu0 %v2266, 16
    %v2316 = vpop.permute.xlu0 %2315
    %v2317 = vsel %vm64, %v2316, 0
    %2319 = vmatprep.subr.mxu0 0.0
    %2320 = vmatpush1.msra.mxu0 %v2134
    %2321 = vmatprep.subr.mxu0 0.0
    %2322 = vmatpush1.msra.mxu0 %v2135
    %2323 = vmatprep.subr.mxu0 0.0
    %2324 = vmatpush1.msra.mxu0 0.0
    %2325 = vmatprep.subr.mxu0 0.0
    %2326 = vmatpush1.msra.mxu0 0.0
    %2327 = vmatprep.subr.mxu0 0.0
    %2328 = vmatpush1.msra.mxu0 0.0
    %2329 = vmatprep.subr.mxu0 0.0
    %2330 = vmatpush1.msra.mxu0 0.0
    %2331 = vmatprep.subr.mxu0 0.0
    %2332 = vmatpush1.msra.mxu0 0.0
    %2333 = vmatprep.subr.mxu0 0.0
    %2334 = vmatpush1.msra.mxu0 0.0
    %2335 = vmatprep.subr.mxu0 0.0
    %2336 = vmatpush1.msra.mxu0 0.0
    %2337 = vmatprep.subr.mxu0 0.0
    %2338 = vmatpush1.msra.mxu0 0.0
    %2339 = vmatprep.subr.mxu0 0.0
    %2340 = vmatpush1.msra.mxu0 0.0
    %2341 = vmatprep.subr.mxu0 0.0
    %2342 = vmatpush1.msra.mxu0 0.0
    %2343 = vmatprep.subr.mxu0 0.0
    %2344 = vmatpush1.msra.mxu0 0.0
    %2345 = vmatprep.subr.mxu0 0.0
    %2346 = vmatpush1.msra.mxu0 0.0
    %2347 = vmatprep.subr.mxu0 0.0
    %2348 = vmatpush1.msra.mxu0 0.0
    %2349 = vmatprep.subr.mxu0 0.0
    %2350 = vmatpush1.msra.mxu0 0.0
    %2351 = vmatprep.subr.mxu0 0.0
    %2352 = vmatpush1.msra.mxu0 0.0
    %2353 = vmatprep.subr.mxu0 0.0
    %2354 = vmatpush1.msra.mxu0 0.0
    %2355 = vmatprep.subr.mxu0 0.0
    %2356 = vmatpush1.msra.mxu0 0.0
    %2357 = vmatprep.subr.mxu0 0.0
    %2358 = vmatpush1.msra.mxu0 0.0
    %2359 = vmatprep.subr.mxu0 0.0
    %2360 = vmatpush1.msra.mxu0 0.0
    %2361 = vmatprep.subr.mxu0 0.0
    %2362 = vmatpush1.msra.mxu0 0.0
    %2363 = vmatprep.subr.mxu0 0.0
    %2364 = vmatpush1.msra.mxu0 0.0
    %2365 = vmatprep.subr.mxu0 0.0
    %2366 = vmatpush1.msra.mxu0 0.0
    %2367 = vmatprep.subr.mxu0 0.0
    %2368 = vmatpush1.msra.mxu0 0.0
    %2369 = vmatprep.subr.mxu0 0.0
    %2370 = vmatpush1.msra.mxu0 0.0
    %2371 = vmatprep.subr.mxu0 0.0
    %2372 = vmatpush1.msra.mxu0 0.0
    %2373 = vmatprep.subr.mxu0 0.0
    %2374 = vmatpush1.msra.mxu0 0.0
    %2375 = vmatprep.subr.mxu0 0.0
    %2376 = vmatpush1.msra.mxu0 0.0
    %2377 = vmatprep.subr.mxu0 0.0
    %2378 = vmatpush1.msra.mxu0 0.0
    %2379 = vmatprep.subr.mxu0 0.0
    %2380 = vmatpush1.msra.mxu0 0.0
    %2381 = vmatprep.subr.mxu0 0.0
    %2382 = vmatpush1.msra.mxu0 0.0
    %2383 = vmatprep.mubr.f32.mxu0 0.0
    %2384 = vmatmul.mubr.f32.gmra.mrb[0].mxu0 %v2317
    %v2385 = vpop.f32.mrb[0].mxu0
    %v2386 = vadd.f32 0.0, %v2385
    %v2387 = vpop.f32.mrb[0].mxu0
    %2388 = vdwg.mxu0
    %2390 = vrot.lane.b32.xlu0 %v2386, 64
    %v2391 = vpop.permute.xlu0 %2390
    %v2393 = vadd.f32 %v1271, %v2391
    %v2394 = vxor.u32 %v2393, 2147483648
    %v2395 = vmul.f32 %v2394, 1.442695
    %v2396 = vpow.pop %v2395
    %v2397 = vadd.f32 %v2396, 1.0
    %v2398 = vrcp.pop %v2397
    %v2399 = vmul.f32 1.0, %v2398
    %v2400 = vtanh.pop %v2393
    %v2401 = vmul.f32 %v2399, %v2273
    %2403 = vrot.lane.b32.xlu0 %v2400, 96
    %v2404 = vpop.permute.xlu0 %2403
    %v2406 = vmul.f32 %v2399, %v2404
    %2408 = vrot.lane.b32.xlu0 %v2406, 16
    %v2409 = vpop.permute.xlu0 %2408
    %v2411 = vadd.f32 %v2401, %v2409
    %v2412 = vtanh.pop %v2411
    %2414 = vrot.lane.b32.xlu0 %v2412, 32
    %v2415 = vpop.permute.xlu0 %2414
    %v2417 = vmul.f32 %v2399, %v2415
    %v2418 = vmul.f32 %v1938, %v2417
    %v2419 = vmul.f32 %v1943, %v2266
    %v2420 = vadd.f32 %v2418, %v2419
    %v2421 = vmul.f32 %v1938, %v2411
    %v2422 = vmul.f32 %v1943, %v2273
    %v2423 = vadd.f32 %v2421, %v2422
    %v2426 = vunpack.c.l.s4 1966171168
    %v2427 = vunpack.c.0.s8 %v2426
    %v2428 = vlaneseq
    %v2429 = vshrl.u32 %v2428, 7
    %v2430 = vsub.s32 %v2427, %v2429
    %v2431 = vrot.slane %v2418, %v2430
    %v2432 = vcombine.high %v2431, %v2431
    %v2434 = vunpack.c.l.s4 1966171168
    %v2435 = vunpack.c.0.s8 %v2434
    %v2436 = vlaneseq
    %v2437 = vshrl.u32 %v2436, 7
    %v2438 = vsub.s32 %v2435, %v2437
    %v2439 = vrot.slane %v2431, %v2438
    %v2441 = vunpack.c.l.s4 1966171168
    %v2442 = vunpack.c.0.s8 %v2441
    %v2443 = vlaneseq
    %v2444 = vshrl.u32 %v2443, 7
    %v2445 = vsub.s32 %v2442, %v2444
    %v2446 = vrot.slane %v2432, %v2445
    %v2447 = vlaneseq
    %v2448 = vshrl.u32 %v2447, 7
    %v2449 = vsub.s32 0, %v2448
    %v2450 = vrot.slane %v2439, %v2449
    %v2451 = vlaneseq
    %v2452 = vshrl.u32 %v2451, 7
    %v2453 = vsub.s32 0, %v2452
    %v2454 = vrot.slane %v2446, %v2453
    %2455 = vrot.lane.b32.xlu0 %v2450, 32
    %v2456 = vpop.permute.xlu0 %2455
    %2457 = vrot.lane.b32.xlu0 %v2454, 32
    %v2458 = vpop.permute.xlu0 %2457
    %2461 = vst.msk [vmem:[#allocation3 + $0x3] sm:$0x1] %vm2311, %v2456
    %2462 = vst.msk [vmem:[#allocation3 + $0xb] sm:$0x1] %vm2311, %v2458
    %2464 = vrot.lane.b32.xlu0 %v2420, 16
    %v2465 = vpop.permute.xlu0 %2464
    %v2466 = vsel %vm64, %v2465, 0
    %2468 = vmatprep.subr.mxu0 0.0
    %2469 = vmatpush1.msra.mxu0 %v2134
    %2470 = vmatprep.subr.mxu0 0.0
    %2471 = vmatpush1.msra.mxu0 %v2135
    %2472 = vmatprep.subr.mxu0 0.0
    %2473 = vmatpush1.msra.mxu0 0.0
    %2474 = vmatprep.subr.mxu0 0.0
    %2475 = vmatpush1.msra.mxu0 0.0
    %2476 = vmatprep.subr.mxu0 0.0
    %2477 = vmatpush1.msra.mxu0 0.0
    %2478 = vmatprep.subr.mxu0 0.0
    %2479 = vmatpush1.msra.mxu0 0.0
    %2480 = vmatprep.subr.mxu0 0.0
    %2481 = vmatpush1.msra.mxu0 0.0
    %2482 = vmatprep.subr.mxu0 0.0
    %2483 = vmatpush1.msra.mxu0 0.0
    %2484 = vmatprep.subr.mxu0 0.0
    %2485 = vmatpush1.msra.mxu0 0.0
    %2486 = vmatprep.subr.mxu0 0.0
    %2487 = vmatpush1.msra.mxu0 0.0
    %2488 = vmatprep.subr.mxu0 0.0
    %2489 = vmatpush1.msra.mxu0 0.0
    %2490 = vmatprep.subr.mxu0 0.0
    %2491 = vmatpush1.msra.mxu0 0.0
    %2492 = vmatprep.subr.mxu0 0.0
    %2493 = vmatpush1.msra.mxu0 0.0
    %2494 = vmatprep.subr.mxu0 0.0
    %2495 = vmatpush1.msra.mxu0 0.0
    %2496 = vmatprep.subr.mxu0 0.0
    %2497 = vmatpush1.msra.mxu0 0.0
    %2498 = vmatprep.subr.mxu0 0.0
    %2499 = vmatpush1.msra.mxu0 0.0
    %2500 = vmatprep.subr.mxu0 0.0
    %2501 = vmatpush1.msra.mxu0 0.0
    %2502 = vmatprep.subr.mxu0 0.0
    %2503 = vmatpush1.msra.mxu0 0.0
    %2504 = vmatprep.subr.mxu0 0.0
    %2505 = vmatpush1.msra.mxu0 0.0
    %2506 = vmatprep.subr.mxu0 0.0
    %2507 = vmatpush1.msra.mxu0 0.0
    %2508 = vmatprep.subr.mxu0 0.0
    %2509 = vmatpush1.msra.mxu0 0.0
    %2510 = vmatprep.subr.mxu0 0.0
    %2511 = vmatpush1.msra.mxu0 0.0
    %2512 = vmatprep.subr.mxu0 0.0
    %2513 = vmatpush1.msra.mxu0 0.0
    %2514 = vmatprep.subr.mxu0 0.0
    %2515 = vmatpush1.msra.mxu0 0.0
    %2516 = vmatprep.subr.mxu0 0.0
    %2517 = vmatpush1.msra.mxu0 0.0
    %2518 = vmatprep.subr.mxu0 0.0
    %2519 = vmatpush1.msra.mxu0 0.0
    %2520 = vmatprep.subr.mxu0 0.0
    %2521 = vmatpush1.msra.mxu0 0.0
    %2522 = vmatprep.subr.mxu0 0.0
    %2523 = vmatpush1.msra.mxu0 0.0
    %2524 = vmatprep.subr.mxu0 0.0
    %2525 = vmatpush1.msra.mxu0 0.0
    %2526 = vmatprep.subr.mxu0 0.0
    %2527 = vmatpush1.msra.mxu0 0.0
    %2528 = vmatprep.subr.mxu0 0.0
    %2529 = vmatpush1.msra.mxu0 0.0
    %2530 = vmatprep.subr.mxu0 0.0
    %2531 = vmatpush1.msra.mxu0 0.0
    %2532 = vmatprep.mubr.f32.mxu0 0.0
    %2533 = vmatmul.mubr.f32.gmra.mrb[0].mxu0 %v2466
    %v2534 = vpop.f32.mrb[0].mxu0
    %v2535 = vadd.f32 0.0, %v2534
    %v2536 = vpop.f32.mrb[0].mxu0
    %2537 = vdwg.mxu0
    %2539 = vrot.lane.b32.xlu0 %v2535, 64
    %v2540 = vpop.permute.xlu0 %2539
    %v2542 = vadd.f32 %v1196, %v2540
    %v2543 = vxor.u32 %v2542, 2147483648
    %v2544 = vmul.f32 %v2543, 1.442695
    %v2545 = vpow.pop %v2544
    %v2546 = vadd.f32 %v2545, 1.0
    %v2547 = vrcp.pop %v2546
    %v2548 = vmul.f32 1.0, %v2547
    %v2549 = vtanh.pop %v2542
    %v2550 = vmul.f32 %v2548, %v2423
    %2552 = vrot.lane.b32.xlu0 %v2549, 96
    %v2553 = vpop.permute.xlu0 %2552
    %v2555 = vmul.f32 %v2548, %v2553
    %2557 = vrot.lane.b32.xlu0 %v2555, 16
    %v2558 = vpop.permute.xlu0 %2557
    %v2560 = vadd.f32 %v2550, %v2558
    %v2561 = vtanh.pop %v2560
    %2563 = vrot.lane.b32.xlu0 %v2561, 32
    %v2564 = vpop.permute.xlu0 %2563
    %v2566 = vmul.f32 %v2548, %v2564
    %v2567 = vmul.f32 %v1785, %v2566
    %v2568 = vmul.f32 %v1790, %v2420
    %v2569 = vadd.f32 %v2567, %v2568
    %v2570 = vmul.f32 %v1785, %v2560
    %v2571 = vmul.f32 %v1790, %v2423
    %v2572 = vadd.f32 %v2570, %v2571
    %v2575 = vunpack.c.l.s4 1966171168
    %v2576 = vunpack.c.0.s8 %v2575
    %v2577 = vlaneseq
    %v2578 = vshrl.u32 %v2577, 7
    %v2579 = vsub.s32 %v2576, %v2578
    %v2580 = vrot.slane %v2567, %v2579
    %v2581 = vcombine.high %v2580, %v2580
    %v2583 = vunpack.c.l.s4 1966171168
    %v2584 = vunpack.c.0.s8 %v2583
    %v2585 = vlaneseq
    %v2586 = vshrl.u32 %v2585, 7
    %v2587 = vsub.s32 %v2584, %v2586
    %v2588 = vrot.slane %v2580, %v2587
    %v2590 = vunpack.c.l.s4 1966171168
    %v2591 = vunpack.c.0.s8 %v2590
    %v2592 = vlaneseq
    %v2593 = vshrl.u32 %v2592, 7
    %v2594 = vsub.s32 %v2591, %v2593
    %v2595 = vrot.slane %v2581, %v2594
    %v2596 = vlaneseq
    %v2597 = vshrl.u32 %v2596, 7
    %v2598 = vsub.s32 0, %v2597
    %v2599 = vrot.slane %v2588, %v2598
    %v2600 = vlaneseq
    %v2601 = vshrl.u32 %v2600, 7
    %v2602 = vsub.s32 0, %v2601
    %v2603 = vrot.slane %v2595, %v2602
    %2604 = vrot.lane.b32.xlu0 %v2599, 32
    %v2605 = vpop.permute.xlu0 %2604
    %2606 = vrot.lane.b32.xlu0 %v2603, 32
    %v2607 = vpop.permute.xlu0 %2606
    %2610 = vst.msk [vmem:[#allocation3 + $0x2] sm:$0x1] %vm2311, %v2605
    %2611 = vst.msk [vmem:[#allocation3 + $0xa] sm:$0x1] %vm2311, %v2607
    %2613 = vrot.lane.b32.xlu0 %v2569, 16
    %v2614 = vpop.permute.xlu0 %2613
    %v2615 = vsel %vm64, %v2614, 0
    %2617 = vmatprep.subr.mxu0 0.0
    %2618 = vmatpush1.msra.mxu0 %v2134
    %2619 = vmatprep.subr.mxu0 0.0
    %2620 = vmatpush1.msra.mxu0 %v2135
    %2621 = vmatprep.subr.mxu0 0.0
    %2622 = vmatpush1.msra.mxu0 0.0
    %2623 = vmatprep.subr.mxu0 0.0
    %2624 = vmatpush1.msra.mxu0 0.0
    %2625 = vmatprep.subr.mxu0 0.0
    %2626 = vmatpush1.msra.mxu0 0.0
    %2627 = vmatprep.subr.mxu0 0.0
    %2628 = vmatpush1.msra.mxu0 0.0
    %2629 = vmatprep.subr.mxu0 0.0
    %2630 = vmatpush1.msra.mxu0 0.0
    %2631 = vmatprep.subr.mxu0 0.0
    %2632 = vmatpush1.msra.mxu0 0.0
    %2633 = vmatprep.subr.mxu0 0.0
    %2634 = vmatpush1.msra.mxu0 0.0
    %2635 = vmatprep.subr.mxu0 0.0
    %2636 = vmatpush1.msra.mxu0 0.0
    %2637 = vmatprep.subr.mxu0 0.0
    %2638 = vmatpush1.msra.mxu0 0.0
    %2639 = vmatprep.subr.mxu0 0.0
    %2640 = vmatpush1.msra.mxu0 0.0
    %2641 = vmatprep.subr.mxu0 0.0
    %2642 = vmatpush1.msra.mxu0 0.0
    %2643 = vmatprep.subr.mxu0 0.0
    %2644 = vmatpush1.msra.mxu0 0.0
    %2645 = vmatprep.subr.mxu0 0.0
    %2646 = vmatpush1.msra.mxu0 0.0
    %2647 = vmatprep.subr.mxu0 0.0
    %2648 = vmatpush1.msra.mxu0 0.0
    %2649 = vmatprep.subr.mxu0 0.0
    %2650 = vmatpush1.msra.mxu0 0.0
    %2651 = vmatprep.subr.mxu0 0.0
    %2652 = vmatpush1.msra.mxu0 0.0
    %2653 = vmatprep.subr.mxu0 0.0
    %2654 = vmatpush1.msra.mxu0 0.0
    %2655 = vmatprep.subr.mxu0 0.0
    %2656 = vmatpush1.msra.mxu0 0.0
    %2657 = vmatprep.subr.mxu0 0.0
    %2658 = vmatpush1.msra.mxu0 0.0
    %2659 = vmatprep.subr.mxu0 0.0
    %2660 = vmatpush1.msra.mxu0 0.0
    %2661 = vmatprep.subr.mxu0 0.0
    %2662 = vmatpush1.msra.mxu0 0.0
    %2663 = vmatprep.subr.mxu0 0.0
    %2664 = vmatpush1.msra.mxu0 0.0
    %2665 = vmatprep.subr.mxu0 0.0
    %2666 = vmatpush1.msra.mxu0 0.0
    %2667 = vmatprep.subr.mxu0 0.0
    %2668 = vmatpush1.msra.mxu0 0.0
    %2669 = vmatprep.subr.mxu0 0.0
    %2670 = vmatpush1.msra.mxu0 0.0
    %2671 = vmatprep.subr.mxu0 0.0
    %2672 = vmatpush1.msra.mxu0 0.0
    %2673 = vmatprep.subr.mxu0 0.0
    %2674 = vmatpush1.msra.mxu0 0.0
    %2675 = vmatprep.subr.mxu0 0.0
    %2676 = vmatpush1.msra.mxu0 0.0
    %2677 = vmatprep.subr.mxu0 0.0
    %2678 = vmatpush1.msra.mxu0 0.0
    %2679 = vmatprep.subr.mxu0 0.0
    %2680 = vmatpush1.msra.mxu0 0.0
    %2681 = vmatprep.mubr.f32.mxu0 0.0
    %2682 = vmatmul.mubr.f32.gmra.mrb[0].mxu0 %v2615
    %v2683 = vpop.f32.mrb[0].mxu0
    %v2684 = vadd.f32 0.0, %v2683
    %v2685 = vpop.f32.mrb[0].mxu0
    %2686 = vdwg.mxu0
    %2688 = vrot.lane.b32.xlu0 %v2684, 64
    %v2689 = vpop.permute.xlu0 %2688
    %v2691 = vadd.f32 %v1121, %v2689
    %v2692 = vxor.u32 %v2691, 2147483648
    %v2693 = vmul.f32 %v2692, 1.442695
    %v2694 = vpow.pop %v2693
    %v2695 = vadd.f32 %v2694, 1.0
    %v2696 = vrcp.pop %v2695
    %v2697 = vmul.f32 1.0, %v2696
    %v2698 = vtanh.pop %v2691
    %v2699 = vmul.f32 %v2697, %v2572
    %2701 = vrot.lane.b32.xlu0 %v2698, 96
    %v2702 = vpop.permute.xlu0 %2701
    %v2704 = vmul.f32 %v2697, %v2702
    %2706 = vrot.lane.b32.xlu0 %v2704, 16
    %v2707 = vpop.permute.xlu0 %2706
    %v2709 = vadd.f32 %v2699, %v2707
    %v2710 = vtanh.pop %v2709
    %2712 = vrot.lane.b32.xlu0 %v2710, 32
    %v2713 = vpop.permute.xlu0 %2712
    %v2715 = vmul.f32 %v2697, %v2713
    %v2716 = vmul.f32 %v1632, %v2715
    %v2717 = vmul.f32 %v1637, %v2569
    %v2718 = vadd.f32 %v2716, %v2717
    %v2719 = vmul.f32 %v1632, %v2709
    %v2720 = vmul.f32 %v1637, %v2572
    %v2721 = vadd.f32 %v2719, %v2720
    %v2724 = vunpack.c.l.s4 1966171168
    %v2725 = vunpack.c.0.s8 %v2724
    %v2726 = vlaneseq
    %v2727 = vshrl.u32 %v2726, 7
    %v2728 = vsub.s32 %v2725, %v2727
    %v2729 = vrot.slane %v2716, %v2728
    %v2730 = vcombine.high %v2729, %v2729
    %v2732 = vunpack.c.l.s4 1966171168
    %v2733 = vunpack.c.0.s8 %v2732
    %v2734 = vlaneseq
    %v2735 = vshrl.u32 %v2734, 7
    %v2736 = vsub.s32 %v2733, %v2735
    %v2737 = vrot.slane %v2729, %v2736
    %v2739 = vunpack.c.l.s4 1966171168
    %v2740 = vunpack.c.0.s8 %v2739
    %v2741 = vlaneseq
    %v2742 = vshrl.u32 %v2741, 7
    %v2743 = vsub.s32 %v2740, %v2742
    %v2744 = vrot.slane %v2730, %v2743
    %v2745 = vlaneseq
    %v2746 = vshrl.u32 %v2745, 7
    %v2747 = vsub.s32 0, %v2746
    %v2748 = vrot.slane %v2737, %v2747
    %v2749 = vlaneseq
    %v2750 = vshrl.u32 %v2749, 7
    %v2751 = vsub.s32 0, %v2750
    %v2752 = vrot.slane %v2744, %v2751
    %2753 = vrot.lane.b32.xlu0 %v2748, 32
    %v2754 = vpop.permute.xlu0 %2753
    %2755 = vrot.lane.b32.xlu0 %v2752, 32
    %v2756 = vpop.permute.xlu0 %2755
    %2759 = vst.msk [vmem:[#allocation3 + $0x1] sm:$0x1] %vm2311, %v2754
    %2760 = vst.msk [vmem:[#allocation3 + $0x9] sm:$0x1] %vm2311, %v2756
    %2762 = vrot.lane.b32.xlu0 %v2718, 16
    %v2763 = vpop.permute.xlu0 %2762
    %v2764 = vsel %vm64, %v2763, 0
    %2766 = vmatprep.subr.mxu0 0.0
    %2767 = vmatpush1.msra.mxu0 %v2134
    %2768 = vmatprep.subr.mxu0 0.0
    %2769 = vmatpush1.msra.mxu0 %v2135
    %2770 = vmatprep.subr.mxu0 0.0
    %2771 = vmatpush1.msra.mxu0 0.0
    %2772 = vmatprep.subr.mxu0 0.0
    %2773 = vmatpush1.msra.mxu0 0.0
    %2774 = vmatprep.subr.mxu0 0.0
    %2775 = vmatpush1.msra.mxu0 0.0
    %2776 = vmatprep.subr.mxu0 0.0
    %2777 = vmatpush1.msra.mxu0 0.0
    %2778 = vmatprep.subr.mxu0 0.0
    %2779 = vmatpush1.msra.mxu0 0.0
    %2780 = vmatprep.subr.mxu0 0.0
    %2781 = vmatpush1.msra.mxu0 0.0
    %2782 = vmatprep.subr.mxu0 0.0
    %2783 = vmatpush1.msra.mxu0 0.0
    %2784 = vmatprep.subr.mxu0 0.0
    %2785 = vmatpush1.msra.mxu0 0.0
    %2786 = vmatprep.subr.mxu0 0.0
    %2787 = vmatpush1.msra.mxu0 0.0
    %2788 = vmatprep.subr.mxu0 0.0
    %2789 = vmatpush1.msra.mxu0 0.0
    %2790 = vmatprep.subr.mxu0 0.0
    %2791 = vmatpush1.msra.mxu0 0.0
    %2792 = vmatprep.subr.mxu0 0.0
    %2793 = vmatpush1.msra.mxu0 0.0
    %2794 = vmatprep.subr.mxu0 0.0
    %2795 = vmatpush1.msra.mxu0 0.0
    %2796 = vmatprep.subr.mxu0 0.0
    %2797 = vmatpush1.msra.mxu0 0.0
    %2798 = vmatprep.subr.mxu0 0.0
    %2799 = vmatpush1.msra.mxu0 0.0
    %2800 = vmatprep.subr.mxu0 0.0
    %2801 = vmatpush1.msra.mxu0 0.0
    %2802 = vmatprep.subr.mxu0 0.0
    %2803 = vmatpush1.msra.mxu0 0.0
    %2804 = vmatprep.subr.mxu0 0.0
    %2805 = vmatpush1.msra.mxu0 0.0
    %2806 = vmatprep.subr.mxu0 0.0
    %2807 = vmatpush1.msra.mxu0 0.0
    %2808 = vmatprep.subr.mxu0 0.0
    %2809 = vmatpush1.msra.mxu0 0.0
    %2810 = vmatprep.subr.mxu0 0.0
    %2811 = vmatpush1.msra.mxu0 0.0
    %2812 = vmatprep.subr.mxu0 0.0
    %2813 = vmatpush1.msra.mxu0 0.0
    %2814 = vmatprep.subr.mxu0 0.0
    %2815 = vmatpush1.msra.mxu0 0.0
    %2816 = vmatprep.subr.mxu0 0.0
    %2817 = vmatpush1.msra.mxu0 0.0
    %2818 = vmatprep.subr.mxu0 0.0
    %2819 = vmatpush1.msra.mxu0 0.0
    %2820 = vmatprep.subr.mxu0 0.0
    %2821 = vmatpush1.msra.mxu0 0.0
    %2822 = vmatprep.subr.mxu0 0.0
    %2823 = vmatpush1.msra.mxu0 0.0
    %2824 = vmatprep.subr.mxu0 0.0
    %2825 = vmatpush1.msra.mxu0 0.0
    %2826 = vmatprep.subr.mxu0 0.0
    %2827 = vmatpush1.msra.mxu0 0.0
    %2828 = vmatprep.subr.mxu0 0.0
    %2829 = vmatpush1.msra.mxu0 0.0
    %2830 = vmatprep.mubr.f32.mxu0 0.0
    %2831 = vmatmul.mubr.f32.gmra.mrb[0].mxu0 %v2764
    %v2832 = vpop.f32.mrb[0].mxu0
    %v2833 = vadd.f32 0.0, %v2832
    %v2834 = vpop.f32.mrb[0].mxu0
    %2835 = vdwg.mxu0
    %2837 = vrot.lane.b32.xlu0 %v2833, 64
    %v2838 = vpop.permute.xlu0 %2837
    %v2840 = vadd.f32 %v1047, %v2838
    %v2841 = vxor.u32 %v2840, 2147483648
    %v2842 = vmul.f32 %v2841, 1.442695
    %v2843 = vpow.pop %v2842
    %v2844 = vadd.f32 %v2843, 1.0
    %v2845 = vrcp.pop %v2844
    %v2846 = vmul.f32 1.0, %v2845
    %v2847 = vtanh.pop %v2840
    %v2848 = vmul.f32 %v2846, %v2721
    %2850 = vrot.lane.b32.xlu0 %v2847, 96
    %v2851 = vpop.permute.xlu0 %2850
    %v2853 = vmul.f32 %v2846, %v2851
    %2855 = vrot.lane.b32.xlu0 %v2853, 16
    %v2856 = vpop.permute.xlu0 %2855
    %v2858 = vadd.f32 %v2848, %v2856
    %v2859 = vtanh.pop %v2858
    %2861 = vrot.lane.b32.xlu0 %v2859, 32
    %v2862 = vpop.permute.xlu0 %2861
    %v2864 = vmul.f32 %v2846, %v2862
    %v2865 = vmul.f32 %v1468, %v2864
    %v2868 = vunpack.c.l.s4 1966171168
    %v2869 = vunpack.c.0.s8 %v2868
    %v2870 = vlaneseq
    %v2871 = vshrl.u32 %v2870, 7
    %v2872 = vsub.s32 %v2869, %v2871
    %v2873 = vrot.slane %v2865, %v2872
    %v2874 = vcombine.high %v2873, %v2873
    %v2876 = vunpack.c.l.s4 1966171168
    %v2877 = vunpack.c.0.s8 %v2876
    %v2878 = vlaneseq
    %v2879 = vshrl.u32 %v2878, 7
    %v2880 = vsub.s32 %v2877, %v2879
    %v2881 = vrot.slane %v2873, %v2880
    %v2883 = vunpack.c.l.s4 1966171168
    %v2884 = vunpack.c.0.s8 %v2883
    %v2885 = vlaneseq
    %v2886 = vshrl.u32 %v2885, 7
    %v2887 = vsub.s32 %v2884, %v2886
    %v2888 = vrot.slane %v2874, %v2887
    %v2889 = vlaneseq
    %v2890 = vshrl.u32 %v2889, 7
    %v2891 = vsub.s32 0, %v2890
    %v2892 = vrot.slane %v2881, %v2891
    %v2893 = vlaneseq
    %v2894 = vshrl.u32 %v2893, 7
    %v2895 = vsub.s32 0, %v2894
    %v2896 = vrot.slane %v2888, %v2895
    %2897 = vrot.lane.b32.xlu0 %v2892, 32
    %v2898 = vpop.permute.xlu0 %2897
    %2899 = vrot.lane.b32.xlu0 %v2896, 32
    %v2900 = vpop.permute.xlu0 %2899
    %2903 = vst.msk [vmem:[#allocation3] sm:$0x1] %vm2311, %v2898
    %2904 = vst.msk [vmem:[#allocation3 + $0x8] sm:$0x1] %vm2311, %v2900
    %v2905 = vld [vmem:[#allocation3] sm:$0x1f]
    %v2906 = vld [vmem:[#allocation3 + $0x8] sm:$0x1f]
    %v2907 = vld [vmem:[%s9] sm:$0x3]
    %vm2908 = vcmask 258048
    %v2909 = vsel %vm2908, %v2905, 0.0
    %v2910 = vrot.slane %v2909, 4
    %v2911 = vadd.f32 %v2909, %v2910
    %v2912 = vrot.slane %v2911, 2
    %v2913 = vadd.f32 %v2911, %v2912
    %v2914 = vrot.slane %v2913, 1
    %v2915 = vadd.f32 %v2913, %v2914
    %v2916 = vsel %vm2908, %v2906, 0.0
    %v2917 = vrot.slane %v2916, 4
    %v2918 = vadd.f32 %v2916, %v2917
    %v2919 = vrot.slane %v2918, 2
    %v2920 = vadd.f32 %v2918, %v2919
    %v2921 = vrot.slane %v2920, 1
    %v2922 = vadd.f32 %v2920, %v2921
    %2924 = vset.pattern.permute.xlu0 0
    %2925 = vperm.xlu0 %2924, %v2907
    %v2926 = vpop.permute.xlu0 %2925
    %v2927 = vrot.slane %v2926, 1
    %v2930 = vmul.f32 %v2915, %v2926
    %v2931 = vmul.f32 %v2922, %v2927
    %v2932 = vld [vmem:[%s10] sm:$0xff]
    %v2933 = vld [vmem:[%s10 + $0x8] sm:$0xff]
    %v2934 = vld [vmem:[%s10 + $0x10] sm:$0xff]
    %v2935 = vld [vmem:[%s10 + $0x18] sm:$0xff]
    %v2936 = vld [vmem:[%s11] sm:$0x1]
    %v2938 = vlaneseq
    %v2939 = vshrl.u32 %v2938, 7
    %v2940 = vsub.s32 0, %v2939
    %v2941 = vrot.slane %v2936, %v2940
    %v2945 = vrot.slane %v2931, 7
    %v2946 = vsel %vm975, %v2945, %v2930
    %vm2947 = vcmask 261120
    %v2948 = vsel %vm2947, %v2946, 0
    %2950 = vmatprep.subr.mxu0 0.0
    %2951 = vmatpush1.msra.mxu0 %v2932
    %2952 = vmatprep.subr.mxu0 0.0
    %2953 = vmatpush1.msra.mxu0 %v2933
    %2954 = vmatprep.subr.mxu0 0.0
    %2955 = vmatpush1.msra.mxu0 %v2934
    %2956 = vmatprep.subr.mxu0 0.0
    %2957 = vmatpush1.msra.mxu0 %v2935
    %2958 = vmatprep.subr.mxu0 0.0
    %2959 = vmatpush1.msra.mxu0 0.0
    %2960 = vmatprep.subr.mxu0 0.0
    %2961 = vmatpush1.msra.mxu0 0.0
    %2962 = vmatprep.subr.mxu0 0.0
    %2963 = vmatpush1.msra.mxu0 0.0
    %2964 = vmatprep.subr.mxu0 0.0
    %2965 = vmatpush1.msra.mxu0 0.0
    %2966 = vmatprep.subr.mxu0 0.0
    %2967 = vmatpush1.msra.mxu0 0.0
    %2968 = vmatprep.subr.mxu0 0.0
    %2969 = vmatpush1.msra.mxu0 0.0
    %2970 = vmatprep.subr.mxu0 0.0
    %2971 = vmatpush1.msra.mxu0 0.0
    %2972 = vmatprep.subr.mxu0 0.0
    %2973 = vmatpush1.msra.mxu0 0.0
    %2974 = vmatprep.subr.mxu0 0.0
    %2975 = vmatpush1.msra.mxu0 0.0
    %2976 = vmatprep.subr.mxu0 0.0
    %2977 = vmatpush1.msra.mxu0 0.0
    %2978 = vmatprep.subr.mxu0 0.0
    %2979 = vmatpush1.msra.mxu0 0.0
    %2980 = vmatprep.subr.mxu0 0.0
    %2981 = vmatpush1.msra.mxu0 0.0
    %2982 = vmatprep.subr.mxu0 0.0
    %2983 = vmatpush1.msra.mxu0 0.0
    %2984 = vmatprep.subr.mxu0 0.0
    %2985 = vmatpush1.msra.mxu0 0.0
    %2986 = vmatprep.subr.mxu0 0.0
    %2987 = vmatpush1.msra.mxu0 0.0
    %2988 = vmatprep.subr.mxu0 0.0
    %2989 = vmatpush1.msra.mxu0 0.0
    %2990 = vmatprep.subr.mxu0 0.0
    %2991 = vmatpush1.msra.mxu0 0.0
    %2992 = vmatprep.subr.mxu0 0.0
    %2993 = vmatpush1.msra.mxu0 0.0
    %2994 = vmatprep.subr.mxu0 0.0
    %2995 = vmatpush1.msra.mxu0 0.0
    %2996 = vmatprep.subr.mxu0 0.0
    %2997 = vmatpush1.msra.mxu0 0.0
    %2998 = vmatprep.subr.mxu0 0.0
    %2999 = vmatpush1.msra.mxu0 0.0
    %3000 = vmatprep.subr.mxu0 0.0
    %3001 = vmatpush1.msra.mxu0 0.0
    %3002 = vmatprep.subr.mxu0 0.0
    %3003 = vmatpush1.msra.mxu0 0.0
    %3004 = vmatprep.subr.mxu0 0.0
    %3005 = vmatpush1.msra.mxu0 0.0
    %3006 = vmatprep.subr.mxu0 0.0
    %3007 = vmatpush1.msra.mxu0 0.0
    %3008 = vmatprep.subr.mxu0 0.0
    %3009 = vmatpush1.msra.mxu0 0.0
    %3010 = vmatprep.subr.mxu0 0.0
    %3011 = vmatpush1.msra.mxu0 0.0
    %3012 = vmatprep.subr.mxu0 0.0
    %3013 = vmatpush1.msra.mxu0 0.0
    %3014 = vmatprep.mubr.f32.mxu0 0.0
    %3015 = vmatmul.mubr.f32.gmra.mrb[0].mxu0 %v2948
    %v3016 = vpop.f32.mrb[0].mxu0
    %v3017 = vadd.f32 %v2941, %v3016
    %v3018 = vpop.f32.mrb[0].mxu0
    %3019 = vdwg.mxu0
    %v3020 = vtanh.pop %v3017
    %v3023 = vunpack.c.l.s4 1966171168
    %v3024 = vunpack.c.0.s8 %v3023
    %v3025 = vlaneseq
    %v3026 = vshrl.u32 %v3025, 7
    %v3027 = vsub.s32 %v3024, %v3026
    %v3028 = vrot.slane %v3020, %v3027
    %v3029 = vcombine.high %v3028, %v3028
    %v3031 = vunpack.c.l.s4 1966171168
    %v3032 = vunpack.c.0.s8 %v3031
    %v3033 = vlaneseq
    %v3034 = vshrl.u32 %v3033, 7
    %v3035 = vsub.s32 %v3032, %v3034
    %v3036 = vrot.slane %v3028, %v3035
    %v3038 = vunpack.c.l.s4 1966171168
    %v3039 = vunpack.c.0.s8 %v3038
    %v3040 = vlaneseq
    %v3041 = vshrl.u32 %v3040, 7
    %v3042 = vsub.s32 %v3039, %v3041
    %v3043 = vrot.slane %v3029, %v3042
    %v3044 = vlaneseq
    %v3045 = vshrl.u32 %v3044, 7
    %v3046 = vsub.s32 0, %v3045
    %v3047 = vrot.slane %v3036, %v3046
    %v3048 = vlaneseq
    %v3049 = vshrl.u32 %v3048, 7
    %v3050 = vsub.s32 0, %v3049
    %v3051 = vrot.slane %v3043, %v3050
    %v3054 = vmul.f32 %v2905, %v3047
    %v3055 = vmul.f32 %v2906, %v3051
    %v3056 = vsel %vm2908, %v3054, 0.0
    %3057 = vadd.xlane.f32.xlu0 %v3056
    %v3058 = vpop.xlane.xlu0 %3057
    %v3059 = vsel %vm2908, %v3055, 0.0
    %3060 = vadd.xlane.f32.xlu0 %v3059
    %v3061 = vpop.xlane.xlu0 %3060
    %v3062 = vld [vmem:[%s12] sm:$0x1]
    %v3064 = vlaneseq
    %v3065 = vshrl.u32 %v3064, 7
    %v3066 = vsub.s32 0, %v3065
    %v3067 = vrot.slane %v3062, %v3066
    %v3069 = vmul.f32 %v2905, %v3067
    %v3070 = vmul.f32 %v2906, %v3067
    %v3071 = vsel %vm2908, %v3069, 0.0
    %3072 = vadd.xlane.f32.xlu0 %v3071
    %v3073 = vpop.xlane.xlu0 %3072
    %v3074 = vsel %vm2908, %v3070, 0.0
    %3075 = vadd.xlane.f32.xlu0 %v3074
    %v3076 = vpop.xlane.xlu0 %3075
    %v3077 = vadd.f32 %v3073, %v3058
    %v3078 = vadd.f32 %v3076, %v3061
    %v3079 = vld [vmem:[#allocation4] sm:$0x1]
    %v3081 = vlaneseq
    %v3082 = vshrl.u32 %v3081, 7
    %v3083 = vsub.s32 0, %v3082
    %v3084 = vrot.slane %v3079, %v3083
    %3085 = vset.pattern.permute.xlu0 0
    %3086 = vperm.xlu0 %3085, %v3084
    %v3087 = vpop.permute.xlu0 %3086
    %v3089 = vadd.f32 %v3077, %v3087
    %v3090 = vadd.f32 %v3078, %v3087
    %v3093 = vlaneseq
    %v3094 = vand.u32 %v3093, 127
    %v3095 = vlaneseq
    %v3096 = vshrl.u32 %v3095, 7
    %v3097 = vsub.s32 %v3094, %v3096
    %v3098 = vrot.slane %v3089, %v3097
    %v3099 = vlaneseq
    %v3100 = vshrl.u32 %v3099, 7
    %v3101 = vsub.s32 %v3094, %v3100
    %v3102 = vrot.slane %v3090, %v3101
    %v3103 = vsel %vm975, %v3102, %v3098
    %vm3105 = vcmask 33792
    %3106 = vst.msk [vmem:[#allocation5] sm:$0x3] %vm3105, %v3103
    // Predicated region
    $region58: #{tpu_custom_call.1} parent=1 // pred_check
      _
    $region59: #{tpu_custom_call.1} parent=1 // pred_check_branch
      %3108 = sbr.rel (0) target = $region61
    $region60: #{tpu_custom_call.1} parent=1 // pred_region
      %s3110 = ssub.s32 32, 32
      %3111 = vsyncadd [#allocation6], %s3110
      %s3113 = sshll.u32 [#allocation5], 4
      %s3114 = int_to_ptr.vmem [resolvable:$true] %s3113
      %3116 = dma.vmem_to_hbm [thread:$0]  %s3114, 32, %s14, [#allocation6]
    $region61: #{tpu_custom_call.1} parent=1 // pred_fallthru
      _
    // Predicated region
    $region62: #{tpu_custom_call.1} parent=1 // pred_check
      _
    $region63: #{tpu_custom_call.1} parent=1 // pred_check_branch
      %3118 = sbr.rel (0) target = $region65
    $region64: #{tpu_custom_call.1} parent=1 // pred_region
      %3119 = dma.done [#allocation6], 32
    $region65: #{tpu_custom_call.1} parent=1 // pred_fallthru
      _
    %3120 = vsyncpa [#allocation6], 1

</llo_original>
